<compile_context>
chip_gen: v5e
topology: v5e:2x2
jax: 0.10.0
libtpu: 0.0.40
codegen_flags: <defaults>
</compile_context>

<pallas_src>
import jax
import jax.numpy as jnp
from jax import lax
from jax.experimental import pallas as pl
from jax.experimental.pallas import tpu as pltpu

# ---- module hyper-parameters (small, consistent with the PyTorch __init__) ----
S, N, D = 8, 2, 32          # seq, batch, d_model  (PyTorch layout: features are (S, N, D))
NHEAD = 4
DH = D // NHEAD             # per-head dim
NUM_LAYERS = 2
DIM_FF = 2048               # nn.TransformerEncoderLayer default dim_feedforward
FC_HID = 16                 # FCNet dims [D, 16, 1]  (Linear->ReLU->Linear)
TEMPERATURE = 1.0
LN_EPS = 1e-5

ROWS = N * S                # canonical activation rows (batch-major: row = n*S + s)
ST = N * NHEAD * S          # head-stacked rows for attention (= 64)
LOG2_S = 3                  # S == 8
NEG = -1e30


def _layer_norm(x, gamma, beta):
    mu = jnp.mean(x, axis=-1, keepdims=True)
    var = jnp.mean((x - mu) ** 2, axis=-1, keepdims=True)
    return (x - mu) * lax.rsqrt(var + LN_EPS) * gamma + beta


def _dot(a, b):
    # bf16 operands, f32 accumulation on the MXU
    return jnp.dot(a.astype(jnp.bfloat16), b, preferred_element_type=jnp.float32)


def _dot_nt(a, b):
    # a @ b.T with bf16 operands, f32 accumulation (contract last dims of both)
    return lax.dot_general(a, b, (((1,), (1,)), ((), ())),
                           preferred_element_type=jnp.float32)


# ---------------------------------------------------------------------------
# Fused kernel: 2 x TransformerEncoderLayer (post-norm, ReLU FFN, eval mode)
#               + FCNet head + softmax(dim=batch) + weighted mean(dim=batch)
# Whole problem (~1 MiB weights) fits in VMEM -> gridless, full-array blocks.
# ---------------------------------------------------------------------------
def fused_kernel(feat_ref,
                 in_w, in_b, out_w, out_b,
                 l1_w, l1_b, l2_w, l2_b,
                 n1_w, n1_b, n2_w, n2_b,
                 hw1, hb1, hw2, hb2,
                 o_ref):
    scale = 1.0 / (DH ** 0.5)

    # block-diagonal mask over the (batch*head)-stacked score matrix (ST, ST):
    # row block index == col block index  (block size S; S is a power of two)
    ri = lax.shift_right_logical(lax.broadcasted_iota(jnp.int32, (ST, ST), 0), LOG2_S)
    ci = lax.shift_right_logical(lax.broadcasted_iota(jnp.int32, (ST, ST), 1), LOG2_S)
    block_mask = ri == ci

    feat = feat_ref[...]                      # (ROWS, D) f32, row = n*S + s
    x = feat

    for l in range(NUM_LAYERS):               # statically unrolled
        # --- self attention: fused qkv projection --------------------------
        qkv = _dot(x, in_w[l]) + in_b[l]      # (ROWS, 3D)
        q = qkv[:, 0:D]
        k = qkv[:, D:2 * D]
        v = qkv[:, 2 * D:3 * D]

        # stack every (batch, head) pair along sublanes:
        # stacked row (n*NHEAD + h)*S + s  <-  source row n*S + s, lanes h*DH:(h+1)*DH
        def stack_heads(t):
            blocks = []
            for n in range(N):
                rows_n = t[n * S:(n + 1) * S, :]
                for h in range(NHEAD):
                    blocks.append(rows_n[:, h * DH:(h + 1) * DH])
            return jnp.concatenate(blocks, axis=0).astype(jnp.bfloat16)   # (ST, DH)

        q_st = stack_heads(q)
        k_st = stack_heads(k)
        v_st = stack_heads(v)

        # one matmul for all (n, h) score blocks, masked block-diagonal softmax
        scores = _dot_nt(q_st, k_st) * scale              # (ST, ST) f32
        scores = jnp.where(block_mask, scores, NEG)
        scores = scores - jnp.max(scores, axis=-1, keepdims=True)
        p = jnp.exp(scores)
        p = p * pl.reciprocal(jnp.sum(p, axis=-1, keepdims=True), approx=False)

        ctx_st = _dot(p, v_st)                            # (ST, DH) f32

        # un-stack heads back to the canonical (ROWS, D) layout (registers only)
        ctx_rows = []
        for n in range(N):
            heads = [ctx_st[(n * NHEAD + h) * S:(n * NHEAD + h + 1) * S, :]
                     for h in range(NHEAD)]
            ctx_rows.append(jnp.concatenate(heads, axis=1))      # (S, D)
        ctx = jnp.concatenate(ctx_rows, axis=0)                  # (ROWS, D)

        attn = _dot(ctx, out_w[l]) + out_b[l]

        # residual + norm1
        h1 = _layer_norm(x + attn, n1_w[l], n1_b[l])

        # feed-forward (linear1 -> relu -> linear2), residual + norm2
        ff = _dot(h1, l1_w[l]) + l1_b[l]
        ff = jnp.maximum(ff, 0.0)
        ff = _dot(ff, l2_w[l]) + l2_b[l]
        x = _layer_norm(h1 + ff, n2_w[l], n2_b[l])

    # --- FCNet head (Linear -> ReLU -> Linear) -----------------------------
    hh = _dot(x, hw1[...]) + hb1[...]
    hh = jnp.maximum(hh, 0.0)                               # (ROWS, FC_HID)
    logits = jnp.sum(hh * hw2[...], axis=-1, keepdims=True) + hb2[...]   # (ROWS, 1)
    logits = logits * (1.0 / TEMPERATURE)

    # softmax over the batch axis (rows n*S + s share the same s across n)
    ls = [logits[n * S:(n + 1) * S, :] for n in range(N)]   # each (S, 1)
    m = ls[0]
    for n in range(1, N):
        m = jnp.maximum(m, ls[n])
    es = [jnp.exp(l_ - m) for l_ in ls]
    denom = es[0]
    for n in range(1, N):
        denom = denom + es[n]
    inv = pl.reciprocal(denom, approx=False)

    # weighted mean over batch, using the ORIGINAL features
    acc = jnp.zeros((S, D), jnp.float32)
    for n in range(N):
        w_n = es[n] * inv                                    # (S, 1)
        acc = acc + feat[n * S:(n + 1) * S, :] * w_n
    o_ref[...] = acc * (1.0 / N)


def _forward(features, layer_params, head_params):
    # features: (S, N, D) — PyTorch TransformerEncoder layout (batch_first=False)
    feat2 = jnp.transpose(features, (1, 0, 2)).reshape(ROWS, D)   # batch-major rows
    args = (feat2,
            layer_params['in_w'], layer_params['in_b'],
            layer_params['out_w'], layer_params['out_b'],
            layer_params['l1_w'], layer_params['l1_b'],
            layer_params['l2_w'], layer_params['l2_b'],
            layer_params['n1_w'], layer_params['n1_b'],
            layer_params['n2_w'], layer_params['n2_b'],
            head_params['w1'], head_params['b1'],
            head_params['w2'], head_params['b2'])
    return pl.pallas_call(
        fused_kernel,
        out_shape=jax.ShapeDtypeStruct((S, D), jnp.float32),
        in_specs=[pl.BlockSpec(memory_space=pltpu.MemorySpace.VMEM)] * len(args),
        out_specs=pl.BlockSpec(memory_space=pltpu.MemorySpace.VMEM),
    )(*args)


contextualized_weighted_head = jax.jit(_forward)


# ---------------------------------------------------------------------------
# Deterministic parameter init (shapes from nn.TransformerEncoderLayer / FCNet).
# Matmul weights are stored pre-transposed ((in, out) layout) in bf16; biases and
# layer-norm params in f32.  Per-layer params are stacked along a leading axis.
# ---------------------------------------------------------------------------
def init_params(key):
    k_layers, k_head = jax.random.split(key)

    def uni(k, shape, fan_in):
        b = 1.0 / (fan_in ** 0.5)
        return jax.random.uniform(k, shape, jnp.float32, -b, b)

    def one_layer(k):
        ks = jax.random.split(k, 6)
        return dict(
            in_w=uni(ks[0], (D, 3 * D), D), in_b=uni(ks[1], (1, 3 * D), D),
            out_w=uni(ks[2], (D, D), D), out_b=jnp.zeros((1, D), jnp.float32),
            l1_w=uni(ks[3], (D, DIM_FF), D), l1_b=uni(ks[4], (1, DIM_FF), D),
            l2_w=uni(ks[5], (DIM_FF, D), DIM_FF), l2_b=jnp.zeros((1, D), jnp.float32),
            n1_w=jnp.ones((1, D), jnp.float32), n1_b=jnp.zeros((1, D), jnp.float32),
            n2_w=jnp.ones((1, D), jnp.float32), n2_b=jnp.zeros((1, D), jnp.float32),
        )

    per_layer = [one_layer(k) for k in jax.random.split(k_layers, NUM_LAYERS)]
    layer_params = {name: jnp.stack([lp_[name] for lp_ in per_layer])
                    for name in per_layer[0]}
    for name in ('in_w', 'out_w', 'l1_w', 'l2_w'):
        layer_params[name] = layer_params[name].astype(jnp.bfloat16)

    hks = jax.random.split(k_head, 4)
    head_params = dict(
        w1=uni(hks[0], (D, FC_HID), D).astype(jnp.bfloat16),
        b1=uni(hks[1], (1, FC_HID), D),
        w2=uni(hks[2], (1, FC_HID), FC_HID),
        b2=uni(hks[3], (1, 1), FC_HID),
    )
    return layer_params, head_params


# ---------------------------------------------------------------------------
# Pure-JAX reference with the same numerics (bf16 matmul operands, f32 accum)
# ---------------------------------------------------------------------------
def _ref_forward(features, lp, hp):
    feat2 = jnp.transpose(features, (1, 0, 2)).reshape(ROWS, D)
    x = feat2
    for l in range(NUM_LAYERS):
        qkv = jnp.dot(x.astype(jnp.bfloat16), lp['in_w'][l],
                      preferred_element_type=jnp.float32) + lp['in_b'][l]
        q, k, v = qkv[:, :D], qkv[:, D:2 * D], qkv[:, 2 * D:]

        def heads(t):
            return t.reshape(N, S, NHEAD, DH).transpose(0, 2, 1, 3).astype(jnp.bfloat16)

        qh, kh, vh = heads(q), heads(k), heads(v)
        sc = jnp.einsum('nhsd,nhtd->nhst', qh, kh,
                        preferred_element_type=jnp.float32) / (DH ** 0.5)
        p = jax.nn.softmax(sc, axis=-1)
        ctx = jnp.einsum('nhst,nhtd->nhsd', p.astype(jnp.bfloat16), vh,
                         preferred_element_type=jnp.float32)
        ctx = ctx.transpose(0, 2, 1, 3).reshape(ROWS, D)
        attn = jnp.dot(ctx.astype(jnp.bfloat16), lp['out_w'][l],
                       preferred_element_type=jnp.float32) + lp['out_b'][l]
        h1 = _layer_norm(x + attn, lp['n1_w'][l], lp['n1_b'][l])
        ff = jnp.dot(h1.astype(jnp.bfloat16), lp['l1_w'][l],
                     preferred_element_type=jnp.float32) + lp['l1_b'][l]
        ff = jnp.maximum(ff, 0.0)
        ff = jnp.dot(ff.astype(jnp.bfloat16), lp['l2_w'][l],
                     preferred_element_type=jnp.float32) + lp['l2_b'][l]
        x = _layer_norm(h1 + ff, lp['n2_w'][l], lp['n2_b'][l])

    hh = jnp.maximum(jnp.dot(x.astype(jnp.bfloat16), hp['w1'],
                             preferred_element_type=jnp.float32) + hp['b1'], 0.0)
    logits = jnp.sum(hh * hp['w2'], axis=-1, keepdims=True) + hp['b2']
    w = jax.nn.softmax(logits.reshape(N, S) / TEMPERATURE, axis=0)      # over batch
    feat3 = feat2.reshape(N, S, D)
    return jnp.mean(feat3 * w[:, :, None], axis=0)                      # (S, D)


if __name__ == "__main__":
    key = jax.random.PRNGKey(0)
    k_feat, k_param = jax.random.split(key)
    layer_params, head_params = init_params(k_param)
    features = jax.random.normal(k_feat, (S, N, D), jnp.float32)

    out = contextualized_weighted_head(features, layer_params, head_params)
    out = jax.block_until_ready(out)

    ref = _ref_forward(features, layer_params, head_params)
    assert out.shape == (S, D)
    assert bool(jnp.all(jnp.isfinite(out)))
    err = float(jnp.max(jnp.abs(out - ref)))
    assert err < 2e-2, err
    print("KERNEL_OK")
</pallas_src>

<mosaic_0001>
module attributes {stable_mosaic.version = 11 : i64} {
  func.func @fused_kernel(%arg0: memref<16x32xf32, #tpu.memory_space<vmem>>, %arg1: memref<2x32x96xbf16, #tpu.memory_space<vmem>>, %arg2: memref<2x1x96xf32, #tpu.memory_space<vmem>>, %arg3: memref<2x32x32xbf16, #tpu.memory_space<vmem>>, %arg4: memref<2x1x32xf32, #tpu.memory_space<vmem>>, %arg5: memref<2x32x2048xbf16, #tpu.memory_space<vmem>>, %arg6: memref<2x1x2048xf32, #tpu.memory_space<vmem>>, %arg7: memref<2x2048x32xbf16, #tpu.memory_space<vmem>>, %arg8: memref<2x1x32xf32, #tpu.memory_space<vmem>>, %arg9: memref<2x1x32xf32, #tpu.memory_space<vmem>>, %arg10: memref<2x1x32xf32, #tpu.memory_space<vmem>>, %arg11: memref<2x1x32xf32, #tpu.memory_space<vmem>>, %arg12: memref<2x1x32xf32, #tpu.memory_space<vmem>>, %arg13: memref<32x16xbf16, #tpu.memory_space<vmem>>, %arg14: memref<1x16xf32, #tpu.memory_space<vmem>>, %arg15: memref<1x16xf32, #tpu.memory_space<vmem>>, %arg16: memref<1x1xf32, #tpu.memory_space<vmem>>, %arg17: memref<8x32xf32, #tpu.memory_space<vmem>>) attributes {dimension_semantics = [], scalar_prefetch = 0 : i64, scratch_operands = 0 : i64, tpu.core_type = #tpu.core_type<tc>} {
    %0 = tpu.iota {dimensions = array<i32: 0>} : vector<64x64xi32>
    %c3_i32 = arith.constant 3 : i32
    %1 = vector.broadcast %c3_i32 : i32 to vector<64x64xi32>
    %2 = arith.shrui %0, %1 : vector<64x64xi32>
    %3 = tpu.iota {dimensions = array<i32: 1>} : vector<64x64xi32>
    %c3_i32_0 = arith.constant 3 : i32
    %4 = vector.broadcast %c3_i32_0 : i32 to vector<64x64xi32>
    %5 = arith.shrui %3, %4 : vector<64x64xi32>
    %6 = arith.cmpi eq, %2, %5 : vector<64x64xi32>
    %c0 = arith.constant 0 : index
    %c0_1 = arith.constant 0 : index
    %7 = vector.load %arg0[%c0, %c0_1] : memref<16x32xf32, #tpu.memory_space<vmem>>, vector<16x32xf32>
    %c0_2 = arith.constant 0 : index
    %c0_3 = arith.constant 0 : index
    %c0_4 = arith.constant 0 : index
    %8 = vector.load %arg1[%c0_2, %c0_3, %c0_4] : memref<2x32x96xbf16, #tpu.memory_space<vmem>>, vector<1x32x96xbf16>
    %9 = vector.shape_cast %8 : vector<1x32x96xbf16> to vector<32x96xbf16>
    %10 = arith.truncf %7 : vector<16x32xf32> to vector<16x32xbf16>
    %cst = arith.constant dense<0.000000e+00> : vector<16x96xf32>
    %11 = tpu.matmul %10, %9, %cst {dimension_numbers = #tpu.dot_dimension_numbers<[1], [0], [0], [1], [0, 0, 1, 1], [], []>} : vector<16x32xbf16>, vector<32x96xbf16>, vector<16x96xf32> -> vector<16x96xf32>
    %c0_5 = arith.constant 0 : index
    %c0_6 = arith.constant 0 : index
    %c0_7 = arith.constant 0 : index
    %12 = vector.load %arg2[%c0_5, %c0_6, %c0_7] : memref<2x1x96xf32, #tpu.memory_space<vmem>>, vector<1x1x96xf32>
    %13 = vector.shape_cast %12 : vector<1x1x96xf32> to vector<1x96xf32>
    %14 = vector.broadcast %13 : vector<1x96xf32> to vector<16x96xf32>
    %15 = arith.addf %11, %14 : vector<16x96xf32>
    %16 = vector.extract_strided_slice %15 {offsets = [0, 0], sizes = [16, 32], strides = [1, 1]} : vector<16x96xf32> to vector<16x32xf32>
    %17 = vector.extract_strided_slice %15 {offsets = [0, 32], sizes = [16, 32], strides = [1, 1]} : vector<16x96xf32> to vector<16x32xf32>
    %18 = vector.extract_strided_slice %15 {offsets = [0, 64], sizes = [16, 32], strides = [1, 1]} : vector<16x96xf32> to vector<16x32xf32>
    %19 = vector.extract_strided_slice %16 {offsets = [0, 0], sizes = [8, 32], strides = [1, 1]} : vector<16x32xf32> to vector<8x32xf32>
    %20 = vector.extract_strided_slice %19 {offsets = [0, 0], sizes = [8, 8], strides = [1, 1]} : vector<8x32xf32> to vector<8x8xf32>
    %21 = vector.extract_strided_slice %19 {offsets = [0, 8], sizes = [8, 8], strides = [1, 1]} : vector<8x32xf32> to vector<8x8xf32>
    %22 = vector.extract_strided_slice %19 {offsets = [0, 16], sizes = [8, 8], strides = [1, 1]} : vector<8x32xf32> to vector<8x8xf32>
    %23 = vector.extract_strided_slice %19 {offsets = [0, 24], sizes = [8, 8], strides = [1, 1]} : vector<8x32xf32> to vector<8x8xf32>
    %24 = vector.extract_strided_slice %16 {offsets = [8, 0], sizes = [8, 32], strides = [1, 1]} : vector<16x32xf32> to vector<8x32xf32>
    %25 = vector.extract_strided_slice %24 {offsets = [0, 0], sizes = [8, 8], strides = [1, 1]} : vector<8x32xf32> to vector<8x8xf32>
    %26 = vector.extract_strided_slice %24 {offsets = [0, 8], sizes = [8, 8], strides = [1, 1]} : vector<8x32xf32> to vector<8x8xf32>
    %27 = vector.extract_strided_slice %24 {offsets = [0, 16], sizes = [8, 8], strides = [1, 1]} : vector<8x32xf32> to vector<8x8xf32>
    %28 = vector.extract_strided_slice %24 {offsets = [0, 24], sizes = [8, 8], strides = [1, 1]} : vector<8x32xf32> to vector<8x8xf32>
    %29 = tpu.concatenate %20, %21, %22, %23, %25, %26, %27, %28 in 0 : vector<8x8xf32>, vector<8x8xf32>, vector<8x8xf32>, vector<8x8xf32>, vector<8x8xf32>, vector<8x8xf32>, vector<8x8xf32>, vector<8x8xf32> -> vector<64x8xf32>
    %30 = arith.truncf %29 : vector<64x8xf32> to vector<64x8xbf16>
    %31 = vector.extract_strided_slice %17 {offsets = [0, 0], sizes = [8, 32], strides = [1, 1]} : vector<16x32xf32> to vector<8x32xf32>
    %32 = vector.extract_strided_slice %31 {offsets = [0, 0], sizes = [8, 8], strides = [1, 1]} : vector<8x32xf32> to vector<8x8xf32>
    %33 = vector.extract_strided_slice %31 {offsets = [0, 8], sizes = [8, 8], strides = [1, 1]} : vector<8x32xf32> to vector<8x8xf32>
    %34 = vector.extract_strided_slice %31 {offsets = [0, 16], sizes = [8, 8], strides = [1, 1]} : vector<8x32xf32> to vector<8x8xf32>
    %35 = vector.extract_strided_slice %31 {offsets = [0, 24], sizes = [8, 8], strides = [1, 1]} : vector<8x32xf32> to vector<8x8xf32>
    %36 = vector.extract_strided_slice %17 {offsets = [8, 0], sizes = [8, 32], strides = [1, 1]} : vector<16x32xf32> to vector<8x32xf32>
    %37 = vector.extract_strided_slice %36 {offsets = [0, 0], sizes = [8, 8], strides = [1, 1]} : vector<8x32xf32> to vector<8x8xf32>
    %38 = vector.extract_strided_slice %36 {offsets = [0, 8], sizes = [8, 8], strides = [1, 1]} : vector<8x32xf32> to vector<8x8xf32>
    %39 = vector.extract_strided_slice %36 {offsets = [0, 16], sizes = [8, 8], strides = [1, 1]} : vector<8x32xf32> to vector<8x8xf32>
    %40 = vector.extract_strided_slice %36 {offsets = [0, 24], sizes = [8, 8], strides = [1, 1]} : vector<8x32xf32> to vector<8x8xf32>
    %41 = tpu.concatenate %32, %33, %34, %35, %37, %38, %39, %40 in 0 : vector<8x8xf32>, vector<8x8xf32>, vector<8x8xf32>, vector<8x8xf32>, vector<8x8xf32>, vector<8x8xf32>, vector<8x8xf32>, vector<8x8xf32> -> vector<64x8xf32>
    %42 = arith.truncf %41 : vector<64x8xf32> to vector<64x8xbf16>
    %43 = vector.extract_strided_slice %18 {offsets = [0, 0], sizes = [8, 32], strides = [1, 1]} : vector<16x32xf32> to vector<8x32xf32>
    %44 = vector.extract_strided_slice %43 {offsets = [0, 0], sizes = [8, 8], strides = [1, 1]} : vector<8x32xf32> to vector<8x8xf32>
    %45 = vector.extract_strided_slice %43 {offsets = [0, 8], sizes = [8, 8], strides = [1, 1]} : vector<8x32xf32> to vector<8x8xf32>
    %46 = vector.extract_strided_slice %43 {offsets = [0, 16], sizes = [8, 8], strides = [1, 1]} : vector<8x32xf32> to vector<8x8xf32>
    %47 = vector.extract_strided_slice %43 {offsets = [0, 24], sizes = [8, 8], strides = [1, 1]} : vector<8x32xf32> to vector<8x8xf32>
    %48 = vector.extract_strided_slice %18 {offsets = [8, 0], sizes = [8, 32], strides = [1, 1]} : vector<16x32xf32> to vector<8x32xf32>
    %49 = vector.extract_strided_slice %48 {offsets = [0, 0], sizes = [8, 8], strides = [1, 1]} : vector<8x32xf32> to vector<8x8xf32>
    %50 = vector.extract_strided_slice %48 {offsets = [0, 8], sizes = [8, 8], strides = [1, 1]} : vector<8x32xf32> to vector<8x8xf32>
    %51 = vector.extract_strided_slice %48 {offsets = [0, 16], sizes = [8, 8], strides = [1, 1]} : vector<8x32xf32> to vector<8x8xf32>
    %52 = vector.extract_strided_slice %48 {offsets = [0, 24], sizes = [8, 8], strides = [1, 1]} : vector<8x32xf32> to vector<8x8xf32>
    %53 = tpu.concatenate %44, %45, %46, %47, %49, %50, %51, %52 in 0 : vector<8x8xf32>, vector<8x8xf32>, vector<8x8xf32>, vector<8x8xf32>, vector<8x8xf32>, vector<8x8xf32>, vector<8x8xf32>, vector<8x8xf32> -> vector<64x8xf32>
    %54 = arith.truncf %53 : vector<64x8xf32> to vector<64x8xbf16>
    %cst_8 = arith.constant dense<0.000000e+00> : vector<64x64xf32>
    %55 = tpu.matmul %30, %42, %cst_8 {dimension_numbers = #tpu.dot_dimension_numbers<[1], [1], [0], [0], [0, 0, 1, 0], [], []>} : vector<64x8xbf16>, vector<64x8xbf16>, vector<64x64xf32> -> vector<64x64xf32>
    %cst_9 = arith.constant 0.353553385 : f32
    %56 = vector.broadcast %cst_9 : f32 to vector<64x64xf32>
    %57 = arith.mulf %55, %56 : vector<64x64xf32>
    %cst_10 = arith.constant -1.000000e+30 : f32
    %58 = vector.broadcast %cst_10 : f32 to vector<64x64xf32>
    %59 = arith.select %6, %57, %58 : vector<64x64xi1>, vector<64x64xf32>
    %cst_11 = arith.constant dense<0xFF800000> : vector<64xf32>
    %60 = vector.multi_reduction <maximumf>, %59, %cst_11 [1] : vector<64x64xf32> to vector<64xf32>
    %61 = vector.shape_cast %60 : vector<64xf32> to vector<64x1xf32>
    %62 = vector.broadcast %61 : vector<64x1xf32> to vector<64x64xf32>
    %63 = arith.subf %59, %62 : vector<64x64xf32>
    %64 = math.exp %63 : vector<64x64xf32>
    %cst_12 = arith.constant dense<0.000000e+00> : vector<64xf32>
    %65 = vector.multi_reduction <add>, %64, %cst_12 [1] : vector<64x64xf32> to vector<64xf32>
    %66 = vector.shape_cast %65 : vector<64xf32> to vector<64x1xf32>
    %67 = tpu.reciprocal %66 : vector<64x1xf32> -> vector<64x1xf32>
    %68 = vector.broadcast %67 : vector<64x1xf32> to vector<64x64xf32>
    %69 = arith.mulf %64, %68 : vector<64x64xf32>
    %70 = arith.truncf %69 : vector<64x64xf32> to vector<64x64xbf16>
    %cst_13 = arith.constant dense<0.000000e+00> : vector<64x8xf32>
    %71 = tpu.matmul %70, %54, %cst_13 {dimension_numbers = #tpu.dot_dimension_numbers<[1], [0], [0], [1], [0, 0, 1, 1], [], []>} : vector<64x64xbf16>, vector<64x8xbf16>, vector<64x8xf32> -> vector<64x8xf32>
    %72 = vector.extract_strided_slice %71 {offsets = [0, 0], sizes = [8, 8], strides = [1, 1]} : vector<64x8xf32> to vector<8x8xf32>
    %73 = vector.extract_strided_slice %71 {offsets = [8, 0], sizes = [8, 8], strides = [1, 1]} : vector<64x8xf32> to vector<8x8xf32>
    %74 = vector.extract_strided_slice %71 {offsets = [16, 0], sizes = [8, 8], strides = [1, 1]} : vector<64x8xf32> to vector<8x8xf32>
    %75 = vector.extract_strided_slice %71 {offsets = [24, 0], sizes = [8, 8], strides = [1, 1]} : vector<64x8xf32> to vector<8x8xf32>
    %76 = tpu.concatenate %72, %73, %74, %75 in 1 : vector<8x8xf32>, vector<8x8xf32>, vector<8x8xf32>, vector<8x8xf32> -> vector<8x32xf32>
    %77 = vector.extract_strided_slice %71 {offsets = [32, 0], sizes = [8, 8], strides = [1, 1]} : vector<64x8xf32> to vector<8x8xf32>
    %78 = vector.extract_strided_slice %71 {offsets = [40, 0], sizes = [8, 8], strides = [1, 1]} : vector<64x8xf32> to vector<8x8xf32>
    %79 = vector.extract_strided_slice %71 {offsets = [48, 0], sizes = [8, 8], strides = [1, 1]} : vector<64x8xf32> to vector<8x8xf32>
    %80 = vector.extract_strided_slice %71 {offsets = [56, 0], sizes = [8, 8], strides = [1, 1]} : vector<64x8xf32> to vector<8x8xf32>
    %81 = tpu.concatenate %77, %78, %79, %80 in 1 : vector<8x8xf32>, vector<8x8xf32>, vector<8x8xf32>, vector<8x8xf32> -> vector<8x32xf32>
    %82 = tpu.concatenate %76, %81 in 0 : vector<8x32xf32>, vector<8x32xf32> -> vector<16x32xf32>
    %c0_14 = arith.constant 0 : index
    %c0_15 = arith.constant 0 : index
    %c0_16 = arith.constant 0 : index
    %83 = vector.load %arg3[%c0_14, %c0_15, %c0_16] : memref<2x32x32xbf16, #tpu.memory_space<vmem>>, vector<1x32x32xbf16>
    %84 = vector.shape_cast %83 : vector<1x32x32xbf16> to vector<32x32xbf16>
    %85 = arith.truncf %82 : vector<16x32xf32> to vector<16x32xbf16>
    %cst_17 = arith.constant dense<0.000000e+00> : vector<16x32xf32>
    %86 = tpu.matmul %85, %84, %cst_17 {dimension_numbers = #tpu.dot_dimension_numbers<[1], [0], [0], [1], [0, 0, 1, 1], [], []>} : vector<16x32xbf16>, vector<32x32xbf16>, vector<16x32xf32> -> vector<16x32xf32>
    %c0_18 = arith.constant 0 : index
    %c0_19 = arith.constant 0 : index
    %c0_20 = arith.constant 0 : index
    %87 = vector.load %arg4[%c0_18, %c0_19, %c0_20] : memref<2x1x32xf32, #tpu.memory_space<vmem>>, vector<1x1x32xf32>
    %88 = vector.shape_cast %87 : vector<1x1x32xf32> to vector<1x32xf32>
    %89 = vector.broadcast %88 : vector<1x32xf32> to vector<16x32xf32>
    %90 = arith.addf %86, %89 : vector<16x32xf32>
    %91 = arith.addf %7, %90 : vector<16x32xf32>
    %c0_21 = arith.constant 0 : index
    %c0_22 = arith.constant 0 : index
    %c0_23 = arith.constant 0 : index
    %92 = vector.load %arg9[%c0_21, %c0_22, %c0_23] : memref<2x1x32xf32, #tpu.memory_space<vmem>>, vector<1x1x32xf32>
    %93 = vector.shape_cast %92 : vector<1x1x32xf32> to vector<1x32xf32>
    %c0_24 = arith.constant 0 : index
    %c0_25 = arith.constant 0 : index
    %c0_26 = arith.constant 0 : index
    %94 = vector.load %arg10[%c0_24, %c0_25, %c0_26] : memref<2x1x32xf32, #tpu.memory_space<vmem>>, vector<1x1x32xf32>
    %95 = vector.shape_cast %94 : vector<1x1x32xf32> to vector<1x32xf32>
    %cst_27 = arith.constant dense<0.000000e+00> : vector<16xf32>
    %96 = vector.multi_reduction <add>, %91, %cst_27 [1] : vector<16x32xf32> to vector<16xf32>
    %97 = vector.shape_cast %96 : vector<16xf32> to vector<16x1xf32>
    %cst_28 = arith.constant 3.200000e+01 : f32
    %98 = vector.broadcast %cst_28 : f32 to vector<16x1xf32>
    %99 = arith.divf %97, %98 : vector<16x1xf32>
    %100 = vector.broadcast %99 : vector<16x1xf32> to vector<16x32xf32>
    %101 = arith.subf %91, %100 : vector<16x32xf32>
    %102 = arith.mulf %101, %101 : vector<16x32xf32>
    %cst_29 = arith.constant dense<0.000000e+00> : vector<16xf32>
    %103 = vector.multi_reduction <add>, %102, %cst_29 [1] : vector<16x32xf32> to vector<16xf32>
    %104 = vector.shape_cast %103 : vector<16xf32> to vector<16x1xf32>
    %cst_30 = arith.constant 3.200000e+01 : f32
    %105 = vector.broadcast %cst_30 : f32 to vector<16x1xf32>
    %106 = arith.divf %104, %105 : vector<16x1xf32>
    %107 = vector.broadcast %99 : vector<16x1xf32> to vector<16x32xf32>
    %108 = arith.subf %91, %107 : vector<16x32xf32>
    %cst_31 = arith.constant 9.99999974E-6 : f32
    %109 = vector.broadcast %cst_31 : f32 to vector<16x1xf32>
    %110 = arith.addf %106, %109 : vector<16x1xf32>
    %111 = math.rsqrt %110 : vector<16x1xf32>
    %112 = vector.broadcast %111 : vector<16x1xf32> to vector<16x32xf32>
    %113 = arith.mulf %108, %112 : vector<16x32xf32>
    %114 = vector.broadcast %93 : vector<1x32xf32> to vector<16x32xf32>
    %115 = arith.mulf %113, %114 : vector<16x32xf32>
    %116 = vector.broadcast %95 : vector<1x32xf32> to vector<16x32xf32>
    %117 = arith.addf %115, %116 : vector<16x32xf32>
    %c0_32 = arith.constant 0 : index
    %c0_33 = arith.constant 0 : index
    %c0_34 = arith.constant 0 : index
    %118 = vector.load %arg5[%c0_32, %c0_33, %c0_34] : memref<2x32x2048xbf16, #tpu.memory_space<vmem>>, vector<1x32x2048xbf16>
    %119 = vector.shape_cast %118 : vector<1x32x2048xbf16> to vector<32x2048xbf16>
    %120 = arith.truncf %117 : vector<16x32xf32> to vector<16x32xbf16>
    %cst_35 = arith.constant dense<0.000000e+00> : vector<16x2048xf32>
    %121 = tpu.matmul %120, %119, %cst_35 {dimension_numbers = #tpu.dot_dimension_numbers<[1], [0], [0], [1], [0, 0, 1, 1], [], []>} : vector<16x32xbf16>, vector<32x2048xbf16>, vector<16x2048xf32> -> vector<16x2048xf32>
    %c0_36 = arith.constant 0 : index
    %c0_37 = arith.constant 0 : index
    %c0_38 = arith.constant 0 : index
    %122 = vector.load %arg6[%c0_36, %c0_37, %c0_38] : memref<2x1x2048xf32, #tpu.memory_space<vmem>>, vector<1x1x2048xf32>
    %123 = vector.shape_cast %122 : vector<1x1x2048xf32> to vector<1x2048xf32>
    %124 = vector.broadcast %123 : vector<1x2048xf32> to vector<16x2048xf32>
    %125 = arith.addf %121, %124 : vector<16x2048xf32>
    %cst_39 = arith.constant 0.000000e+00 : f32
    %126 = vector.broadcast %cst_39 : f32 to vector<16x2048xf32>
    %127 = arith.maximumf %125, %126 : vector<16x2048xf32>
    %c0_40 = arith.constant 0 : index
    %c0_41 = arith.constant 0 : index
    %c0_42 = arith.constant 0 : index
    %128 = vector.load %arg7[%c0_40, %c0_41, %c0_42] : memref<2x2048x32xbf16, #tpu.memory_space<vmem>>, vector<1x2048x32xbf16>
    %129 = vector.shape_cast %128 : vector<1x2048x32xbf16> to vector<2048x32xbf16>
    %130 = arith.truncf %127 : vector<16x2048xf32> to vector<16x2048xbf16>
    %cst_43 = arith.constant dense<0.000000e+00> : vector<16x32xf32>
    %131 = tpu.matmul %130, %129, %cst_43 {dimension_numbers = #tpu.dot_dimension_numbers<[1], [0], [0], [1], [0, 0, 1, 1], [], []>} : vector<16x2048xbf16>, vector<2048x32xbf16>, vector<16x32xf32> -> vector<16x32xf32>
    %c0_44 = arith.constant 0 : index
    %c0_45 = arith.constant 0 : index
    %c0_46 = arith.constant 0 : index
    %132 = vector.load %arg8[%c0_44, %c0_45, %c0_46] : memref<2x1x32xf32, #tpu.memory_space<vmem>>, vector<1x1x32xf32>
    %133 = vector.shape_cast %132 : vector<1x1x32xf32> to vector<1x32xf32>
    %134 = vector.broadcast %133 : vector<1x32xf32> to vector<16x32xf32>
    %135 = arith.addf %131, %134 : vector<16x32xf32>
    %136 = arith.addf %117, %135 : vector<16x32xf32>
    %c0_47 = arith.constant 0 : index
    %c0_48 = arith.constant 0 : index
    %c0_49 = arith.constant 0 : index
    %137 = vector.load %arg11[%c0_47, %c0_48, %c0_49] : memref<2x1x32xf32, #tpu.memory_space<vmem>>, vector<1x1x32xf32>
    %138 = vector.shape_cast %137 : vector<1x1x32xf32> to vector<1x32xf32>
    %c0_50 = arith.constant 0 : index
    %c0_51 = arith.constant 0 : index
    %c0_52 = arith.constant 0 : index
    %139 = vector.load %arg12[%c0_50, %c0_51, %c0_52] : memref<2x1x32xf32, #tpu.memory_space<vmem>>, vector<1x1x32xf32>
    %140 = vector.shape_cast %139 : vector<1x1x32xf32> to vector<1x32xf32>
    %cst_53 = arith.constant dense<0.000000e+00> : vector<16xf32>
    %141 = vector.multi_reduction <add>, %136, %cst_53 [1] : vector<16x32xf32> to vector<16xf32>
    %142 = vector.shape_cast %141 : vector<16xf32> to vector<16x1xf32>
    %cst_54 = arith.constant 3.200000e+01 : f32
    %143 = vector.broadcast %cst_54 : f32 to vector<16x1xf32>
    %144 = arith.divf %142, %143 : vector<16x1xf32>
    %145 = vector.broadcast %144 : vector<16x1xf32> to vector<16x32xf32>
    %146 = arith.subf %136, %145 : vector<16x32xf32>
    %147 = arith.mulf %146, %146 : vector<16x32xf32>
    %cst_55 = arith.constant dense<0.000000e+00> : vector<16xf32>
    %148 = vector.multi_reduction <add>, %147, %cst_55 [1] : vector<16x32xf32> to vector<16xf32>
    %149 = vector.shape_cast %148 : vector<16xf32> to vector<16x1xf32>
    %cst_56 = arith.constant 3.200000e+01 : f32
    %150 = vector.broadcast %cst_56 : f32 to vector<16x1xf32>
    %151 = arith.divf %149, %150 : vector<16x1xf32>
    %152 = vector.broadcast %144 : vector<16x1xf32> to vector<16x32xf32>
    %153 = arith.subf %136, %152 : vector<16x32xf32>
    %cst_57 = arith.constant 9.99999974E-6 : f32
    %154 = vector.broadcast %cst_57 : f32 to vector<16x1xf32>
    %155 = arith.addf %151, %154 : vector<16x1xf32>
    %156 = math.rsqrt %155 : vector<16x1xf32>
    %157 = vector.broadcast %156 : vector<16x1xf32> to vector<16x32xf32>
    %158 = arith.mulf %153, %157 : vector<16x32xf32>
    %159 = vector.broadcast %138 : vector<1x32xf32> to vector<16x32xf32>
    %160 = arith.mulf %158, %159 : vector<16x32xf32>
    %161 = vector.broadcast %140 : vector<1x32xf32> to vector<16x32xf32>
    %162 = arith.addf %160, %161 : vector<16x32xf32>
    %c1 = arith.constant 1 : index
    %c0_58 = arith.constant 0 : index
    %c0_59 = arith.constant 0 : index
    %163 = vector.load %arg1[%c1, %c0_58, %c0_59] : memref<2x32x96xbf16, #tpu.memory_space<vmem>>, vector<1x32x96xbf16>
    %164 = vector.shape_cast %163 : vector<1x32x96xbf16> to vector<32x96xbf16>
    %165 = arith.truncf %162 : vector<16x32xf32> to vector<16x32xbf16>
    %cst_60 = arith.constant dense<0.000000e+00> : vector<16x96xf32>
    %166 = tpu.matmul %165, %164, %cst_60 {dimension_numbers = #tpu.dot_dimension_numbers<[1], [0], [0], [1], [0, 0, 1, 1], [], []>} : vector<16x32xbf16>, vector<32x96xbf16>, vector<16x96xf32> -> vector<16x96xf32>
    %c1_61 = arith.constant 1 : index
    %c0_62 = arith.constant 0 : index
    %c0_63 = arith.constant 0 : index
    %167 = vector.load %arg2[%c1_61, %c0_62, %c0_63] : memref<2x1x96xf32, #tpu.memory_space<vmem>>, vector<1x1x96xf32>
    %168 = vector.shape_cast %167 : vector<1x1x96xf32> to vector<1x96xf32>
    %169 = vector.broadcast %168 : vector<1x96xf32> to vector<16x96xf32>
    %170 = arith.addf %166, %169 : vector<16x96xf32>
    %171 = vector.extract_strided_slice %170 {offsets = [0, 0], sizes = [16, 32], strides = [1, 1]} : vector<16x96xf32> to vector<16x32xf32>
    %172 = vector.extract_strided_slice %170 {offsets = [0, 32], sizes = [16, 32], strides = [1, 1]} : vector<16x96xf32> to vector<16x32xf32>
    %173 = vector.extract_strided_slice %170 {offsets = [0, 64], sizes = [16, 32], strides = [1, 1]} : vector<16x96xf32> to vector<16x32xf32>
    %174 = vector.extract_strided_slice %171 {offsets = [0, 0], sizes = [8, 32], strides = [1, 1]} : vector<16x32xf32> to vector<8x32xf32>
    %175 = vector.extract_strided_slice %174 {offsets = [0, 0], sizes = [8, 8], strides = [1, 1]} : vector<8x32xf32> to vector<8x8xf32>
    %176 = vector.extract_strided_slice %174 {offsets = [0, 8], sizes = [8, 8], strides = [1, 1]} : vector<8x32xf32> to vector<8x8xf32>
    %177 = vector.extract_strided_slice %174 {offsets = [0, 16], sizes = [8, 8], strides = [1, 1]} : vector<8x32xf32> to vector<8x8xf32>
    %178 = vector.extract_strided_slice %174 {offsets = [0, 24], sizes = [8, 8], strides = [1, 1]} : vector<8x32xf32> to vector<8x8xf32>
    %179 = vector.extract_strided_slice %171 {offsets = [8, 0], sizes = [8, 32], strides = [1, 1]} : vector<16x32xf32> to vector<8x32xf32>
    %180 = vector.extract_strided_slice %179 {offsets = [0, 0], sizes = [8, 8], strides = [1, 1]} : vector<8x32xf32> to vector<8x8xf32>
    %181 = vector.extract_strided_slice %179 {offsets = [0, 8], sizes = [8, 8], strides = [1, 1]} : vector<8x32xf32> to vector<8x8xf32>
    %182 = vector.extract_strided_slice %179 {offsets = [0, 16], sizes = [8, 8], strides = [1, 1]} : vector<8x32xf32> to vector<8x8xf32>
    %183 = vector.extract_strided_slice %179 {offsets = [0, 24], sizes = [8, 8], strides = [1, 1]} : vector<8x32xf32> to vector<8x8xf32>
    %184 = tpu.concatenate %175, %176, %177, %178, %180, %181, %182, %183 in 0 : vector<8x8xf32>, vector<8x8xf32>, vector<8x8xf32>, vector<8x8xf32>, vector<8x8xf32>, vector<8x8xf32>, vector<8x8xf32>, vector<8x8xf32> -> vector<64x8xf32>
    %185 = arith.truncf %184 : vector<64x8xf32> to vector<64x8xbf16>
    %186 = vector.extract_strided_slice %172 {offsets = [0, 0], sizes = [8, 32], strides = [1, 1]} : vector<16x32xf32> to vector<8x32xf32>
    %187 = vector.extract_strided_slice %186 {offsets = [0, 0], sizes = [8, 8], strides = [1, 1]} : vector<8x32xf32> to vector<8x8xf32>
    %188 = vector.extract_strided_slice %186 {offsets = [0, 8], sizes = [8, 8], strides = [1, 1]} : vector<8x32xf32> to vector<8x8xf32>
    %189 = vector.extract_strided_slice %186 {offsets = [0, 16], sizes = [8, 8], strides = [1, 1]} : vector<8x32xf32> to vector<8x8xf32>
    %190 = vector.extract_strided_slice %186 {offsets = [0, 24], sizes = [8, 8], strides = [1, 1]} : vector<8x32xf32> to vector<8x8xf32>
    %191 = vector.extract_strided_slice %172 {offsets = [8, 0], sizes = [8, 32], strides = [1, 1]} : vector<16x32xf32> to vector<8x32xf32>
    %192 = vector.extract_strided_slice %191 {offsets = [0, 0], sizes = [8, 8], strides = [1, 1]} : vector<8x32xf32> to vector<8x8xf32>
    %193 = vector.extract_strided_slice %191 {offsets = [0, 8], sizes = [8, 8], strides = [1, 1]} : vector<8x32xf32> to vector<8x8xf32>
    %194 = vector.extract_strided_slice %191 {offsets = [0, 16], sizes = [8, 8], strides = [1, 1]} : vector<8x32xf32> to vector<8x8xf32>
    %195 = vector.extract_strided_slice %191 {offsets = [0, 24], sizes = [8, 8], strides = [1, 1]} : vector<8x32xf32> to vector<8x8xf32>
    %196 = tpu.concatenate %187, %188, %189, %190, %192, %193, %194, %195 in 0 : vector<8x8xf32>, vector<8x8xf32>, vector<8x8xf32>, vector<8x8xf32>, vector<8x8xf32>, vector<8x8xf32>, vector<8x8xf32>, vector<8x8xf32> -> vector<64x8xf32>
    %197 = arith.truncf %196 : vector<64x8xf32> to vector<64x8xbf16>
    %198 = vector.extract_strided_slice %173 {offsets = [0, 0], sizes = [8, 32], strides = [1, 1]} : vector<16x32xf32> to vector<8x32xf32>
    %199 = vector.extract_strided_slice %198 {offsets = [0, 0], sizes = [8, 8], strides = [1, 1]} : vector<8x32xf32> to vector<8x8xf32>
    %200 = vector.extract_strided_slice %198 {offsets = [0, 8], sizes = [8, 8], strides = [1, 1]} : vector<8x32xf32> to vector<8x8xf32>
    %201 = vector.extract_strided_slice %198 {offsets = [0, 16], sizes = [8, 8], strides = [1, 1]} : vector<8x32xf32> to vector<8x8xf32>
    %202 = vector.extract_strided_slice %198 {offsets = [0, 24], sizes = [8, 8], strides = [1, 1]} : vector<8x32xf32> to vector<8x8xf32>
    %203 = vector.extract_strided_slice %173 {offsets = [8, 0], sizes = [8, 32], strides = [1, 1]} : vector<16x32xf32> to vector<8x32xf32>
    %204 = vector.extract_strided_slice %203 {offsets = [0, 0], sizes = [8, 8], strides = [1, 1]} : vector<8x32xf32> to vector<8x8xf32>
    %205 = vector.extract_strided_slice %203 {offsets = [0, 8], sizes = [8, 8], strides = [1, 1]} : vector<8x32xf32> to vector<8x8xf32>
    %206 = vector.extract_strided_slice %203 {offsets = [0, 16], sizes = [8, 8], strides = [1, 1]} : vector<8x32xf32> to vector<8x8xf32>
    %207 = vector.extract_strided_slice %203 {offsets = [0, 24], sizes = [8, 8], strides = [1, 1]} : vector<8x32xf32> to vector<8x8xf32>
    %208 = tpu.concatenate %199, %200, %201, %202, %204, %205, %206, %207 in 0 : vector<8x8xf32>, vector<8x8xf32>, vector<8x8xf32>, vector<8x8xf32>, vector<8x8xf32>, vector<8x8xf32>, vector<8x8xf32>, vector<8x8xf32> -> vector<64x8xf32>
    %209 = arith.truncf %208 : vector<64x8xf32> to vector<64x8xbf16>
    %cst_64 = arith.constant dense<0.000000e+00> : vector<64x64xf32>
    %210 = tpu.matmul %185, %197, %cst_64 {dimension_numbers = #tpu.dot_dimension_numbers<[1], [1], [0], [0], [0, 0, 1, 0], [], []>} : vector<64x8xbf16>, vector<64x8xbf16>, vector<64x64xf32> -> vector<64x64xf32>
    %cst_65 = arith.constant 0.353553385 : f32
    %211 = vector.broadcast %cst_65 : f32 to vector<64x64xf32>
    %212 = arith.mulf %210, %211 : vector<64x64xf32>
    %cst_66 = arith.constant -1.000000e+30 : f32
    %213 = vector.broadcast %cst_66 : f32 to vector<64x64xf32>
    %214 = arith.select %6, %212, %213 : vector<64x64xi1>, vector<64x64xf32>
    %cst_67 = arith.constant dense<0xFF800000> : vector<64xf32>
    %215 = vector.multi_reduction <maximumf>, %214, %cst_67 [1] : vector<64x64xf32> to vector<64xf32>
    %216 = vector.shape_cast %215 : vector<64xf32> to vector<64x1xf32>
    %217 = vector.broadcast %216 : vector<64x1xf32> to vector<64x64xf32>
    %218 = arith.subf %214, %217 : vector<64x64xf32>
    %219 = math.exp %218 : vector<64x64xf32>
    %cst_68 = arith.constant dense<0.000000e+00> : vector<64xf32>
    %220 = vector.multi_reduction <add>, %219, %cst_68 [1] : vector<64x64xf32> to vector<64xf32>
    %221 = vector.shape_cast %220 : vector<64xf32> to vector<64x1xf32>
    %222 = tpu.reciprocal %221 : vector<64x1xf32> -> vector<64x1xf32>
    %223 = vector.broadcast %222 : vector<64x1xf32> to vector<64x64xf32>
    %224 = arith.mulf %219, %223 : vector<64x64xf32>
    %225 = arith.truncf %224 : vector<64x64xf32> to vector<64x64xbf16>
    %cst_69 = arith.constant dense<0.000000e+00> : vector<64x8xf32>
    %226 = tpu.matmul %225, %209, %cst_69 {dimension_numbers = #tpu.dot_dimension_numbers<[1], [0], [0], [1], [0, 0, 1, 1], [], []>} : vector<64x64xbf16>, vector<64x8xbf16>, vector<64x8xf32> -> vector<64x8xf32>
    %227 = vector.extract_strided_slice %226 {offsets = [0, 0], sizes = [8, 8], strides = [1, 1]} : vector<64x8xf32> to vector<8x8xf32>
    %228 = vector.extract_strided_slice %226 {offsets = [8, 0], sizes = [8, 8], strides = [1, 1]} : vector<64x8xf32> to vector<8x8xf32>
    %229 = vector.extract_strided_slice %226 {offsets = [16, 0], sizes = [8, 8], strides = [1, 1]} : vector<64x8xf32> to vector<8x8xf32>
    %230 = vector.extract_strided_slice %226 {offsets = [24, 0], sizes = [8, 8], strides = [1, 1]} : vector<64x8xf32> to vector<8x8xf32>
    %231 = tpu.concatenate %227, %228, %229, %230 in 1 : vector<8x8xf32>, vector<8x8xf32>, vector<8x8xf32>, vector<8x8xf32> -> vector<8x32xf32>
    %232 = vector.extract_strided_slice %226 {offsets = [32, 0], sizes = [8, 8], strides = [1, 1]} : vector<64x8xf32> to vector<8x8xf32>
    %233 = vector.extract_strided_slice %226 {offsets = [40, 0], sizes = [8, 8], strides = [1, 1]} : vector<64x8xf32> to vector<8x8xf32>
    %234 = vector.extract_strided_slice %226 {offsets = [48, 0], sizes = [8, 8], strides = [1, 1]} : vector<64x8xf32> to vector<8x8xf32>
    %235 = vector.extract_strided_slice %226 {offsets = [56, 0], sizes = [8, 8], strides = [1, 1]} : vector<64x8xf32> to vector<8x8xf32>
    %236 = tpu.concatenate %232, %233, %234, %235 in 1 : vector<8x8xf32>, vector<8x8xf32>, vector<8x8xf32>, vector<8x8xf32> -> vector<8x32xf32>
    %237 = tpu.concatenate %231, %236 in 0 : vector<8x32xf32>, vector<8x32xf32> -> vector<16x32xf32>
    %c1_70 = arith.constant 1 : index
    %c0_71 = arith.constant 0 : index
    %c0_72 = arith.constant 0 : index
    %238 = vector.load %arg3[%c1_70, %c0_71, %c0_72] : memref<2x32x32xbf16, #tpu.memory_space<vmem>>, vector<1x32x32xbf16>
    %239 = vector.shape_cast %238 : vector<1x32x32xbf16> to vector<32x32xbf16>
    %240 = arith.truncf %237 : vector<16x32xf32> to vector<16x32xbf16>
    %cst_73 = arith.constant dense<0.000000e+00> : vector<16x32xf32>
    %241 = tpu.matmul %240, %239, %cst_73 {dimension_numbers = #tpu.dot_dimension_numbers<[1], [0], [0], [1], [0, 0, 1, 1], [], []>} : vector<16x32xbf16>, vector<32x32xbf16>, vector<16x32xf32> -> vector<16x32xf32>
    %c1_74 = arith.constant 1 : index
    %c0_75 = arith.constant 0 : index
    %c0_76 = arith.constant 0 : index
    %242 = vector.load %arg4[%c1_74, %c0_75, %c0_76] : memref<2x1x32xf32, #tpu.memory_space<vmem>>, vector<1x1x32xf32>
    %243 = vector.shape_cast %242 : vector<1x1x32xf32> to vector<1x32xf32>
    %244 = vector.broadcast %243 : vector<1x32xf32> to vector<16x32xf32>
    %245 = arith.addf %241, %244 : vector<16x32xf32>
    %246 = arith.addf %162, %245 : vector<16x32xf32>
    %c1_77 = arith.constant 1 : index
    %c0_78 = arith.constant 0 : index
    %c0_79 = arith.constant 0 : index
    %247 = vector.load %arg9[%c1_77, %c0_78, %c0_79] : memref<2x1x32xf32, #tpu.memory_space<vmem>>, vector<1x1x32xf32>
    %248 = vector.shape_cast %247 : vector<1x1x32xf32> to vector<1x32xf32>
    %c1_80 = arith.constant 1 : index
    %c0_81 = arith.constant 0 : index
    %c0_82 = arith.constant 0 : index
    %249 = vector.load %arg10[%c1_80, %c0_81, %c0_82] : memref<2x1x32xf32, #tpu.memory_space<vmem>>, vector<1x1x32xf32>
    %250 = vector.shape_cast %249 : vector<1x1x32xf32> to vector<1x32xf32>
    %cst_83 = arith.constant dense<0.000000e+00> : vector<16xf32>
    %251 = vector.multi_reduction <add>, %246, %cst_83 [1] : vector<16x32xf32> to vector<16xf32>
    %252 = vector.shape_cast %251 : vector<16xf32> to vector<16x1xf32>
    %cst_84 = arith.constant 3.200000e+01 : f32
    %253 = vector.broadcast %cst_84 : f32 to vector<16x1xf32>
    %254 = arith.divf %252, %253 : vector<16x1xf32>
    %255 = vector.broadcast %254 : vector<16x1xf32> to vector<16x32xf32>
    %256 = arith.subf %246, %255 : vector<16x32xf32>
    %257 = arith.mulf %256, %256 : vector<16x32xf32>
    %cst_85 = arith.constant dense<0.000000e+00> : vector<16xf32>
    %258 = vector.multi_reduction <add>, %257, %cst_85 [1] : vector<16x32xf32> to vector<16xf32>
    %259 = vector.shape_cast %258 : vector<16xf32> to vector<16x1xf32>
    %cst_86 = arith.constant 3.200000e+01 : f32
    %260 = vector.broadcast %cst_86 : f32 to vector<16x1xf32>
    %261 = arith.divf %259, %260 : vector<16x1xf32>
    %262 = vector.broadcast %254 : vector<16x1xf32> to vector<16x32xf32>
    %263 = arith.subf %246, %262 : vector<16x32xf32>
    %cst_87 = arith.constant 9.99999974E-6 : f32
    %264 = vector.broadcast %cst_87 : f32 to vector<16x1xf32>
    %265 = arith.addf %261, %264 : vector<16x1xf32>
    %266 = math.rsqrt %265 : vector<16x1xf32>
    %267 = vector.broadcast %266 : vector<16x1xf32> to vector<16x32xf32>
    %268 = arith.mulf %263, %267 : vector<16x32xf32>
    %269 = vector.broadcast %248 : vector<1x32xf32> to vector<16x32xf32>
    %270 = arith.mulf %268, %269 : vector<16x32xf32>
    %271 = vector.broadcast %250 : vector<1x32xf32> to vector<16x32xf32>
    %272 = arith.addf %270, %271 : vector<16x32xf32>
    %c1_88 = arith.constant 1 : index
    %c0_89 = arith.constant 0 : index
    %c0_90 = arith.constant 0 : index
    %273 = vector.load %arg5[%c1_88, %c0_89, %c0_90] : memref<2x32x2048xbf16, #tpu.memory_space<vmem>>, vector<1x32x2048xbf16>
    %274 = vector.shape_cast %273 : vector<1x32x2048xbf16> to vector<32x2048xbf16>
    %275 = arith.truncf %272 : vector<16x32xf32> to vector<16x32xbf16>
    %cst_91 = arith.constant dense<0.000000e+00> : vector<16x2048xf32>
    %276 = tpu.matmul %275, %274, %cst_91 {dimension_numbers = #tpu.dot_dimension_numbers<[1], [0], [0], [1], [0, 0, 1, 1], [], []>} : vector<16x32xbf16>, vector<32x2048xbf16>, vector<16x2048xf32> -> vector<16x2048xf32>
    %c1_92 = arith.constant 1 : index
    %c0_93 = arith.constant 0 : index
    %c0_94 = arith.constant 0 : index
    %277 = vector.load %arg6[%c1_92, %c0_93, %c0_94] : memref<2x1x2048xf32, #tpu.memory_space<vmem>>, vector<1x1x2048xf32>
    %278 = vector.shape_cast %277 : vector<1x1x2048xf32> to vector<1x2048xf32>
    %279 = vector.broadcast %278 : vector<1x2048xf32> to vector<16x2048xf32>
    %280 = arith.addf %276, %279 : vector<16x2048xf32>
    %cst_95 = arith.constant 0.000000e+00 : f32
    %281 = vector.broadcast %cst_95 : f32 to vector<16x2048xf32>
    %282 = arith.maximumf %280, %281 : vector<16x2048xf32>
    %c1_96 = arith.constant 1 : index
    %c0_97 = arith.constant 0 : index
    %c0_98 = arith.constant 0 : index
    %283 = vector.load %arg7[%c1_96, %c0_97, %c0_98] : memref<2x2048x32xbf16, #tpu.memory_space<vmem>>, vector<1x2048x32xbf16>
    %284 = vector.shape_cast %283 : vector<1x2048x32xbf16> to vector<2048x32xbf16>
    %285 = arith.truncf %282 : vector<16x2048xf32> to vector<16x2048xbf16>
    %cst_99 = arith.constant dense<0.000000e+00> : vector<16x32xf32>
    %286 = tpu.matmul %285, %284, %cst_99 {dimension_numbers = #tpu.dot_dimension_numbers<[1], [0], [0], [1], [0, 0, 1, 1], [], []>} : vector<16x2048xbf16>, vector<2048x32xbf16>, vector<16x32xf32> -> vector<16x32xf32>
    %c1_100 = arith.constant 1 : index
    %c0_101 = arith.constant 0 : index
    %c0_102 = arith.constant 0 : index
    %287 = vector.load %arg8[%c1_100, %c0_101, %c0_102] : memref<2x1x32xf32, #tpu.memory_space<vmem>>, vector<1x1x32xf32>
    %288 = vector.shape_cast %287 : vector<1x1x32xf32> to vector<1x32xf32>
    %289 = vector.broadcast %288 : vector<1x32xf32> to vector<16x32xf32>
    %290 = arith.addf %286, %289 : vector<16x32xf32>
    %291 = arith.addf %272, %290 : vector<16x32xf32>
    %c1_103 = arith.constant 1 : index
    %c0_104 = arith.constant 0 : index
    %c0_105 = arith.constant 0 : index
    %292 = vector.load %arg11[%c1_103, %c0_104, %c0_105] : memref<2x1x32xf32, #tpu.memory_space<vmem>>, vector<1x1x32xf32>
    %293 = vector.shape_cast %292 : vector<1x1x32xf32> to vector<1x32xf32>
    %c1_106 = arith.constant 1 : index
    %c0_107 = arith.constant 0 : index
    %c0_108 = arith.constant 0 : index
    %294 = vector.load %arg12[%c1_106, %c0_107, %c0_108] : memref<2x1x32xf32, #tpu.memory_space<vmem>>, vector<1x1x32xf32>
    %295 = vector.shape_cast %294 : vector<1x1x32xf32> to vector<1x32xf32>
    %cst_109 = arith.constant dense<0.000000e+00> : vector<16xf32>
    %296 = vector.multi_reduction <add>, %291, %cst_109 [1] : vector<16x32xf32> to vector<16xf32>
    %297 = vector.shape_cast %296 : vector<16xf32> to vector<16x1xf32>
    %cst_110 = arith.constant 3.200000e+01 : f32
    %298 = vector.broadcast %cst_110 : f32 to vector<16x1xf32>
    %299 = arith.divf %297, %298 : vector<16x1xf32>
    %300 = vector.broadcast %299 : vector<16x1xf32> to vector<16x32xf32>
    %301 = arith.subf %291, %300 : vector<16x32xf32>
    %302 = arith.mulf %301, %301 : vector<16x32xf32>
    %cst_111 = arith.constant dense<0.000000e+00> : vector<16xf32>
    %303 = vector.multi_reduction <add>, %302, %cst_111 [1] : vector<16x32xf32> to vector<16xf32>
    %304 = vector.shape_cast %303 : vector<16xf32> to vector<16x1xf32>
    %cst_112 = arith.constant 3.200000e+01 : f32
    %305 = vector.broadcast %cst_112 : f32 to vector<16x1xf32>
    %306 = arith.divf %304, %305 : vector<16x1xf32>
    %307 = vector.broadcast %299 : vector<16x1xf32> to vector<16x32xf32>
    %308 = arith.subf %291, %307 : vector<16x32xf32>
    %cst_113 = arith.constant 9.99999974E-6 : f32
    %309 = vector.broadcast %cst_113 : f32 to vector<16x1xf32>
    %310 = arith.addf %306, %309 : vector<16x1xf32>
    %311 = math.rsqrt %310 : vector<16x1xf32>
    %312 = vector.broadcast %311 : vector<16x1xf32> to vector<16x32xf32>
    %313 = arith.mulf %308, %312 : vector<16x32xf32>
    %314 = vector.broadcast %293 : vector<1x32xf32> to vector<16x32xf32>
    %315 = arith.mulf %313, %314 : vector<16x32xf32>
    %316 = vector.broadcast %295 : vector<1x32xf32> to vector<16x32xf32>
    %317 = arith.addf %315, %316 : vector<16x32xf32>
    %c0_114 = arith.constant 0 : index
    %c0_115 = arith.constant 0 : index
    %318 = vector.load %arg13[%c0_114, %c0_115] : memref<32x16xbf16, #tpu.memory_space<vmem>>, vector<32x16xbf16>
    %319 = arith.truncf %317 : vector<16x32xf32> to vector<16x32xbf16>
    %cst_116 = arith.constant dense<0.000000e+00> : vector<16x16xf32>
    %320 = tpu.matmul %319, %318, %cst_116 {dimension_numbers = #tpu.dot_dimension_numbers<[1], [0], [0], [1], [0, 0, 1, 1], [], []>} : vector<16x32xbf16>, vector<32x16xbf16>, vector<16x16xf32> -> vector<16x16xf32>
    %c0_117 = arith.constant 0 : index
    %c0_118 = arith.constant 0 : index
    %321 = vector.load %arg14[%c0_117, %c0_118] : memref<1x16xf32, #tpu.memory_space<vmem>>, vector<1x16xf32>
    %322 = vector.broadcast %321 : vector<1x16xf32> to vector<16x16xf32>
    %323 = arith.addf %320, %322 : vector<16x16xf32>
    %cst_119 = arith.constant 0.000000e+00 : f32
    %324 = vector.broadcast %cst_119 : f32 to vector<16x16xf32>
    %325 = arith.maximumf %323, %324 : vector<16x16xf32>
    %c0_120 = arith.constant 0 : index
    %c0_121 = arith.constant 0 : index
    %326 = vector.load %arg15[%c0_120, %c0_121] : memref<1x16xf32, #tpu.memory_space<vmem>>, vector<1x16xf32>
    %327 = vector.broadcast %326 : vector<1x16xf32> to vector<16x16xf32>
    %328 = arith.mulf %325, %327 : vector<16x16xf32>
    %cst_122 = arith.constant dense<0.000000e+00> : vector<16xf32>
    %329 = vector.multi_reduction <add>, %328, %cst_122 [1] : vector<16x16xf32> to vector<16xf32>
    %330 = vector.shape_cast %329 : vector<16xf32> to vector<16x1xf32>
    %c0_123 = arith.constant 0 : index
    %c0_124 = arith.constant 0 : index
    %331 = vector.load %arg16[%c0_123, %c0_124] : memref<1x1xf32, #tpu.memory_space<vmem>>, vector<1x1xf32>
    %332 = vector.broadcast %331 : vector<1x1xf32> to vector<16x1xf32>
    %333 = arith.addf %330, %332 : vector<16x1xf32>
    %cst_125 = arith.constant 1.000000e+00 : f32
    %334 = vector.broadcast %cst_125 : f32 to vector<16x1xf32>
    %335 = arith.mulf %333, %334 : vector<16x1xf32>
    %336 = vector.extract_strided_slice %335 {offsets = [0, 0], sizes = [8, 1], strides = [1, 1]} : vector<16x1xf32> to vector<8x1xf32>
    %337 = vector.extract_strided_slice %335 {offsets = [8, 0], sizes = [8, 1], strides = [1, 1]} : vector<16x1xf32> to vector<8x1xf32>
    %338 = arith.maximumf %336, %337 : vector<8x1xf32>
    %339 = arith.subf %336, %338 : vector<8x1xf32>
    %340 = math.exp %339 : vector<8x1xf32>
    %341 = arith.subf %337, %338 : vector<8x1xf32>
    %342 = math.exp %341 : vector<8x1xf32>
    %343 = arith.addf %340, %342 : vector<8x1xf32>
    %344 = tpu.reciprocal %343 : vector<8x1xf32> -> vector<8x1xf32>
    %cst_126 = arith.constant 0.000000e+00 : f32
    %345 = vector.broadcast %cst_126 : f32 to vector<8x32xf32>
    %346 = arith.mulf %340, %344 : vector<8x1xf32>
    %347 = vector.extract_strided_slice %7 {offsets = [0, 0], sizes = [8, 32], strides = [1, 1]} : vector<16x32xf32> to vector<8x32xf32>
    %348 = vector.broadcast %346 : vector<8x1xf32> to vector<8x32xf32>
    %349 = arith.mulf %347, %348 : vector<8x32xf32>
    %350 = arith.addf %345, %349 : vector<8x32xf32>
    %351 = arith.mulf %342, %344 : vector<8x1xf32>
    %352 = vector.extract_strided_slice %7 {offsets = [8, 0], sizes = [8, 32], strides = [1, 1]} : vector<16x32xf32> to vector<8x32xf32>
    %353 = vector.broadcast %351 : vector<8x1xf32> to vector<8x32xf32>
    %354 = arith.mulf %352, %353 : vector<8x32xf32>
    %355 = arith.addf %350, %354 : vector<8x32xf32>
    %cst_127 = arith.constant 5.000000e-01 : f32
    %356 = vector.broadcast %cst_127 : f32 to vector<8x32xf32>
    %357 = arith.mulf %355, %356 : vector<8x32xf32>
    %c0_128 = arith.constant 0 : index
    %c0_129 = arith.constant 0 : index
    %358 = vector.load %arg17[%c0_128, %c0_129] : memref<8x32xf32, #tpu.memory_space<vmem>>, vector<8x32xf32>
    tpu.vector_store %arg17[%c0_128, %c0_129], %357 {strides = array<i32>} : memref<8x32xf32, #tpu.memory_space<vmem>>, vector<8x32xf32>,
    return
  }
}

</mosaic_0001>

<llo_original>
// kernel: _forward.1
$region0: #{_forward.1}
  #allocation0 [shape = 'u32[]', space=smem, size = 0x4, offset = 0x4, fixed_abs, tag = 'smem constant byte address 0x4 - core index']
  #allocation1 [shape = 'u32[72,128]{1,0:T(1,128)}', space=vmem, size = 0x9000, scoped, tag = 'internal scratch']
  #allocation2 [shape = 'f32[1,1]{1,0:T(1,128)S(1)}', space=vmem, size = 0x200, scoped, tag = 'scoped memory for _forward.1']
  %s0 = inlined_call_operand.vmem [shape: f32[16,32], index: 0, kind: input, shape index: {}]
  %s1 = inlined_call_operand.vmem [shape: bf16[2,32,96], index: 1, kind: input, shape index: {}]
  %s2 = inlined_call_operand.vmem [shape: f32[2,1,96], index: 2, kind: input, shape index: {}]
  %s3 = inlined_call_operand.vmem [shape: bf16[2,32,32], index: 3, kind: input, shape index: {}]
  %s4 = inlined_call_operand.vmem [shape: f32[2,1,32], index: 4, kind: input, shape index: {}]
  %s5 = inlined_call_operand.vmem [shape: bf16[2,32,2048], index: 5, kind: input, shape index: {}]
  %s6 = inlined_call_operand.vmem [shape: f32[2,1,2048], index: 6, kind: input, shape index: {}]
  %s7 = inlined_call_operand.vmem [shape: bf16[2,2048,32], index: 7, kind: input, shape index: {}]
  %s8 = inlined_call_operand.vmem [shape: f32[2,1,32], index: 8, kind: input, shape index: {}]
  %s9 = inlined_call_operand.vmem [shape: f32[2,1,32], index: 9, kind: input, shape index: {}]
  %s10 = inlined_call_operand.vmem [shape: f32[2,1,32], index: 10, kind: input, shape index: {}]
  %s11 = inlined_call_operand.vmem [shape: f32[2,1,32], index: 11, kind: input, shape index: {}]
  %s12 = inlined_call_operand.vmem [shape: f32[2,1,32], index: 12, kind: input, shape index: {}]
  %s13 = inlined_call_operand.vmem [shape: bf16[32,16], index: 13, kind: input, shape index: {}]
  %s14 = inlined_call_operand.vmem [shape: f32[1,16], index: 14, kind: input, shape index: {}]
  %s15 = inlined_call_operand.vmem [shape: f32[1,16], index: 15, kind: input, shape index: {}]
  %s16 = inlined_call_operand.<no memory space> [shape: f32[1,1], index: 16, kind: input, shape index: {}]
  %s17 = inlined_call_operand.hbm [shape: f32[8,32], index: 17, kind: output, shape index: {}]
  %s18 = sld [smem:[#allocation0]]
  $region78: #{_forward.1} parent=0
    _
  %s20 = ssub.s32 1, %s18
  %s21 = scalar_select 0, %s20, %s18
  %v22 = vstv %s16
  %23 = vst [vmem:[#allocation2] sm:$0x1] %v22
  $region1: #{_forward.1} parent=0
    #allocation3 [shape = 'u8[4096]{0}', space=vmem, size = 0x1000, scoped, tag = 'output window, operand 0, single buffered']
    #allocation4 [shape = 's32[1]{0}', space=sflag, size = 0x4, scoped, tag = 'scoped memory for _forward.1']
    %24 = vsyncpa [#allocation4], 0
    // Predicated region
    $region2: #{_forward.1} parent=1 // pred_check
      _
    $region3: #{_forward.1} parent=1 // pred_check_branch
      %26 = sbr.rel (0) target = $region5
    $region4: #{_forward.1} parent=1 // pred_region
      _
    $region5: #{_forward.1} parent=1 // pred_fallthru
      _
    // Predicated region
    $region6: #{_forward.1} parent=1 // pred_check
      _
    $region7: #{_forward.1} parent=1 // pred_check_branch
      %28 = sbr.rel (0) target = $region9
    $region8: #{_forward.1} parent=1 // pred_region
      _
    $region9: #{_forward.1} parent=1 // pred_fallthru
      _
    // Predicated region
    $region10: #{_forward.1} parent=1 // pred_check
      _
    $region11: #{_forward.1} parent=1 // pred_check_branch
      %30 = sbr.rel (0) target = $region13
    $region12: #{_forward.1} parent=1 // pred_region
      _
    $region13: #{_forward.1} parent=1 // pred_fallthru
      _
    // Predicated region
    $region14: #{_forward.1} parent=1 // pred_check
      _
    $region15: #{_forward.1} parent=1 // pred_check_branch
      %32 = sbr.rel (0) target = $region17
    $region16: #{_forward.1} parent=1 // pred_region
      _
    $region17: #{_forward.1} parent=1 // pred_fallthru
      _
    // Predicated region
    $region18: #{_forward.1} parent=1 // pred_check
      _
    $region19: #{_forward.1} parent=1 // pred_check_branch
      %34 = sbr.rel (0) target = $region21
    $region20: #{_forward.1} parent=1 // pred_region
      _
    $region21: #{_forward.1} parent=1 // pred_fallthru
      _
    // Predicated region
    $region22: #{_forward.1} parent=1 // pred_check
      _
    $region23: #{_forward.1} parent=1 // pred_check_branch
      %36 = sbr.rel (0) target = $region25
    $region24: #{_forward.1} parent=1 // pred_region
      _
    $region25: #{_forward.1} parent=1 // pred_fallthru
      _
    // Predicated region
    $region26: #{_forward.1} parent=1 // pred_check
      _
    $region27: #{_forward.1} parent=1 // pred_check_branch
      %38 = sbr.rel (0) target = $region29
    $region28: #{_forward.1} parent=1 // pred_region
      _
    $region29: #{_forward.1} parent=1 // pred_fallthru
      _
    // Predicated region
    $region30: #{_forward.1} parent=1 // pred_check
      _
    $region31: #{_forward.1} parent=1 // pred_check_branch
      %40 = sbr.rel (0) target = $region33
    $region32: #{_forward.1} parent=1 // pred_region
      _
    $region33: #{_forward.1} parent=1 // pred_fallthru
      _
    // Predicated region
    $region34: #{_forward.1} parent=1 // pred_check
      _
    $region35: #{_forward.1} parent=1 // pred_check_branch
      %42 = sbr.rel (0) target = $region37
    $region36: #{_forward.1} parent=1 // pred_region
      _
    $region37: #{_forward.1} parent=1 // pred_fallthru
      _
    // Predicated region
    $region38: #{_forward.1} parent=1 // pred_check
      _
    $region39: #{_forward.1} parent=1 // pred_check_branch
      %44 = sbr.rel (0) target = $region41
    $region40: #{_forward.1} parent=1 // pred_region
      _
    $region41: #{_forward.1} parent=1 // pred_fallthru
      _
    // Predicated region
    $region42: #{_forward.1} parent=1 // pred_check
      _
    $region43: #{_forward.1} parent=1 // pred_check_branch
      %46 = sbr.rel (0) target = $region45
    $region44: #{_forward.1} parent=1 // pred_region
      _
    $region45: #{_forward.1} parent=1 // pred_fallthru
      _
    // Predicated region
    $region46: #{_forward.1} parent=1 // pred_check
      _
    $region47: #{_forward.1} parent=1 // pred_check_branch
      %48 = sbr.rel (0) target = $region49
    $region48: #{_forward.1} parent=1 // pred_region
      _
    $region49: #{_forward.1} parent=1 // pred_fallthru
      _
    // Predicated region
    $region50: #{_forward.1} parent=1 // pred_check
      _
    $region51: #{_forward.1} parent=1 // pred_check_branch
      %50 = sbr.rel (0) target = $region53
    $region52: #{_forward.1} parent=1 // pred_region
      _
    $region53: #{_forward.1} parent=1 // pred_fallthru
      _
    // Predicated region
    $region54: #{_forward.1} parent=1 // pred_check
      _
    $region55: #{_forward.1} parent=1 // pred_check_branch
      %52 = sbr.rel (0) target = $region57
    $region56: #{_forward.1} parent=1 // pred_region
      _
    $region57: #{_forward.1} parent=1 // pred_fallthru
      _
    // Predicated region
    $region58: #{_forward.1} parent=1 // pred_check
      _
    $region59: #{_forward.1} parent=1 // pred_check_branch
      %54 = sbr.rel (0) target = $region61
    $region60: #{_forward.1} parent=1 // pred_region
      _
    $region61: #{_forward.1} parent=1 // pred_fallthru
      _
    // Predicated region
    $region62: #{_forward.1} parent=1 // pred_check
      _
    $region63: #{_forward.1} parent=1 // pred_check_branch
      %56 = sbr.rel (0) target = $region65
    $region64: #{_forward.1} parent=1 // pred_region
      _
    $region65: #{_forward.1} parent=1 // pred_fallthru
      _
    // Predicated region
    $region66: #{_forward.1} parent=1 // pred_check
      _
    $region67: #{_forward.1} parent=1 // pred_check_branch
      %58 = sbr.rel (0) target = $region69
    $region68: #{_forward.1} parent=1 // pred_region
      _
    $region69: #{_forward.1} parent=1 // pred_fallthru
      _
    %v60 = vlaneseq
    %v61 = vshrl.u32 %v60, 7
    %v62 = vadd.s32 %v61, 8
    %v63 = vadd.s32 %v61, 16
    %v64 = vadd.s32 %v61, 24
    %v65 = vadd.s32 %v61, 32
    %v66 = vadd.s32 %v61, 40
    %v67 = vadd.s32 %v61, 48
    %v68 = vadd.s32 %v61, 56
    %v69 = vshrl.u32 %v61, 3
    %v70 = vshrl.u32 %v62, 3
    %v71 = vshrl.u32 %v63, 3
    %v72 = vshrl.u32 %v64, 3
    %v73 = vshrl.u32 %v65, 3
    %v74 = vshrl.u32 %v66, 3
    %v75 = vshrl.u32 %v67, 3
    %v76 = vshrl.u32 %v68, 3
    %v77 = vlaneseq
    %v78 = vand.u32 %v77, 127
    %v79 = vshrl.u32 %v78, 3
    %vm80 = vcmp.eq.s32.totalorder %v69, %v79
    %vm81 = vcmp.eq.s32.totalorder %v70, %v79
    %vm82 = vcmp.eq.s32.totalorder %v71, %v79
    %vm83 = vcmp.eq.s32.totalorder %v72, %v79
    %vm84 = vcmp.eq.s32.totalorder %v73, %v79
    %vm85 = vcmp.eq.s32.totalorder %v74, %v79
    %vm86 = vcmp.eq.s32.totalorder %v75, %v79
    %vm87 = vcmp.eq.s32.totalorder %v76, %v79
    %v88 = vld [vmem:[%s0] sm:$0xff]
    %v89 = vld [vmem:[%s0 + $0x8] sm:$0xff]
    %v90 = vld [vmem:[%s1] sm:$0xf]
    %v91 = vld [vmem:[%s1 + $0x4] sm:$0xf]
    %v92 = vld [vmem:[%s1 + $0x8] sm:$0xf]
    %v93 = vld [vmem:[%s1 + $0xc] sm:$0xf]
    %v94 = vpack.c.bf16 %v89, %v88
    %v95 = vld [vmem:[%s2] sm:$0x1]
    %v97 = vperm.slane %v95, 0
    %v103 = vunpack.c.l.b16 %v90
    %v104 = vunpack.c.l.b16 %v91
    %v105 = vunpack.c.l.b16 %v92
    %v106 = vunpack.c.l.b16 %v93
    %v107 = vpack.c.b16 %v104, %v103
    %v108 = vpack.c.b16 %v106, %v105
    %vm111 = vcmask 261120
    %v113 = vsel %vm111, %v94, 0
    %115 = vmatpush.bf16.msra.mxu0 0
    %116 = vmatpush.bf16.msra.mxu0 0
    %117 = vmatpush.bf16.msra.mxu0 0
    %118 = vmatpush.bf16.msra.mxu0 0
    %119 = vmatpush.bf16.msra.mxu0 0
    %120 = vmatpush.bf16.msra.mxu0 0
    %121 = vmatpush.bf16.msra.mxu0 %v108
    %122 = vmatpush.bf16.msra.mxu0 %v107
    %123 = vmatmul.bf16.gmra.mxu0 %v113
    %v124 = vpop.f32.mrf.mxu0
    %v125 = vadd.f32 %v97, %v124
    %v126 = vpop.f32.mrf.mxu0
    %v127 = vadd.f32 %v97, %v126
    %128 = vdwg.mxu0
    %130 = vrot.lane.b32.xlu0 %v125, 120
    %v131 = vpop.permute.xlu0 %130
    %133 = vrot.lane.b32.xlu0 %v125, 112
    %v134 = vpop.permute.xlu0 %133
    %136 = vrot.lane.b32.xlu0 %v125, 104
    %v137 = vpop.permute.xlu0 %136
    %140 = vrot.lane.b32.xlu0 %v127, 120
    %v141 = vpop.permute.xlu0 %140
    %143 = vrot.lane.b32.xlu0 %v127, 112
    %v144 = vpop.permute.xlu0 %143
    %146 = vrot.lane.b32.xlu0 %v127, 104
    %v147 = vpop.permute.xlu0 %146
    %v149 = vpack.c.bf16 %v131, %v125
    %v150 = vpack.c.bf16 %v137, %v134
    %v151 = vpack.c.bf16 %v141, %v127
    %v152 = vpack.c.bf16 %v147, %v144
    %157 = vrot.lane.b32.xlu0 %v149, 96
    %v158 = vpop.permute.xlu0 %157
    %159 = vrot.lane.b32.xlu0 %v150, 96
    %v160 = vpop.permute.xlu0 %159
    %161 = vrot.lane.b32.xlu0 %v151, 96
    %v162 = vpop.permute.xlu0 %161
    %163 = vrot.lane.b32.xlu0 %v152, 96
    %v164 = vpop.permute.xlu0 %163
    %vm165 = vcmask 64512
    %v167 = vsel %vm165, %v149, 0
    %v170 = vsel %vm165, %v150, 0
    %v173 = vsel %vm165, %v151, 0
    %v176 = vsel %vm165, %v152, 0
    %v179 = vsel %vm165, %v158, 0
    %v182 = vsel %vm165, %v160, 0
    %v185 = vsel %vm165, %v162, 0
    %v188 = vsel %vm165, %v164, 0
    %190 = vmatpush.bf16.xpose.msra.mxu0 0
    %191 = vmatpush.bf16.xpose.msra.mxu0 0
    %192 = vmatpush.bf16.xpose.msra.mxu0 0
    %193 = vmatpush.bf16.xpose.msra.mxu0 0
    %194 = vmatpush.bf16.xpose.msra.mxu0 %v188
    %195 = vmatpush.bf16.xpose.msra.mxu0 %v185
    %196 = vmatpush.bf16.xpose.msra.mxu0 %v182
    %197 = vmatpush.bf16.xpose.msra.mxu0 %v179
    %198 = vmatmul.bf16.gmra.mxu0 %v167
    %v199 = vpop.f32.mrf.mxu0
    %v200 = vadd.f32 0.0, %v199
    %v201 = vpop.f32.mrf.mxu0
    %v202 = vadd.f32 0.0, %v201
    %203 = vmatmul.bf16.gmra.mxu0 %v170
    %v204 = vpop.f32.mrf.mxu0
    %v205 = vadd.f32 0.0, %v204
    %v206 = vpop.f32.mrf.mxu0
    %v207 = vadd.f32 0.0, %v206
    %208 = vmatmul.bf16.gmra.mxu0 %v173
    %v209 = vpop.f32.mrf.mxu0
    %v210 = vadd.f32 0.0, %v209
    %v211 = vpop.f32.mrf.mxu0
    %v212 = vadd.f32 0.0, %v211
    %213 = vmatmul.bf16.gmra.mxu0 %v176
    %v214 = vpop.f32.mrf.mxu0
    %v215 = vadd.f32 0.0, %v214
    %v216 = vpop.f32.mrf.mxu0
    %v217 = vadd.f32 0.0, %v216
    %218 = vdwg.mxu0
    %v219 = vmul.f32 %v200, 0.35355338
    %v220 = vmul.f32 %v202, 0.35355338
    %v221 = vmul.f32 %v205, 0.35355338
    %v222 = vmul.f32 %v207, 0.35355338
    %v223 = vmul.f32 %v210, 0.35355338
    %v224 = vmul.f32 %v212, 0.35355338
    %v225 = vmul.f32 %v215, 0.35355338
    %v226 = vmul.f32 %v217, 0.35355338
    %v227 = vsel %vm80, %v219, -1e+30
    %v228 = vsel %vm81, %v220, -1e+30
    %v229 = vsel %vm82, %v221, -1e+30
    %v230 = vsel %vm83, %v222, -1e+30
    %v231 = vsel %vm84, %v223, -1e+30
    %v232 = vsel %vm85, %v224, -1e+30
    %v233 = vsel %vm86, %v225, -1e+30
    %v234 = vsel %vm87, %v226, -1e+30
    %vm235 = vcmask 523264
    %v236 = vsel %vm235, %v227, -inf
    %237 = vmax.xlane.f32.xlu0 %v236
    %v238 = vpop.xlane.xlu0 %237
    %v239 = vsel %vm235, %v228, -inf
    %240 = vmax.xlane.f32.xlu0 %v239
    %v241 = vpop.xlane.xlu0 %240
    %v242 = vsel %vm235, %v229, -inf
    %243 = vmax.xlane.f32.xlu0 %v242
    %v244 = vpop.xlane.xlu0 %243
    %v245 = vsel %vm235, %v230, -inf
    %246 = vmax.xlane.f32.xlu0 %v245
    %v247 = vpop.xlane.xlu0 %246
    %v248 = vsel %vm235, %v231, -inf
    %249 = vmax.xlane.f32.xlu0 %v248
    %v250 = vpop.xlane.xlu0 %249
    %v251 = vsel %vm235, %v232, -inf
    %252 = vmax.xlane.f32.xlu0 %v251
    %v253 = vpop.xlane.xlu0 %252
    %v254 = vsel %vm235, %v233, -inf
    %255 = vmax.xlane.f32.xlu0 %v254
    %v256 = vpop.xlane.xlu0 %255
    %v257 = vsel %vm235, %v234, -inf
    %258 = vmax.xlane.f32.xlu0 %v257
    %v259 = vpop.xlane.xlu0 %258
    %v260 = vsub.f32 %v227, %v238
    %v261 = vsub.f32 %v228, %v241
    %v262 = vsub.f32 %v229, %v244
    %v263 = vsub.f32 %v230, %v247
    %v264 = vsub.f32 %v231, %v250
    %v265 = vsub.f32 %v232, %v253
    %v266 = vsub.f32 %v233, %v256
    %v267 = vsub.f32 %v234, %v259
    %v268 = vmul.f32 %v260, 1.442695
    %v269 = vpow.pop %v268
    %v270 = vmul.f32 %v261, 1.442695
    %v271 = vpow.pop %v270
    %v272 = vmul.f32 %v262, 1.442695
    %v273 = vpow.pop %v272
    %v274 = vmul.f32 %v263, 1.442695
    %v275 = vpow.pop %v274
    %v276 = vmul.f32 %v264, 1.442695
    %v277 = vpow.pop %v276
    %v278 = vmul.f32 %v265, 1.442695
    %v279 = vpow.pop %v278
    %v280 = vmul.f32 %v266, 1.442695
    %v281 = vpow.pop %v280
    %v282 = vmul.f32 %v267, 1.442695
    %v283 = vpow.pop %v282
    %v284 = vsel %vm235, %v269, 0.0
    %285 = vadd.xlane.f32.xlu0 %v284
    %v286 = vpop.xlane.xlu0 %285
    %v287 = vsel %vm235, %v271, 0.0
    %288 = vadd.xlane.f32.xlu0 %v287
    %v289 = vpop.xlane.xlu0 %288
    %v290 = vsel %vm235, %v273, 0.0
    %291 = vadd.xlane.f32.xlu0 %v290
    %v292 = vpop.xlane.xlu0 %291
    %v293 = vsel %vm235, %v275, 0.0
    %294 = vadd.xlane.f32.xlu0 %v293
    %v295 = vpop.xlane.xlu0 %294
    %v296 = vsel %vm235, %v277, 0.0
    %297 = vadd.xlane.f32.xlu0 %v296
    %v298 = vpop.xlane.xlu0 %297
    %v299 = vsel %vm235, %v279, 0.0
    %300 = vadd.xlane.f32.xlu0 %v299
    %v301 = vpop.xlane.xlu0 %300
    %v302 = vsel %vm235, %v281, 0.0
    %303 = vadd.xlane.f32.xlu0 %v302
    %v304 = vpop.xlane.xlu0 %303
    %v305 = vsel %vm235, %v283, 0.0
    %306 = vadd.xlane.f32.xlu0 %v305
    %v307 = vpop.xlane.xlu0 %306
    %v308 = vrcp.pop %v286
    %v309 = vmul.f32 %v286, %v308
    %v310 = vsub.f32 1.0, %v309
    %v311 = vmul.f32 %v308, %v310
    %v312 = vadd.f32 %v308, %v311
    %vm313 = vweird.f32 %v286
    %vm314 = vweird.f32 %v308
    %vm315 = vmor %vm313, %vm314
    %v316 = vsel %vm315, %v308, %v312
    %v317 = vand.u32 2147483647, %v286
    %vm318 = vcmp.eq.f32.partialorder %v317, 8.507059e+37
    %v319 = vand.u32 %v286, 2147483648
    %v320 = vor.u32 1.1754944e-38, %v319
    %v321 = vsel %vm318, %v320, %v316
    %v322 = vrcp.pop %v289
    %v323 = vmul.f32 %v289, %v322
    %v324 = vsub.f32 1.0, %v323
    %v325 = vmul.f32 %v322, %v324
    %v326 = vadd.f32 %v322, %v325
    %vm327 = vweird.f32 %v289
    %vm328 = vweird.f32 %v322
    %vm329 = vmor %vm327, %vm328
    %v330 = vsel %vm329, %v322, %v326
    %v331 = vand.u32 2147483647, %v289
    %vm332 = vcmp.eq.f32.partialorder %v331, 8.507059e+37
    %v333 = vand.u32 %v289, 2147483648
    %v334 = vor.u32 1.1754944e-38, %v333
    %v335 = vsel %vm332, %v334, %v330
    %v336 = vrcp.pop %v292
    %v337 = vmul.f32 %v292, %v336
    %v338 = vsub.f32 1.0, %v337
    %v339 = vmul.f32 %v336, %v338
    %v340 = vadd.f32 %v336, %v339
    %vm341 = vweird.f32 %v292
    %vm342 = vweird.f32 %v336
    %vm343 = vmor %vm341, %vm342
    %v344 = vsel %vm343, %v336, %v340
    %v345 = vand.u32 2147483647, %v292
    %vm346 = vcmp.eq.f32.partialorder %v345, 8.507059e+37
    %v347 = vand.u32 %v292, 2147483648
    %v348 = vor.u32 1.1754944e-38, %v347
    %v349 = vsel %vm346, %v348, %v344
    %v350 = vrcp.pop %v295
    %v351 = vmul.f32 %v295, %v350
    %v352 = vsub.f32 1.0, %v351
    %v353 = vmul.f32 %v350, %v352
    %v354 = vadd.f32 %v350, %v353
    %vm355 = vweird.f32 %v295
    %vm356 = vweird.f32 %v350
    %vm357 = vmor %vm355, %vm356
    %v358 = vsel %vm357, %v350, %v354
    %v359 = vand.u32 2147483647, %v295
    %vm360 = vcmp.eq.f32.partialorder %v359, 8.507059e+37
    %v361 = vand.u32 %v295, 2147483648
    %v362 = vor.u32 1.1754944e-38, %v361
    %v363 = vsel %vm360, %v362, %v358
    %v364 = vrcp.pop %v298
    %v365 = vmul.f32 %v298, %v364
    %v366 = vsub.f32 1.0, %v365
    %v367 = vmul.f32 %v364, %v366
    %v368 = vadd.f32 %v364, %v367
    %vm369 = vweird.f32 %v298
    %vm370 = vweird.f32 %v364
    %vm371 = vmor %vm369, %vm370
    %v372 = vsel %vm371, %v364, %v368
    %v373 = vand.u32 2147483647, %v298
    %vm374 = vcmp.eq.f32.partialorder %v373, 8.507059e+37
    %v375 = vand.u32 %v298, 2147483648
    %v376 = vor.u32 1.1754944e-38, %v375
    %v377 = vsel %vm374, %v376, %v372
    %v378 = vrcp.pop %v301
    %v379 = vmul.f32 %v301, %v378
    %v380 = vsub.f32 1.0, %v379
    %v381 = vmul.f32 %v378, %v380
    %v382 = vadd.f32 %v378, %v381
    %vm383 = vweird.f32 %v301
    %vm384 = vweird.f32 %v378
    %vm385 = vmor %vm383, %vm384
    %v386 = vsel %vm385, %v378, %v382
    %v387 = vand.u32 2147483647, %v301
    %vm388 = vcmp.eq.f32.partialorder %v387, 8.507059e+37
    %v389 = vand.u32 %v301, 2147483648
    %v390 = vor.u32 1.1754944e-38, %v389
    %v391 = vsel %vm388, %v390, %v386
    %v392 = vrcp.pop %v304
    %v393 = vmul.f32 %v304, %v392
    %v394 = vsub.f32 1.0, %v393
    %v395 = vmul.f32 %v392, %v394
    %v396 = vadd.f32 %v392, %v395
    %vm397 = vweird.f32 %v304
    %vm398 = vweird.f32 %v392
    %vm399 = vmor %vm397, %vm398
    %v400 = vsel %vm399, %v392, %v396
    %v401 = vand.u32 2147483647, %v304
    %vm402 = vcmp.eq.f32.partialorder %v401, 8.507059e+37
    %v403 = vand.u32 %v304, 2147483648
    %v404 = vor.u32 1.1754944e-38, %v403
    %v405 = vsel %vm402, %v404, %v400
    %v406 = vrcp.pop %v307
    %v407 = vmul.f32 %v307, %v406
    %v408 = vsub.f32 1.0, %v407
    %v409 = vmul.f32 %v406, %v408
    %v410 = vadd.f32 %v406, %v409
    %vm411 = vweird.f32 %v307
    %vm412 = vweird.f32 %v406
    %vm413 = vmor %vm411, %vm412
    %v414 = vsel %vm413, %v406, %v410
    %v415 = vand.u32 2147483647, %v307
    %vm416 = vcmp.eq.f32.partialorder %v415, 8.507059e+37
    %v417 = vand.u32 %v307, 2147483648
    %v418 = vor.u32 1.1754944e-38, %v417
    %v419 = vsel %vm416, %v418, %v414
    %v420 = vmul.f32 %v269, %v321
    %v421 = vmul.f32 %v271, %v335
    %v422 = vmul.f32 %v273, %v349
    %v423 = vmul.f32 %v275, %v363
    %v424 = vmul.f32 %v277, %v377
    %v425 = vmul.f32 %v279, %v391
    %v426 = vmul.f32 %v281, %v405
    %v427 = vmul.f32 %v283, %v419
    %v428 = vpack.c.bf16 %v421, %v420
    %v429 = vpack.c.bf16 %v423, %v422
    %v430 = vpack.c.bf16 %v425, %v424
    %v431 = vpack.c.bf16 %v427, %v426
    %432 = vrot.lane.b32.xlu0 %v149, 64
    %v433 = vpop.permute.xlu0 %432
    %434 = vrot.lane.b32.xlu0 %v150, 64
    %v435 = vpop.permute.xlu0 %434
    %436 = vrot.lane.b32.xlu0 %v151, 64
    %v437 = vpop.permute.xlu0 %436
    %438 = vrot.lane.b32.xlu0 %v152, 64
    %v439 = vpop.permute.xlu0 %438
    %v445 = vsel %vm235, %v428, 0
    %v448 = vsel %vm235, %v429, 0
    %v451 = vsel %vm235, %v430, 0
    %v454 = vsel %vm235, %v431, 0
    %456 = vmatpush.bf16.msra.mxu0 0
    %457 = vmatpush.bf16.msra.mxu0 0
    %458 = vmatpush.bf16.msra.mxu0 0
    %459 = vmatpush.bf16.msra.mxu0 0
    %460 = vmatpush.bf16.msra.mxu0 %v439
    %461 = vmatpush.bf16.msra.mxu0 %v437
    %462 = vmatpush.bf16.msra.mxu0 %v435
    %463 = vmatpush.bf16.msra.mxu0 %v433
    %464 = vmatmul.bf16.gmra.mxu0 %v445
    %v465 = vpop.f32.mrf.mxu0
    %v466 = vadd.f32 0.0, %v465
    %v467 = vpop.f32.mrf.mxu0
    %v468 = vadd.f32 0.0, %v467
    %469 = vmatmul.bf16.gmra.mxu0 %v448
    %v470 = vpop.f32.mrf.mxu0
    %v471 = vadd.f32 0.0, %v470
    %v472 = vpop.f32.mrf.mxu0
    %v473 = vadd.f32 0.0, %v472
    %474 = vmatmul.bf16.gmra.mxu0 %v451
    %v475 = vpop.f32.mrf.mxu0
    %v476 = vadd.f32 0.0, %v475
    %v477 = vpop.f32.mrf.mxu0
    %v478 = vadd.f32 0.0, %v477
    %479 = vmatmul.bf16.gmra.mxu0 %v454
    %v480 = vpop.f32.mrf.mxu0
    %v481 = vadd.f32 0.0, %v480
    %v482 = vpop.f32.mrf.mxu0
    %v483 = vadd.f32 0.0, %v482
    %484 = vdwg.mxu0
    %486 = vrot.lane.b32.xlu0 %v468, 8
    %v487 = vpop.permute.xlu0 %486
    %490 = vrot.lane.b32.xlu0 %v471, 16
    %v491 = vpop.permute.xlu0 %490
    %494 = vrot.lane.b32.xlu0 %v473, 24
    %v495 = vpop.permute.xlu0 %494
    %v497 = vsel %vm165, %v466, %v487
    %vm498 = vcmask 130048
    %v499 = vsel %vm498, %v497, %v491
    %vm500 = vcmask 195584
    %v501 = vsel %vm500, %v499, %v495
    %503 = vrot.lane.b32.xlu0 %v478, 8
    %v504 = vpop.permute.xlu0 %503
    %507 = vrot.lane.b32.xlu0 %v481, 16
    %v508 = vpop.permute.xlu0 %507
    %511 = vrot.lane.b32.xlu0 %v483, 24
    %v512 = vpop.permute.xlu0 %511
    %v514 = vsel %vm165, %v476, %v504
    %v515 = vsel %vm498, %v514, %v508
    %v516 = vsel %vm500, %v515, %v512
    %v517 = vld [vmem:[%s3] sm:$0xf]
    %v518 = vld [vmem:[%s3 + $0x4] sm:$0xf]
    %v519 = vld [vmem:[%s3 + $0x8] sm:$0xf]
    %v520 = vld [vmem:[%s3 + $0xc] sm:$0xf]
    %v521 = vpack.c.bf16 %v516, %v501
    %v522 = vld [vmem:[%s4] sm:$0x1]
    %v524 = vperm.slane %v522, 0
    %v530 = vunpack.c.l.b16 %v517
    %v531 = vunpack.c.l.b16 %v518
    %v532 = vunpack.c.l.b16 %v519
    %v533 = vunpack.c.l.b16 %v520
    %v534 = vpack.c.b16 %v531, %v530
    %v535 = vpack.c.b16 %v533, %v532
    %v539 = vsel %vm111, %v521, 0
    %541 = vmatpush.bf16.msra.mxu0 0
    %542 = vmatpush.bf16.msra.mxu0 0
    %543 = vmatpush.bf16.msra.mxu0 0
    %544 = vmatpush.bf16.msra.mxu0 0
    %545 = vmatpush.bf16.msra.mxu0 0
    %546 = vmatpush.bf16.msra.mxu0 0
    %547 = vmatpush.bf16.msra.mxu0 %v535
    %548 = vmatpush.bf16.msra.mxu0 %v534
    %549 = vmatmul.bf16.gmra.mxu0 %v539
    %v550 = vpop.f32.mrf.mxu0
    %v551 = vadd.f32 %v524, %v550
    %v552 = vpop.f32.mrf.mxu0
    %v553 = vadd.f32 %v524, %v552
    %554 = vdwg.mxu0
    %v555 = vadd.f32 %v88, %v551
    %v556 = vadd.f32 %v89, %v553
    %v557 = vld [vmem:[%s9] sm:$0x1]
    %v558 = vld [vmem:[%s10] sm:$0x1]
    %v559 = vsel %vm111, %v555, 0.0
    %560 = vadd.xlane.f32.xlu0 %v559
    %v561 = vpop.xlane.xlu0 %560
    %v562 = vsel %vm111, %v556, 0.0
    %563 = vadd.xlane.f32.xlu0 %v562
    %v564 = vpop.xlane.xlu0 %563
    %v565 = vrcp.pop 32.0
    %v566 = vmul.f32 32.0, %v565
    %v567 = vsub.f32 1.0, %v566
    %v568 = vmul.f32 %v565, %v567
    %v569 = vadd.f32 %v565, %v568
    %vm570 = vweird.f32 %v565
    %v571 = vsel %vm570, %v565, %v569
    %v572 = vmul.f32 %v561, %v571
    %v573 = vmul.f32 %v564, %v571
    %v574 = vsub.f32 %v555, %v572
    %v575 = vsub.f32 %v556, %v573
    %v576 = vmul.f32 %v574, %v574
    %v577 = vmul.f32 %v575, %v575
    %v578 = vsel %vm111, %v576, 0.0
    %579 = vadd.xlane.f32.xlu0 %v578
    %v580 = vpop.xlane.xlu0 %579
    %v581 = vsel %vm111, %v577, 0.0
    %582 = vadd.xlane.f32.xlu0 %v581
    %v583 = vpop.xlane.xlu0 %582
    %v584 = vmul.f32 %v580, %v571
    %v585 = vmul.f32 %v583, %v571
    %v586 = vadd.f32 %v584, 1e-05
    %v587 = vadd.f32 %v585, 1e-05
    %v588 = vrsqrt.pop %v586
    %v589 = vmul.f32 %v588, %v586
    %v590 = vmul.f32 %v589, %v588
    %v591 = vmul.f32 0.5, %v590
    %v592 = vsub.f32 1.5, %v591
    %v593 = vmul.f32 %v588, %v592
    %vm594 = vweird.f32 %v586
    %vm595 = vweird.f32 %v588
    %vm596 = vmor %vm594, %vm595
    %v597 = vsel %vm596, %v588, %v593
    %v598 = vrsqrt.pop %v587
    %v599 = vmul.f32 %v598, %v587
    %v600 = vmul.f32 %v599, %v598
    %v601 = vmul.f32 0.5, %v600
    %v602 = vsub.f32 1.5, %v601
    %v603 = vmul.f32 %v598, %v602
    %vm604 = vweird.f32 %v587
    %vm605 = vweird.f32 %v598
    %vm606 = vmor %vm604, %vm605
    %v607 = vsel %vm606, %v598, %v603
    %v608 = vmul.f32 %v574, %v597
    %v609 = vmul.f32 %v575, %v607
    %v611 = vperm.slane %v557, 0
    %v613 = vmul.f32 %v608, %v611
    %v614 = vmul.f32 %v609, %v611
    %v616 = vperm.slane %v558, 0
    %v618 = vadd.f32 %v613, %v616
    %v619 = vadd.f32 %v614, %v616
    %v620 = vld [vmem:[%s5] sm:$0xff]
    %v621 = vld [vmem:[%s5 + $0x8] sm:$0xff]
    %v622 = vld [vmem:[%s5 + $0x10] sm:$0xff]
    %v623 = vld [vmem:[%s5 + $0x18] sm:$0xff]
    %v624 = vld [vmem:[%s5 + $0x20] sm:$0xff]
    %v625 = vld [vmem:[%s5 + $0x28] sm:$0xff]
    %v626 = vld [vmem:[%s5 + $0x30] sm:$0xff]
    %v627 = vld [vmem:[%s5 + $0x38] sm:$0xff]
    %v628 = vld [vmem:[%s5 + $0x40] sm:$0xff]
    %v629 = vld [vmem:[%s5 + $0x48] sm:$0xff]
    %v630 = vld [vmem:[%s5 + $0x50] sm:$0xff]
    %v631 = vld [vmem:[%s5 + $0x58] sm:$0xff]
    %v632 = vld [vmem:[%s5 + $0x60] sm:$0xff]
    %v633 = vld [vmem:[%s5 + $0x68] sm:$0xff]
    %v634 = vld [vmem:[%s5 + $0x70] sm:$0xff]
    %v635 = vld [vmem:[%s5 + $0x78] sm:$0xff]
    %v636 = vld [vmem:[%s5 + $0x80] sm:$0xff]
    %v637 = vld [vmem:[%s5 + $0x88] sm:$0xff]
    %v638 = vld [vmem:[%s5 + $0x90] sm:$0xff]
    %v639 = vld [vmem:[%s5 + $0x98] sm:$0xff]
    %v640 = vld [vmem:[%s5 + $0xa0] sm:$0xff]
    %v641 = vld [vmem:[%s5 + $0xa8] sm:$0xff]
    %v642 = vld [vmem:[%s5 + $0xb0] sm:$0xff]
    %v643 = vld [vmem:[%s5 + $0xb8] sm:$0xff]
    %v644 = vld [vmem:[%s5 + $0xc0] sm:$0xff]
    %v645 = vld [vmem:[%s5 + $0xc8] sm:$0xff]
    %v646 = vld [vmem:[%s5 + $0xd0] sm:$0xff]
    %v647 = vld [vmem:[%s5 + $0xd8] sm:$0xff]
    %v648 = vld [vmem:[%s5 + $0xe0] sm:$0xff]
    %v649 = vld [vmem:[%s5 + $0xe8] sm:$0xff]
    %v650 = vld [vmem:[%s5 + $0xf0] sm:$0xff]
    %v651 = vld [vmem:[%s5 + $0xf8] sm:$0xff]
    %v652 = vpack.c.bf16 %v619, %v618
    %v653 = vld [vmem:[%s6] sm:$0xff]
    %v654 = vld [vmem:[%s6 + $0x8] sm:$0xff]
    %v657 = vperm.slane %v653, 0
    %v658 = vperm.slane %v653, 1
    %v659 = vperm.slane %v653, 2
    %v660 = vperm.slane %v653, 3
    %v661 = vperm.slane %v653, 4
    %v662 = vperm.slane %v653, 5
    %v663 = vperm.slane %v653, 6
    %v664 = vperm.slane %v653, 7
    %v665 = vperm.slane %v654, 0
    %v666 = vperm.slane %v654, 1
    %v667 = vperm.slane %v654, 2
    %v668 = vperm.slane %v654, 3
    %v669 = vperm.slane %v654, 4
    %v670 = vperm.slane %v654, 5
    %v671 = vperm.slane %v654, 6
    %v672 = vperm.slane %v654, 7
    %v721 = vunpack.c.l.b16 %v620
    %v722 = vunpack.c.h.b16 %v620
    %v723 = vunpack.c.l.b16 %v621
    %v724 = vunpack.c.h.b16 %v621
    %v725 = vunpack.c.l.b16 %v622
    %v726 = vunpack.c.h.b16 %v622
    %v727 = vunpack.c.l.b16 %v623
    %v728 = vunpack.c.h.b16 %v623
    %v729 = vunpack.c.l.b16 %v624
    %v730 = vunpack.c.h.b16 %v624
    %v731 = vunpack.c.l.b16 %v625
    %v732 = vunpack.c.h.b16 %v625
    %v733 = vunpack.c.l.b16 %v626
    %v734 = vunpack.c.h.b16 %v626
    %v735 = vunpack.c.l.b16 %v627
    %v736 = vunpack.c.h.b16 %v627
    %v737 = vunpack.c.l.b16 %v628
    %v738 = vunpack.c.h.b16 %v628
    %v739 = vunpack.c.l.b16 %v629
    %v740 = vunpack.c.h.b16 %v629
    %v741 = vunpack.c.l.b16 %v630
    %v742 = vunpack.c.h.b16 %v630
    %v743 = vunpack.c.l.b16 %v631
    %v744 = vunpack.c.h.b16 %v631
    %v745 = vunpack.c.l.b16 %v632
    %v746 = vunpack.c.h.b16 %v632
    %v747 = vunpack.c.l.b16 %v633
    %v748 = vunpack.c.h.b16 %v633
    %v749 = vunpack.c.l.b16 %v634
    %v750 = vunpack.c.h.b16 %v634
    %v751 = vunpack.c.l.b16 %v635
    %v752 = vunpack.c.h.b16 %v635
    %v753 = vunpack.c.l.b16 %v636
    %v754 = vunpack.c.h.b16 %v636
    %v755 = vunpack.c.l.b16 %v637
    %v756 = vunpack.c.h.b16 %v637
    %v757 = vunpack.c.l.b16 %v638
    %v758 = vunpack.c.h.b16 %v638
    %v759 = vunpack.c.l.b16 %v639
    %v760 = vunpack.c.h.b16 %v639
    %v761 = vunpack.c.l.b16 %v640
    %v762 = vunpack.c.h.b16 %v640
    %v763 = vunpack.c.l.b16 %v641
    %v764 = vunpack.c.h.b16 %v641
    %v765 = vunpack.c.l.b16 %v642
    %v766 = vunpack.c.h.b16 %v642
    %v767 = vunpack.c.l.b16 %v643
    %v768 = vunpack.c.h.b16 %v643
    %v769 = vunpack.c.l.b16 %v644
    %v770 = vunpack.c.h.b16 %v644
    %v771 = vunpack.c.l.b16 %v645
    %v772 = vunpack.c.h.b16 %v645
    %v773 = vunpack.c.l.b16 %v646
    %v774 = vunpack.c.h.b16 %v646
    %v775 = vunpack.c.l.b16 %v647
    %v776 = vunpack.c.h.b16 %v647
    %v777 = vunpack.c.l.b16 %v648
    %v778 = vunpack.c.h.b16 %v648
    %v779 = vunpack.c.l.b16 %v649
    %v780 = vunpack.c.h.b16 %v649
    %v781 = vunpack.c.l.b16 %v650
    %v782 = vunpack.c.h.b16 %v650
    %v783 = vunpack.c.l.b16 %v651
    %v784 = vunpack.c.h.b16 %v651
    %v785 = vpack.c.b16 %v737, %v721
    %v786 = vpack.c.b16 %v738, %v722
    %v787 = vpack.c.b16 %v739, %v723
    %v788 = vpack.c.b16 %v740, %v724
    %v789 = vpack.c.b16 %v741, %v725
    %v790 = vpack.c.b16 %v742, %v726
    %v791 = vpack.c.b16 %v743, %v727
    %v792 = vpack.c.b16 %v744, %v728
    %v793 = vpack.c.b16 %v745, %v729
    %v794 = vpack.c.b16 %v746, %v730
    %v795 = vpack.c.b16 %v747, %v731
    %v796 = vpack.c.b16 %v748, %v732
    %v797 = vpack.c.b16 %v749, %v733
    %v798 = vpack.c.b16 %v750, %v734
    %v799 = vpack.c.b16 %v751, %v735
    %v800 = vpack.c.b16 %v752, %v736
    %v801 = vpack.c.b16 %v769, %v753
    %v802 = vpack.c.b16 %v770, %v754
    %v803 = vpack.c.b16 %v771, %v755
    %v804 = vpack.c.b16 %v772, %v756
    %v805 = vpack.c.b16 %v773, %v757
    %v806 = vpack.c.b16 %v774, %v758
    %v807 = vpack.c.b16 %v775, %v759
    %v808 = vpack.c.b16 %v776, %v760
    %v809 = vpack.c.b16 %v777, %v761
    %v810 = vpack.c.b16 %v778, %v762
    %v811 = vpack.c.b16 %v779, %v763
    %v812 = vpack.c.b16 %v780, %v764
    %v813 = vpack.c.b16 %v781, %v765
    %v814 = vpack.c.b16 %v782, %v766
    %v815 = vpack.c.b16 %v783, %v767
    %v816 = vpack.c.b16 %v784, %v768
    %v850 = vsel %vm111, %v652, 0
    %852 = vmatpush.bf16.msra.mxu0 0
    %853 = vmatpush.bf16.msra.mxu0 0
    %854 = vmatpush.bf16.msra.mxu0 0
    %855 = vmatpush.bf16.msra.mxu0 0
    %856 = vmatpush.bf16.msra.mxu0 0
    %857 = vmatpush.bf16.msra.mxu0 0
    %858 = vmatpush.bf16.msra.mxu0 %v801
    %859 = vmatpush.bf16.msra.mxu0 %v785
    %860 = vmatmul.bf16.gmra.mxu0 %v850
    %v861 = vpop.f32.mrf.mxu0
    %v862 = vadd.f32 %v657, %v861
    %v863 = vpop.f32.mrf.mxu0
    %v864 = vadd.f32 %v657, %v863
    %865 = vdwg.mxu0
    %866 = vmatpush.bf16.msra.mxu0 0
    %867 = vmatpush.bf16.msra.mxu0 0
    %868 = vmatpush.bf16.msra.mxu0 0
    %869 = vmatpush.bf16.msra.mxu0 0
    %870 = vmatpush.bf16.msra.mxu0 0
    %871 = vmatpush.bf16.msra.mxu0 0
    %872 = vmatpush.bf16.msra.mxu0 %v802
    %873 = vmatpush.bf16.msra.mxu0 %v786
    %874 = vmatmul.bf16.gmra.mxu0 %v850
    %v875 = vpop.f32.mrf.mxu0
    %v876 = vadd.f32 %v658, %v875
    %v877 = vpop.f32.mrf.mxu0
    %v878 = vadd.f32 %v658, %v877
    %879 = vdwg.mxu0
    %880 = vmatpush.bf16.msra.mxu0 0
    %881 = vmatpush.bf16.msra.mxu0 0
    %882 = vmatpush.bf16.msra.mxu0 0
    %883 = vmatpush.bf16.msra.mxu0 0
    %884 = vmatpush.bf16.msra.mxu0 0
    %885 = vmatpush.bf16.msra.mxu0 0
    %886 = vmatpush.bf16.msra.mxu0 %v803
    %887 = vmatpush.bf16.msra.mxu0 %v787
    %888 = vmatmul.bf16.gmra.mxu0 %v850
    %v889 = vpop.f32.mrf.mxu0
    %v890 = vadd.f32 %v659, %v889
    %v891 = vpop.f32.mrf.mxu0
    %v892 = vadd.f32 %v659, %v891
    %893 = vdwg.mxu0
    %894 = vmatpush.bf16.msra.mxu0 0
    %895 = vmatpush.bf16.msra.mxu0 0
    %896 = vmatpush.bf16.msra.mxu0 0
    %897 = vmatpush.bf16.msra.mxu0 0
    %898 = vmatpush.bf16.msra.mxu0 0
    %899 = vmatpush.bf16.msra.mxu0 0
    %900 = vmatpush.bf16.msra.mxu0 %v804
    %901 = vmatpush.bf16.msra.mxu0 %v788
    %902 = vmatmul.bf16.gmra.mxu0 %v850
    %v903 = vpop.f32.mrf.mxu0
    %v904 = vadd.f32 %v660, %v903
    %v905 = vpop.f32.mrf.mxu0
    %v906 = vadd.f32 %v660, %v905
    %907 = vdwg.mxu0
    %908 = vmatpush.bf16.msra.mxu0 0
    %909 = vmatpush.bf16.msra.mxu0 0
    %910 = vmatpush.bf16.msra.mxu0 0
    %911 = vmatpush.bf16.msra.mxu0 0
    %912 = vmatpush.bf16.msra.mxu0 0
    %913 = vmatpush.bf16.msra.mxu0 0
    %914 = vmatpush.bf16.msra.mxu0 %v805
    %915 = vmatpush.bf16.msra.mxu0 %v789
    %916 = vmatmul.bf16.gmra.mxu0 %v850
    %v917 = vpop.f32.mrf.mxu0
    %v918 = vadd.f32 %v661, %v917
    %v919 = vpop.f32.mrf.mxu0
    %v920 = vadd.f32 %v661, %v919
    %921 = vdwg.mxu0
    %922 = vmatpush.bf16.msra.mxu0 0
    %923 = vmatpush.bf16.msra.mxu0 0
    %924 = vmatpush.bf16.msra.mxu0 0
    %925 = vmatpush.bf16.msra.mxu0 0
    %926 = vmatpush.bf16.msra.mxu0 0
    %927 = vmatpush.bf16.msra.mxu0 0
    %928 = vmatpush.bf16.msra.mxu0 %v806
    %929 = vmatpush.bf16.msra.mxu0 %v790
    %930 = vmatmul.bf16.gmra.mxu0 %v850
    %v931 = vpop.f32.mrf.mxu0
    %v932 = vadd.f32 %v662, %v931
    %v933 = vpop.f32.mrf.mxu0
    %v934 = vadd.f32 %v662, %v933
    %935 = vdwg.mxu0
    %936 = vmatpush.bf16.msra.mxu0 0
    %937 = vmatpush.bf16.msra.mxu0 0
    %938 = vmatpush.bf16.msra.mxu0 0
    %939 = vmatpush.bf16.msra.mxu0 0
    %940 = vmatpush.bf16.msra.mxu0 0
    %941 = vmatpush.bf16.msra.mxu0 0
    %942 = vmatpush.bf16.msra.mxu0 %v807
    %943 = vmatpush.bf16.msra.mxu0 %v791
    %944 = vmatmul.bf16.gmra.mxu0 %v850
    %v945 = vpop.f32.mrf.mxu0
    %v946 = vadd.f32 %v663, %v945
    %v947 = vpop.f32.mrf.mxu0
    %v948 = vadd.f32 %v663, %v947
    %949 = vdwg.mxu0
    %950 = vmatpush.bf16.msra.mxu0 0
    %951 = vmatpush.bf16.msra.mxu0 0
    %952 = vmatpush.bf16.msra.mxu0 0
    %953 = vmatpush.bf16.msra.mxu0 0
    %954 = vmatpush.bf16.msra.mxu0 0
    %955 = vmatpush.bf16.msra.mxu0 0
    %956 = vmatpush.bf16.msra.mxu0 %v808
    %957 = vmatpush.bf16.msra.mxu0 %v792
    %958 = vmatmul.bf16.gmra.mxu0 %v850
    %v959 = vpop.f32.mrf.mxu0
    %v960 = vadd.f32 %v664, %v959
    %v961 = vpop.f32.mrf.mxu0
    %v962 = vadd.f32 %v664, %v961
    %963 = vdwg.mxu0
    %964 = vmatpush.bf16.msra.mxu0 0
    %965 = vmatpush.bf16.msra.mxu0 0
    %966 = vmatpush.bf16.msra.mxu0 0
    %967 = vmatpush.bf16.msra.mxu0 0
    %968 = vmatpush.bf16.msra.mxu0 0
    %969 = vmatpush.bf16.msra.mxu0 0
    %970 = vmatpush.bf16.msra.mxu0 %v809
    %971 = vmatpush.bf16.msra.mxu0 %v793
    %972 = vmatmul.bf16.gmra.mxu0 %v850
    %v973 = vpop.f32.mrf.mxu0
    %v974 = vadd.f32 %v665, %v973
    %v975 = vpop.f32.mrf.mxu0
    %v976 = vadd.f32 %v665, %v975
    %977 = vdwg.mxu0
    %978 = vmatpush.bf16.msra.mxu0 0
    %979 = vmatpush.bf16.msra.mxu0 0
    %980 = vmatpush.bf16.msra.mxu0 0
    %981 = vmatpush.bf16.msra.mxu0 0
    %982 = vmatpush.bf16.msra.mxu0 0
    %983 = vmatpush.bf16.msra.mxu0 0
    %984 = vmatpush.bf16.msra.mxu0 %v810
    %985 = vmatpush.bf16.msra.mxu0 %v794
    %986 = vmatmul.bf16.gmra.mxu0 %v850
    %v987 = vpop.f32.mrf.mxu0
    %v988 = vadd.f32 %v666, %v987
    %v989 = vpop.f32.mrf.mxu0
    %v990 = vadd.f32 %v666, %v989
    %991 = vdwg.mxu0
    %992 = vmatpush.bf16.msra.mxu0 0
    %993 = vmatpush.bf16.msra.mxu0 0
    %994 = vmatpush.bf16.msra.mxu0 0
    %995 = vmatpush.bf16.msra.mxu0 0
    %996 = vmatpush.bf16.msra.mxu0 0
    %997 = vmatpush.bf16.msra.mxu0 0
    %998 = vmatpush.bf16.msra.mxu0 %v811
    %999 = vmatpush.bf16.msra.mxu0 %v795
    %1000 = vmatmul.bf16.gmra.mxu0 %v850
    %v1001 = vpop.f32.mrf.mxu0
    %v1002 = vadd.f32 %v667, %v1001
    %v1003 = vpop.f32.mrf.mxu0
    %v1004 = vadd.f32 %v667, %v1003
    %1005 = vdwg.mxu0
    %1006 = vmatpush.bf16.msra.mxu0 0
    %1007 = vmatpush.bf16.msra.mxu0 0
    %1008 = vmatpush.bf16.msra.mxu0 0
    %1009 = vmatpush.bf16.msra.mxu0 0
    %1010 = vmatpush.bf16.msra.mxu0 0
    %1011 = vmatpush.bf16.msra.mxu0 0
    %1012 = vmatpush.bf16.msra.mxu0 %v812
    %1013 = vmatpush.bf16.msra.mxu0 %v796
    %1014 = vmatmul.bf16.gmra.mxu0 %v850
    %v1015 = vpop.f32.mrf.mxu0
    %v1016 = vadd.f32 %v668, %v1015
    %v1017 = vpop.f32.mrf.mxu0
    %v1018 = vadd.f32 %v668, %v1017
    %1019 = vdwg.mxu0
    %1020 = vmatpush.bf16.msra.mxu0 0
    %1021 = vmatpush.bf16.msra.mxu0 0
    %1022 = vmatpush.bf16.msra.mxu0 0
    %1023 = vmatpush.bf16.msra.mxu0 0
    %1024 = vmatpush.bf16.msra.mxu0 0
    %1025 = vmatpush.bf16.msra.mxu0 0
    %1026 = vmatpush.bf16.msra.mxu0 %v813
    %1027 = vmatpush.bf16.msra.mxu0 %v797
    %1028 = vmatmul.bf16.gmra.mxu0 %v850
    %v1029 = vpop.f32.mrf.mxu0
    %v1030 = vadd.f32 %v669, %v1029
    %v1031 = vpop.f32.mrf.mxu0
    %v1032 = vadd.f32 %v669, %v1031
    %1033 = vdwg.mxu0
    %1034 = vmatpush.bf16.msra.mxu0 0
    %1035 = vmatpush.bf16.msra.mxu0 0
    %1036 = vmatpush.bf16.msra.mxu0 0
    %1037 = vmatpush.bf16.msra.mxu0 0
    %1038 = vmatpush.bf16.msra.mxu0 0
    %1039 = vmatpush.bf16.msra.mxu0 0
    %1040 = vmatpush.bf16.msra.mxu0 %v814
    %1041 = vmatpush.bf16.msra.mxu0 %v798
    %1042 = vmatmul.bf16.gmra.mxu0 %v850
    %v1043 = vpop.f32.mrf.mxu0
    %v1044 = vadd.f32 %v670, %v1043
    %v1045 = vpop.f32.mrf.mxu0
    %v1046 = vadd.f32 %v670, %v1045
    %1047 = vdwg.mxu0
    %1048 = vmatpush.bf16.msra.mxu0 0
    %1049 = vmatpush.bf16.msra.mxu0 0
    %1050 = vmatpush.bf16.msra.mxu0 0
    %1051 = vmatpush.bf16.msra.mxu0 0
    %1052 = vmatpush.bf16.msra.mxu0 0
    %1053 = vmatpush.bf16.msra.mxu0 0
    %1054 = vmatpush.bf16.msra.mxu0 %v815
    %1055 = vmatpush.bf16.msra.mxu0 %v799
    %1056 = vmatmul.bf16.gmra.mxu0 %v850
    %v1057 = vpop.f32.mrf.mxu0
    %v1058 = vadd.f32 %v671, %v1057
    %v1059 = vpop.f32.mrf.mxu0
    %v1060 = vadd.f32 %v671, %v1059
    %1061 = vdwg.mxu0
    %1062 = vmatpush.bf16.msra.mxu0 0
    %1063 = vmatpush.bf16.msra.mxu0 0
    %1064 = vmatpush.bf16.msra.mxu0 0
    %1065 = vmatpush.bf16.msra.mxu0 0
    %1066 = vmatpush.bf16.msra.mxu0 0
    %1067 = vmatpush.bf16.msra.mxu0 0
    %1068 = vmatpush.bf16.msra.mxu0 %v816
    %1069 = vmatpush.bf16.msra.mxu0 %v800
    %1070 = vmatmul.bf16.gmra.mxu0 %v850
    %v1071 = vpop.f32.mrf.mxu0
    %v1072 = vadd.f32 %v672, %v1071
    %v1073 = vpop.f32.mrf.mxu0
    %v1074 = vadd.f32 %v672, %v1073
    %1075 = vdwg.mxu0
    %v1076 = vmax.f32 %v862, 0.0
    %v1077 = vmax.f32 %v876, 0.0
    %v1078 = vmax.f32 %v890, 0.0
    %v1079 = vmax.f32 %v904, 0.0
    %v1080 = vmax.f32 %v918, 0.0
    %v1081 = vmax.f32 %v932, 0.0
    %v1082 = vmax.f32 %v946, 0.0
    %v1083 = vmax.f32 %v960, 0.0
    %v1084 = vmax.f32 %v974, 0.0
    %v1085 = vmax.f32 %v988, 0.0
    %v1086 = vmax.f32 %v1002, 0.0
    %v1087 = vmax.f32 %v1016, 0.0
    %v1088 = vmax.f32 %v1030, 0.0
    %v1089 = vmax.f32 %v1044, 0.0
    %v1090 = vmax.f32 %v1058, 0.0
    %v1091 = vmax.f32 %v1072, 0.0
    %v1092 = vmax.f32 %v864, 0.0
    %v1093 = vmax.f32 %v878, 0.0
    %v1094 = vmax.f32 %v892, 0.0
    %v1095 = vmax.f32 %v906, 0.0
    %v1096 = vmax.f32 %v920, 0.0
    %v1097 = vmax.f32 %v934, 0.0
    %v1098 = vmax.f32 %v948, 0.0
    %v1099 = vmax.f32 %v962, 0.0
    %v1100 = vmax.f32 %v976, 0.0
    %v1101 = vmax.f32 %v990, 0.0
    %v1102 = vmax.f32 %v1004, 0.0
    %v1103 = vmax.f32 %v1018, 0.0
    %v1104 = vmax.f32 %v1032, 0.0
    %v1105 = vmax.f32 %v1046, 0.0
    %v1106 = vmax.f32 %v1060, 0.0
    %v1107 = vmax.f32 %v1074, 0.0
    %v1108 = vld [vmem:[%s7] sm:$0xf]
    %v1109 = vld [vmem:[%s7 + $0x4] sm:$0xf]
    %v1110 = vld [vmem:[%s7 + $0x8] sm:$0xf]
    %v1111 = vld [vmem:[%s7 + $0xc] sm:$0xf]
    %v1112 = vld [vmem:[%s7 + $0x10] sm:$0xf]
    %v1113 = vld [vmem:[%s7 + $0x14] sm:$0xf]
    %v1114 = vld [vmem:[%s7 + $0x18] sm:$0xf]
    %v1115 = vld [vmem:[%s7 + $0x1c] sm:$0xf]
    %v1116 = vld [vmem:[%s7 + $0x20] sm:$0xf]
    %v1117 = vld [vmem:[%s7 + $0x24] sm:$0xf]
    %v1118 = vld [vmem:[%s7 + $0x28] sm:$0xf]
    %v1119 = vld [vmem:[%s7 + $0x2c] sm:$0xf]
    %v1120 = vld [vmem:[%s7 + $0x30] sm:$0xf]
    %v1121 = vld [vmem:[%s7 + $0x34] sm:$0xf]
    %v1122 = vld [vmem:[%s7 + $0x38] sm:$0xf]
    %v1123 = vld [vmem:[%s7 + $0x3c] sm:$0xf]
    %v1124 = vld [vmem:[%s7 + $0x40] sm:$0xf]
    %v1125 = vld [vmem:[%s7 + $0x44] sm:$0xf]
    %v1126 = vld [vmem:[%s7 + $0x48] sm:$0xf]
    %v1127 = vld [vmem:[%s7 + $0x4c] sm:$0xf]
    %v1128 = vld [vmem:[%s7 + $0x50] sm:$0xf]
    %v1129 = vld [vmem:[%s7 + $0x54] sm:$0xf]
    %v1130 = vld [vmem:[%s7 + $0x58] sm:$0xf]
    %v1131 = vld [vmem:[%s7 + $0x5c] sm:$0xf]
    %v1132 = vld [vmem:[%s7 + $0x60] sm:$0xf]
    %v1133 = vld [vmem:[%s7 + $0x64] sm:$0xf]
    %v1134 = vld [vmem:[%s7 + $0x68] sm:$0xf]
    %v1135 = vld [vmem:[%s7 + $0x6c] sm:$0xf]
    %v1136 = vld [vmem:[%s7 + $0x70] sm:$0xf]
    %v1137 = vld [vmem:[%s7 + $0x74] sm:$0xf]
    %v1138 = vld [vmem:[%s7 + $0x78] sm:$0xf]
    %v1139 = vld [vmem:[%s7 + $0x7c] sm:$0xf]
    %v1140 = vld [vmem:[%s7 + $0x80] sm:$0xf]
    %v1141 = vld [vmem:[%s7 + $0x84] sm:$0xf]
    %v1142 = vld [vmem:[%s7 + $0x88] sm:$0xf]
    %v1143 = vld [vmem:[%s7 + $0x8c] sm:$0xf]
    %v1144 = vld [vmem:[%s7 + $0x90] sm:$0xf]
    %v1145 = vld [vmem:[%s7 + $0x94] sm:$0xf]
    %v1146 = vld [vmem:[%s7 + $0x98] sm:$0xf]
    %v1147 = vld [vmem:[%s7 + $0x9c] sm:$0xf]
    %v1148 = vld [vmem:[%s7 + $0xa0] sm:$0xf]
    %v1149 = vld [vmem:[%s7 + $0xa4] sm:$0xf]
    %v1150 = vld [vmem:[%s7 + $0xa8] sm:$0xf]
    %v1151 = vld [vmem:[%s7 + $0xac] sm:$0xf]
    %v1152 = vld [vmem:[%s7 + $0xb0] sm:$0xf]
    %v1153 = vld [vmem:[%s7 + $0xb4] sm:$0xf]
    %v1154 = vld [vmem:[%s7 + $0xb8] sm:$0xf]
    %v1155 = vld [vmem:[%s7 + $0xbc] sm:$0xf]
    %v1156 = vld [vmem:[%s7 + $0xc0] sm:$0xf]
    %v1157 = vld [vmem:[%s7 + $0xc4] sm:$0xf]
    %v1158 = vld [vmem:[%s7 + $0xc8] sm:$0xf]
    %v1159 = vld [vmem:[%s7 + $0xcc] sm:$0xf]
    %v1160 = vld [vmem:[%s7 + $0xd0] sm:$0xf]
    %v1161 = vld [vmem:[%s7 + $0xd4] sm:$0xf]
    %v1162 = vld [vmem:[%s7 + $0xd8] sm:$0xf]
    %v1163 = vld [vmem:[%s7 + $0xdc] sm:$0xf]
    %v1164 = vld [vmem:[%s7 + $0xe0] sm:$0xf]
    %v1165 = vld [vmem:[%s7 + $0xe4] sm:$0xf]
    %v1166 = vld [vmem:[%s7 + $0xe8] sm:$0xf]
    %v1167 = vld [vmem:[%s7 + $0xec] sm:$0xf]
    %v1168 = vld [vmem:[%s7 + $0xf0] sm:$0xf]
    %v1169 = vld [vmem:[%s7 + $0xf4] sm:$0xf]
    %v1170 = vld [vmem:[%s7 + $0xf8] sm:$0xf]
    %v1171 = vld [vmem:[%s7 + $0xfc] sm:$0xf]
    %v1172 = vld [vmem:[%s7 + $0x100] sm:$0xf]
    %v1173 = vld [vmem:[%s7 + $0x104] sm:$0xf]
    %v1174 = vld [vmem:[%s7 + $0x108] sm:$0xf]
    %v1175 = vld [vmem:[%s7 + $0x10c] sm:$0xf]
    %v1176 = vld [vmem:[%s7 + $0x110] sm:$0xf]
    %v1177 = vld [vmem:[%s7 + $0x114] sm:$0xf]
    %v1178 = vld [vmem:[%s7 + $0x118] sm:$0xf]
    %v1179 = vld [vmem:[%s7 + $0x11c] sm:$0xf]
    %v1180 = vld [vmem:[%s7 + $0x120] sm:$0xf]
    %v1181 = vld [vmem:[%s7 + $0x124] sm:$0xf]
    %v1182 = vld [vmem:[%s7 + $0x128] sm:$0xf]
    %v1183 = vld [vmem:[%s7 + $0x12c] sm:$0xf]
    %v1184 = vld [vmem:[%s7 + $0x130] sm:$0xf]
    %v1185 = vld [vmem:[%s7 + $0x134] sm:$0xf]
    %v1186 = vld [vmem:[%s7 + $0x138] sm:$0xf]
    %v1187 = vld [vmem:[%s7 + $0x13c] sm:$0xf]
    %v1188 = vld [vmem:[%s7 + $0x140] sm:$0xf]
    %v1189 = vld [vmem:[%s7 + $0x144] sm:$0xf]
    %v1190 = vld [vmem:[%s7 + $0x148] sm:$0xf]
    %v1191 = vld [vmem:[%s7 + $0x14c] sm:$0xf]
    %v1192 = vld [vmem:[%s7 + $0x150] sm:$0xf]
    %v1193 = vld [vmem:[%s7 + $0x154] sm:$0xf]
    %v1194 = vld [vmem:[%s7 + $0x158] sm:$0xf]
    %v1195 = vld [vmem:[%s7 + $0x15c] sm:$0xf]
    %v1196 = vld [vmem:[%s7 + $0x160] sm:$0xf]
    %v1197 = vld [vmem:[%s7 + $0x164] sm:$0xf]
    %v1198 = vld [vmem:[%s7 + $0x168] sm:$0xf]
    %v1199 = vld [vmem:[%s7 + $0x16c] sm:$0xf]
    %v1200 = vld [vmem:[%s7 + $0x170] sm:$0xf]
    %v1201 = vld [vmem:[%s7 + $0x174] sm:$0xf]
    %v1202 = vld [vmem:[%s7 + $0x178] sm:$0xf]
    %v1203 = vld [vmem:[%s7 + $0x17c] sm:$0xf]
    %v1204 = vld [vmem:[%s7 + $0x180] sm:$0xf]
    %v1205 = vld [vmem:[%s7 + $0x184] sm:$0xf]
    %v1206 = vld [vmem:[%s7 + $0x188] sm:$0xf]
    %v1207 = vld [vmem:[%s7 + $0x18c] sm:$0xf]
    %v1208 = vld [vmem:[%s7 + $0x190] sm:$0xf]
    %v1209 = vld [vmem:[%s7 + $0x194] sm:$0xf]
    %v1210 = vld [vmem:[%s7 + $0x198] sm:$0xf]
    %v1211 = vld [vmem:[%s7 + $0x19c] sm:$0xf]
    %v1212 = vld [vmem:[%s7 + $0x1a0] sm:$0xf]
    %v1213 = vld [vmem:[%s7 + $0x1a4] sm:$0xf]
    %v1214 = vld [vmem:[%s7 + $0x1a8] sm:$0xf]
    %v1215 = vld [vmem:[%s7 + $0x1ac] sm:$0xf]
    %v1216 = vld [vmem:[%s7 + $0x1b0] sm:$0xf]
    %v1217 = vld [vmem:[%s7 + $0x1b4] sm:$0xf]
    %v1218 = vld [vmem:[%s7 + $0x1b8] sm:$0xf]
    %v1219 = vld [vmem:[%s7 + $0x1bc] sm:$0xf]
    %v1220 = vld [vmem:[%s7 + $0x1c0] sm:$0xf]
    %v1221 = vld [vmem:[%s7 + $0x1c4] sm:$0xf]
    %v1222 = vld [vmem:[%s7 + $0x1c8] sm:$0xf]
    %v1223 = vld [vmem:[%s7 + $0x1cc] sm:$0xf]
    %v1224 = vld [vmem:[%s7 + $0x1d0] sm:$0xf]
    %v1225 = vld [vmem:[%s7 + $0x1d4] sm:$0xf]
    %v1226 = vld [vmem:[%s7 + $0x1d8] sm:$0xf]
    %v1227 = vld [vmem:[%s7 + $0x1dc] sm:$0xf]
    %v1228 = vld [vmem:[%s7 + $0x1e0] sm:$0xf]
    %v1229 = vld [vmem:[%s7 + $0x1e4] sm:$0xf]
    %v1230 = vld [vmem:[%s7 + $0x1e8] sm:$0xf]
    %v1231 = vld [vmem:[%s7 + $0x1ec] sm:$0xf]
    %v1232 = vld [vmem:[%s7 + $0x1f0] sm:$0xf]
    %v1233 = vld [vmem:[%s7 + $0x1f4] sm:$0xf]
    %v1234 = vld [vmem:[%s7 + $0x1f8] sm:$0xf]
    %v1235 = vld [vmem:[%s7 + $0x1fc] sm:$0xf]
    %v1236 = vld [vmem:[%s7 + $0x200] sm:$0xf]
    %v1237 = vld [vmem:[%s7 + $0x204] sm:$0xf]
    %v1238 = vld [vmem:[%s7 + $0x208] sm:$0xf]
    %v1239 = vld [vmem:[%s7 + $0x20c] sm:$0xf]
    %v1240 = vld [vmem:[%s7 + $0x210] sm:$0xf]
    %v1241 = vld [vmem:[%s7 + $0x214] sm:$0xf]
    %v1242 = vld [vmem:[%s7 + $0x218] sm:$0xf]
    %v1243 = vld [vmem:[%s7 + $0x21c] sm:$0xf]
    %v1244 = vld [vmem:[%s7 + $0x220] sm:$0xf]
    %v1245 = vld [vmem:[%s7 + $0x224] sm:$0xf]
    %v1246 = vld [vmem:[%s7 + $0x228] sm:$0xf]
    %v1247 = vld [vmem:[%s7 + $0x22c] sm:$0xf]
    %v1248 = vld [vmem:[%s7 + $0x230] sm:$0xf]
    %v1249 = vld [vmem:[%s7 + $0x234] sm:$0xf]
    %v1250 = vld [vmem:[%s7 + $0x238] sm:$0xf]
    %v1251 = vld [vmem:[%s7 + $0x23c] sm:$0xf]
    %v1252 = vld [vmem:[%s7 + $0x240] sm:$0xf]
    %v1253 = vld [vmem:[%s7 + $0x244] sm:$0xf]
    %v1254 = vld [vmem:[%s7 + $0x248] sm:$0xf]
    %v1255 = vld [vmem:[%s7 + $0x24c] sm:$0xf]
    %v1256 = vld [vmem:[%s7 + $0x250] sm:$0xf]
    %v1257 = vld [vmem:[%s7 + $0x254] sm:$0xf]
    %v1258 = vld [vmem:[%s7 + $0x258] sm:$0xf]
    %v1259 = vld [vmem:[%s7 + $0x25c] sm:$0xf]
    %v1260 = vld [vmem:[%s7 + $0x260] sm:$0xf]
    %v1261 = vld [vmem:[%s7 + $0x264] sm:$0xf]
    %v1262 = vld [vmem:[%s7 + $0x268] sm:$0xf]
    %v1263 = vld [vmem:[%s7 + $0x26c] sm:$0xf]
    %v1264 = vld [vmem:[%s7 + $0x270] sm:$0xf]
    %v1265 = vld [vmem:[%s7 + $0x274] sm:$0xf]
    %v1266 = vld [vmem:[%s7 + $0x278] sm:$0xf]
    %v1267 = vld [vmem:[%s7 + $0x27c] sm:$0xf]
    %v1268 = vld [vmem:[%s7 + $0x280] sm:$0xf]
    %v1269 = vld [vmem:[%s7 + $0x284] sm:$0xf]
    %v1270 = vld [vmem:[%s7 + $0x288] sm:$0xf]
    %v1271 = vld [vmem:[%s7 + $0x28c] sm:$0xf]
    %v1272 = vld [vmem:[%s7 + $0x290] sm:$0xf]
    %v1273 = vld [vmem:[%s7 + $0x294] sm:$0xf]
    %v1274 = vld [vmem:[%s7 + $0x298] sm:$0xf]
    %v1275 = vld [vmem:[%s7 + $0x29c] sm:$0xf]
    %v1276 = vld [vmem:[%s7 + $0x2a0] sm:$0xf]
    %v1277 = vld [vmem:[%s7 + $0x2a4] sm:$0xf]
    %v1278 = vld [vmem:[%s7 + $0x2a8] sm:$0xf]
    %v1279 = vld [vmem:[%s7 + $0x2ac] sm:$0xf]
    %v1280 = vld [vmem:[%s7 + $0x2b0] sm:$0xf]
    %v1281 = vld [vmem:[%s7 + $0x2b4] sm:$0xf]
    %v1282 = vld [vmem:[%s7 + $0x2b8] sm:$0xf]
    %v1283 = vld [vmem:[%s7 + $0x2bc] sm:$0xf]
    %v1284 = vld [vmem:[%s7 + $0x2c0] sm:$0xf]
    %v1285 = vld [vmem:[%s7 + $0x2c4] sm:$0xf]
    %v1286 = vld [vmem:[%s7 + $0x2c8] sm:$0xf]
    %v1287 = vld [vmem:[%s7 + $0x2cc] sm:$0xf]
    %v1288 = vld [vmem:[%s7 + $0x2d0] sm:$0xf]
    %v1289 = vld [vmem:[%s7 + $0x2d4] sm:$0xf]
    %v1290 = vld [vmem:[%s7 + $0x2d8] sm:$0xf]
    %v1291 = vld [vmem:[%s7 + $0x2dc] sm:$0xf]
    %v1292 = vld [vmem:[%s7 + $0x2e0] sm:$0xf]
    %v1293 = vld [vmem:[%s7 + $0x2e4] sm:$0xf]
    %v1294 = vld [vmem:[%s7 + $0x2e8] sm:$0xf]
    %v1295 = vld [vmem:[%s7 + $0x2ec] sm:$0xf]
    %v1296 = vld [vmem:[%s7 + $0x2f0] sm:$0xf]
    %v1297 = vld [vmem:[%s7 + $0x2f4] sm:$0xf]
    %v1298 = vld [vmem:[%s7 + $0x2f8] sm:$0xf]
    %v1299 = vld [vmem:[%s7 + $0x2fc] sm:$0xf]
    %v1300 = vld [vmem:[%s7 + $0x300] sm:$0xf]
    %v1301 = vld [vmem:[%s7 + $0x304] sm:$0xf]
    %v1302 = vld [vmem:[%s7 + $0x308] sm:$0xf]
    %v1303 = vld [vmem:[%s7 + $0x30c] sm:$0xf]
    %v1304 = vld [vmem:[%s7 + $0x310] sm:$0xf]
    %v1305 = vld [vmem:[%s7 + $0x314] sm:$0xf]
    %v1306 = vld [vmem:[%s7 + $0x318] sm:$0xf]
    %v1307 = vld [vmem:[%s7 + $0x31c] sm:$0xf]
    %v1308 = vld [vmem:[%s7 + $0x320] sm:$0xf]
    %v1309 = vld [vmem:[%s7 + $0x324] sm:$0xf]
    %v1310 = vld [vmem:[%s7 + $0x328] sm:$0xf]
    %v1311 = vld [vmem:[%s7 + $0x32c] sm:$0xf]
    %v1312 = vld [vmem:[%s7 + $0x330] sm:$0xf]
    %v1313 = vld [vmem:[%s7 + $0x334] sm:$0xf]
    %v1314 = vld [vmem:[%s7 + $0x338] sm:$0xf]
    %v1315 = vld [vmem:[%s7 + $0x33c] sm:$0xf]
    %v1316 = vld [vmem:[%s7 + $0x340] sm:$0xf]
    %v1317 = vld [vmem:[%s7 + $0x344] sm:$0xf]
    %v1318 = vld [vmem:[%s7 + $0x348] sm:$0xf]
    %v1319 = vld [vmem:[%s7 + $0x34c] sm:$0xf]
    %v1320 = vld [vmem:[%s7 + $0x350] sm:$0xf]
    %v1321 = vld [vmem:[%s7 + $0x354] sm:$0xf]
    %v1322 = vld [vmem:[%s7 + $0x358] sm:$0xf]
    %v1323 = vld [vmem:[%s7 + $0x35c] sm:$0xf]
    %v1324 = vld [vmem:[%s7 + $0x360] sm:$0xf]
    %v1325 = vld [vmem:[%s7 + $0x364] sm:$0xf]
    %v1326 = vld [vmem:[%s7 + $0x368] sm:$0xf]
    %v1327 = vld [vmem:[%s7 + $0x36c] sm:$0xf]
    %v1328 = vld [vmem:[%s7 + $0x370] sm:$0xf]
    %v1329 = vld [vmem:[%s7 + $0x374] sm:$0xf]
    %v1330 = vld [vmem:[%s7 + $0x378] sm:$0xf]
    %v1331 = vld [vmem:[%s7 + $0x37c] sm:$0xf]
    %v1332 = vld [vmem:[%s7 + $0x380] sm:$0xf]
    %v1333 = vld [vmem:[%s7 + $0x384] sm:$0xf]
    %v1334 = vld [vmem:[%s7 + $0x388] sm:$0xf]
    %v1335 = vld [vmem:[%s7 + $0x38c] sm:$0xf]
    %v1336 = vld [vmem:[%s7 + $0x390] sm:$0xf]
    %v1337 = vld [vmem:[%s7 + $0x394] sm:$0xf]
    %v1338 = vld [vmem:[%s7 + $0x398] sm:$0xf]
    %v1339 = vld [vmem:[%s7 + $0x39c] sm:$0xf]
    %v1340 = vld [vmem:[%s7 + $0x3a0] sm:$0xf]
    %v1341 = vld [vmem:[%s7 + $0x3a4] sm:$0xf]
    %v1342 = vld [vmem:[%s7 + $0x3a8] sm:$0xf]
    %v1343 = vld [vmem:[%s7 + $0x3ac] sm:$0xf]
    %v1344 = vld [vmem:[%s7 + $0x3b0] sm:$0xf]
    %v1345 = vld [vmem:[%s7 + $0x3b4] sm:$0xf]
    %v1346 = vld [vmem:[%s7 + $0x3b8] sm:$0xf]
    %v1347 = vld [vmem:[%s7 + $0x3bc] sm:$0xf]
    %v1348 = vld [vmem:[%s7 + $0x3c0] sm:$0xf]
    %v1349 = vld [vmem:[%s7 + $0x3c4] sm:$0xf]
    %v1350 = vld [vmem:[%s7 + $0x3c8] sm:$0xf]
    %v1351 = vld [vmem:[%s7 + $0x3cc] sm:$0xf]
    %v1352 = vld [vmem:[%s7 + $0x3d0] sm:$0xf]
    %v1353 = vld [vmem:[%s7 + $0x3d4] sm:$0xf]
    %v1354 = vld [vmem:[%s7 + $0x3d8] sm:$0xf]
    %v1355 = vld [vmem:[%s7 + $0x3dc] sm:$0xf]
    %v1356 = vld [vmem:[%s7 + $0x3e0] sm:$0xf]
    %v1357 = vld [vmem:[%s7 + $0x3e4] sm:$0xf]
    %v1358 = vld [vmem:[%s7 + $0x3e8] sm:$0xf]
    %v1359 = vld [vmem:[%s7 + $0x3ec] sm:$0xf]
    %v1360 = vld [vmem:[%s7 + $0x3f0] sm:$0xf]
    %v1361 = vld [vmem:[%s7 + $0x3f4] sm:$0xf]
    %v1362 = vld [vmem:[%s7 + $0x3f8] sm:$0xf]
    %v1363 = vld [vmem:[%s7 + $0x3fc] sm:$0xf]
    %v1364 = vpack.c.bf16 %v1092, %v1076
    %v1365 = vpack.c.bf16 %v1093, %v1077
    %v1366 = vpack.c.bf16 %v1094, %v1078
    %v1367 = vpack.c.bf16 %v1095, %v1079
    %v1368 = vpack.c.bf16 %v1096, %v1080
    %v1369 = vpack.c.bf16 %v1097, %v1081
    %v1370 = vpack.c.bf16 %v1098, %v1082
    %v1371 = vpack.c.bf16 %v1099, %v1083
    %v1372 = vpack.c.bf16 %v1100, %v1084
    %v1373 = vpack.c.bf16 %v1101, %v1085
    %v1374 = vpack.c.bf16 %v1102, %v1086
    %v1375 = vpack.c.bf16 %v1103, %v1087
    %v1376 = vpack.c.bf16 %v1104, %v1088
    %v1377 = vpack.c.bf16 %v1105, %v1089
    %v1378 = vpack.c.bf16 %v1106, %v1090
    %v1379 = vpack.c.bf16 %v1107, %v1091
    %v1380 = vld [vmem:[%s8] sm:$0x1]
    %v1382 = vperm.slane %v1380, 0
    %v1640 = vunpack.c.l.b16 %v1108
    %v1641 = vunpack.c.l.b16 %v1109
    %v1642 = vunpack.c.l.b16 %v1110
    %v1643 = vunpack.c.l.b16 %v1111
    %v1644 = vunpack.c.l.b16 %v1112
    %v1645 = vunpack.c.l.b16 %v1113
    %v1646 = vunpack.c.l.b16 %v1114
    %v1647 = vunpack.c.l.b16 %v1115
    %v1648 = vunpack.c.l.b16 %v1116
    %v1649 = vunpack.c.l.b16 %v1117
    %v1650 = vunpack.c.l.b16 %v1118
    %v1651 = vunpack.c.l.b16 %v1119
    %v1652 = vunpack.c.l.b16 %v1120
    %v1653 = vunpack.c.l.b16 %v1121
    %v1654 = vunpack.c.l.b16 %v1122
    %v1655 = vunpack.c.l.b16 %v1123
    %v1656 = vunpack.c.l.b16 %v1124
    %v1657 = vunpack.c.l.b16 %v1125
    %v1658 = vunpack.c.l.b16 %v1126
    %v1659 = vunpack.c.l.b16 %v1127
    %v1660 = vunpack.c.l.b16 %v1128
    %v1661 = vunpack.c.l.b16 %v1129
    %v1662 = vunpack.c.l.b16 %v1130
    %v1663 = vunpack.c.l.b16 %v1131
    %v1664 = vunpack.c.l.b16 %v1132
    %v1665 = vunpack.c.l.b16 %v1133
    %v1666 = vunpack.c.l.b16 %v1134
    %v1667 = vunpack.c.l.b16 %v1135
    %v1668 = vunpack.c.l.b16 %v1136
    %v1669 = vunpack.c.l.b16 %v1137
    %v1670 = vunpack.c.l.b16 %v1138
    %v1671 = vunpack.c.l.b16 %v1139
    %v1672 = vunpack.c.l.b16 %v1140
    %v1673 = vunpack.c.l.b16 %v1141
    %v1674 = vunpack.c.l.b16 %v1142
    %v1675 = vunpack.c.l.b16 %v1143
    %v1676 = vunpack.c.l.b16 %v1144
    %v1677 = vunpack.c.l.b16 %v1145
    %v1678 = vunpack.c.l.b16 %v1146
    %v1679 = vunpack.c.l.b16 %v1147
    %v1680 = vunpack.c.l.b16 %v1148
    %v1681 = vunpack.c.l.b16 %v1149
    %v1682 = vunpack.c.l.b16 %v1150
    %v1683 = vunpack.c.l.b16 %v1151
    %v1684 = vunpack.c.l.b16 %v1152
    %v1685 = vunpack.c.l.b16 %v1153
    %v1686 = vunpack.c.l.b16 %v1154
    %v1687 = vunpack.c.l.b16 %v1155
    %v1688 = vunpack.c.l.b16 %v1156
    %v1689 = vunpack.c.l.b16 %v1157
    %v1690 = vunpack.c.l.b16 %v1158
    %v1691 = vunpack.c.l.b16 %v1159
    %v1692 = vunpack.c.l.b16 %v1160
    %v1693 = vunpack.c.l.b16 %v1161
    %v1694 = vunpack.c.l.b16 %v1162
    %v1695 = vunpack.c.l.b16 %v1163
    %v1696 = vunpack.c.l.b16 %v1164
    %v1697 = vunpack.c.l.b16 %v1165
    %v1698 = vunpack.c.l.b16 %v1166
    %v1699 = vunpack.c.l.b16 %v1167
    %v1700 = vunpack.c.l.b16 %v1168
    %v1701 = vunpack.c.l.b16 %v1169
    %v1702 = vunpack.c.l.b16 %v1170
    %v1703 = vunpack.c.l.b16 %v1171
    %v1704 = vunpack.c.l.b16 %v1172
    %v1705 = vunpack.c.l.b16 %v1173
    %v1706 = vunpack.c.l.b16 %v1174
    %v1707 = vunpack.c.l.b16 %v1175
    %v1708 = vunpack.c.l.b16 %v1176
    %v1709 = vunpack.c.l.b16 %v1177
    %v1710 = vunpack.c.l.b16 %v1178
    %v1711 = vunpack.c.l.b16 %v1179
    %v1712 = vunpack.c.l.b16 %v1180
    %v1713 = vunpack.c.l.b16 %v1181
    %v1714 = vunpack.c.l.b16 %v1182
    %v1715 = vunpack.c.l.b16 %v1183
    %v1716 = vunpack.c.l.b16 %v1184
    %v1717 = vunpack.c.l.b16 %v1185
    %v1718 = vunpack.c.l.b16 %v1186
    %v1719 = vunpack.c.l.b16 %v1187
    %v1720 = vunpack.c.l.b16 %v1188
    %v1721 = vunpack.c.l.b16 %v1189
    %v1722 = vunpack.c.l.b16 %v1190
    %v1723 = vunpack.c.l.b16 %v1191
    %v1724 = vunpack.c.l.b16 %v1192
    %v1725 = vunpack.c.l.b16 %v1193
    %v1726 = vunpack.c.l.b16 %v1194
    %v1727 = vunpack.c.l.b16 %v1195
    %v1728 = vunpack.c.l.b16 %v1196
    %v1729 = vunpack.c.l.b16 %v1197
    %v1730 = vunpack.c.l.b16 %v1198
    %v1731 = vunpack.c.l.b16 %v1199
    %v1732 = vunpack.c.l.b16 %v1200
    %v1733 = vunpack.c.l.b16 %v1201
    %v1734 = vunpack.c.l.b16 %v1202
    %v1735 = vunpack.c.l.b16 %v1203
    %v1736 = vunpack.c.l.b16 %v1204
    %v1737 = vunpack.c.l.b16 %v1205
    %v1738 = vunpack.c.l.b16 %v1206
    %v1739 = vunpack.c.l.b16 %v1207
    %v1740 = vunpack.c.l.b16 %v1208
    %v1741 = vunpack.c.l.b16 %v1209
    %v1742 = vunpack.c.l.b16 %v1210
    %v1743 = vunpack.c.l.b16 %v1211
    %v1744 = vunpack.c.l.b16 %v1212
    %v1745 = vunpack.c.l.b16 %v1213
    %v1746 = vunpack.c.l.b16 %v1214
    %v1747 = vunpack.c.l.b16 %v1215
    %v1748 = vunpack.c.l.b16 %v1216
    %v1749 = vunpack.c.l.b16 %v1217
    %v1750 = vunpack.c.l.b16 %v1218
    %v1751 = vunpack.c.l.b16 %v1219
    %v1752 = vunpack.c.l.b16 %v1220
    %v1753 = vunpack.c.l.b16 %v1221
    %v1754 = vunpack.c.l.b16 %v1222
    %v1755 = vunpack.c.l.b16 %v1223
    %v1756 = vunpack.c.l.b16 %v1224
    %v1757 = vunpack.c.l.b16 %v1225
    %v1758 = vunpack.c.l.b16 %v1226
    %v1759 = vunpack.c.l.b16 %v1227
    %v1760 = vunpack.c.l.b16 %v1228
    %v1761 = vunpack.c.l.b16 %v1229
    %v1762 = vunpack.c.l.b16 %v1230
    %v1763 = vunpack.c.l.b16 %v1231
    %v1764 = vunpack.c.l.b16 %v1232
    %v1765 = vunpack.c.l.b16 %v1233
    %v1766 = vunpack.c.l.b16 %v1234
    %v1767 = vunpack.c.l.b16 %v1235
    %v1768 = vunpack.c.l.b16 %v1236
    %v1769 = vunpack.c.l.b16 %v1237
    %v1770 = vunpack.c.l.b16 %v1238
    %v1771 = vunpack.c.l.b16 %v1239
    %v1772 = vunpack.c.l.b16 %v1240
    %v1773 = vunpack.c.l.b16 %v1241
    %v1774 = vunpack.c.l.b16 %v1242
    %v1775 = vunpack.c.l.b16 %v1243
    %v1776 = vunpack.c.l.b16 %v1244
    %v1777 = vunpack.c.l.b16 %v1245
    %v1778 = vunpack.c.l.b16 %v1246
    %v1779 = vunpack.c.l.b16 %v1247
    %v1780 = vunpack.c.l.b16 %v1248
    %v1781 = vunpack.c.l.b16 %v1249
    %v1782 = vunpack.c.l.b16 %v1250
    %v1783 = vunpack.c.l.b16 %v1251
    %v1784 = vunpack.c.l.b16 %v1252
    %v1785 = vunpack.c.l.b16 %v1253
    %v1786 = vunpack.c.l.b16 %v1254
    %v1787 = vunpack.c.l.b16 %v1255
    %v1788 = vunpack.c.l.b16 %v1256
    %v1789 = vunpack.c.l.b16 %v1257
    %v1790 = vunpack.c.l.b16 %v1258
    %v1791 = vunpack.c.l.b16 %v1259
    %v1792 = vunpack.c.l.b16 %v1260
    %v1793 = vunpack.c.l.b16 %v1261
    %v1794 = vunpack.c.l.b16 %v1262
    %v1795 = vunpack.c.l.b16 %v1263
    %v1796 = vunpack.c.l.b16 %v1264
    %v1797 = vunpack.c.l.b16 %v1265
    %v1798 = vunpack.c.l.b16 %v1266
    %v1799 = vunpack.c.l.b16 %v1267
    %v1800 = vunpack.c.l.b16 %v1268
    %v1801 = vunpack.c.l.b16 %v1269
    %v1802 = vunpack.c.l.b16 %v1270
    %v1803 = vunpack.c.l.b16 %v1271
    %v1804 = vunpack.c.l.b16 %v1272
    %v1805 = vunpack.c.l.b16 %v1273
    %v1806 = vunpack.c.l.b16 %v1274
    %v1807 = vunpack.c.l.b16 %v1275
    %v1808 = vunpack.c.l.b16 %v1276
    %v1809 = vunpack.c.l.b16 %v1277
    %v1810 = vunpack.c.l.b16 %v1278
    %v1811 = vunpack.c.l.b16 %v1279
    %v1812 = vunpack.c.l.b16 %v1280
    %v1813 = vunpack.c.l.b16 %v1281
    %v1814 = vunpack.c.l.b16 %v1282
    %v1815 = vunpack.c.l.b16 %v1283
    %v1816 = vunpack.c.l.b16 %v1284
    %v1817 = vunpack.c.l.b16 %v1285
    %v1818 = vunpack.c.l.b16 %v1286
    %v1819 = vunpack.c.l.b16 %v1287
    %v1820 = vunpack.c.l.b16 %v1288
    %v1821 = vunpack.c.l.b16 %v1289
    %v1822 = vunpack.c.l.b16 %v1290
    %v1823 = vunpack.c.l.b16 %v1291
    %v1824 = vunpack.c.l.b16 %v1292
    %v1825 = vunpack.c.l.b16 %v1293
    %v1826 = vunpack.c.l.b16 %v1294
    %v1827 = vunpack.c.l.b16 %v1295
    %v1828 = vunpack.c.l.b16 %v1296
    %v1829 = vunpack.c.l.b16 %v1297
    %v1830 = vunpack.c.l.b16 %v1298
    %v1831 = vunpack.c.l.b16 %v1299
    %v1832 = vunpack.c.l.b16 %v1300
    %v1833 = vunpack.c.l.b16 %v1301
    %v1834 = vunpack.c.l.b16 %v1302
    %v1835 = vunpack.c.l.b16 %v1303
    %v1836 = vunpack.c.l.b16 %v1304
    %v1837 = vunpack.c.l.b16 %v1305
    %v1838 = vunpack.c.l.b16 %v1306
    %v1839 = vunpack.c.l.b16 %v1307
    %v1840 = vunpack.c.l.b16 %v1308
    %v1841 = vunpack.c.l.b16 %v1309
    %v1842 = vunpack.c.l.b16 %v1310
    %v1843 = vunpack.c.l.b16 %v1311
    %v1844 = vunpack.c.l.b16 %v1312
    %v1845 = vunpack.c.l.b16 %v1313
    %v1846 = vunpack.c.l.b16 %v1314
    %v1847 = vunpack.c.l.b16 %v1315
    %v1848 = vunpack.c.l.b16 %v1316
    %v1849 = vunpack.c.l.b16 %v1317
    %v1850 = vunpack.c.l.b16 %v1318
    %v1851 = vunpack.c.l.b16 %v1319
    %v1852 = vunpack.c.l.b16 %v1320
    %v1853 = vunpack.c.l.b16 %v1321
    %v1854 = vunpack.c.l.b16 %v1322
    %v1855 = vunpack.c.l.b16 %v1323
    %v1856 = vunpack.c.l.b16 %v1324
    %v1857 = vunpack.c.l.b16 %v1325
    %v1858 = vunpack.c.l.b16 %v1326
    %v1859 = vunpack.c.l.b16 %v1327
    %v1860 = vunpack.c.l.b16 %v1328
    %v1861 = vunpack.c.l.b16 %v1329
    %v1862 = vunpack.c.l.b16 %v1330
    %v1863 = vunpack.c.l.b16 %v1331
    %v1864 = vunpack.c.l.b16 %v1332
    %v1865 = vunpack.c.l.b16 %v1333
    %v1866 = vunpack.c.l.b16 %v1334
    %v1867 = vunpack.c.l.b16 %v1335
    %v1868 = vunpack.c.l.b16 %v1336
    %v1869 = vunpack.c.l.b16 %v1337
    %v1870 = vunpack.c.l.b16 %v1338
    %v1871 = vunpack.c.l.b16 %v1339
    %v1872 = vunpack.c.l.b16 %v1340
    %v1873 = vunpack.c.l.b16 %v1341
    %v1874 = vunpack.c.l.b16 %v1342
    %v1875 = vunpack.c.l.b16 %v1343
    %v1876 = vunpack.c.l.b16 %v1344
    %v1877 = vunpack.c.l.b16 %v1345
    %v1878 = vunpack.c.l.b16 %v1346
    %v1879 = vunpack.c.l.b16 %v1347
    %v1880 = vunpack.c.l.b16 %v1348
    %v1881 = vunpack.c.l.b16 %v1349
    %v1882 = vunpack.c.l.b16 %v1350
    %v1883 = vunpack.c.l.b16 %v1351
    %v1884 = vunpack.c.l.b16 %v1352
    %v1885 = vunpack.c.l.b16 %v1353
    %v1886 = vunpack.c.l.b16 %v1354
    %v1887 = vunpack.c.l.b16 %v1355
    %v1888 = vunpack.c.l.b16 %v1356
    %v1889 = vunpack.c.l.b16 %v1357
    %v1890 = vunpack.c.l.b16 %v1358
    %v1891 = vunpack.c.l.b16 %v1359
    %v1892 = vunpack.c.l.b16 %v1360
    %v1893 = vunpack.c.l.b16 %v1361
    %v1894 = vunpack.c.l.b16 %v1362
    %v1895 = vunpack.c.l.b16 %v1363
    %v1896 = vpack.c.b16 %v1641, %v1640
    %v1897 = vpack.c.b16 %v1643, %v1642
    %v1898 = vpack.c.b16 %v1645, %v1644
    %v1899 = vpack.c.b16 %v1647, %v1646
    %v1900 = vpack.c.b16 %v1649, %v1648
    %v1901 = vpack.c.b16 %v1651, %v1650
    %v1902 = vpack.c.b16 %v1653, %v1652
    %v1903 = vpack.c.b16 %v1655, %v1654
    %v1904 = vpack.c.b16 %v1657, %v1656
    %v1905 = vpack.c.b16 %v1659, %v1658
    %v1906 = vpack.c.b16 %v1661, %v1660
    %v1907 = vpack.c.b16 %v1663, %v1662
    %v1908 = vpack.c.b16 %v1665, %v1664
    %v1909 = vpack.c.b16 %v1667, %v1666
    %v1910 = vpack.c.b16 %v1669, %v1668
    %v1911 = vpack.c.b16 %v1671, %v1670
    %v1912 = vpack.c.b16 %v1673, %v1672
    %v1913 = vpack.c.b16 %v1675, %v1674
    %v1914 = vpack.c.b16 %v1677, %v1676
    %v1915 = vpack.c.b16 %v1679, %v1678
    %v1916 = vpack.c.b16 %v1681, %v1680
    %v1917 = vpack.c.b16 %v1683, %v1682
    %v1918 = vpack.c.b16 %v1685, %v1684
    %v1919 = vpack.c.b16 %v1687, %v1686
    %v1920 = vpack.c.b16 %v1689, %v1688
    %v1921 = vpack.c.b16 %v1691, %v1690
    %v1922 = vpack.c.b16 %v1693, %v1692
    %v1923 = vpack.c.b16 %v1695, %v1694
    %v1924 = vpack.c.b16 %v1697, %v1696
    %v1925 = vpack.c.b16 %v1699, %v1698
    %v1926 = vpack.c.b16 %v1701, %v1700
    %v1927 = vpack.c.b16 %v1703, %v1702
    %v1928 = vpack.c.b16 %v1705, %v1704
    %v1929 = vpack.c.b16 %v1707, %v1706
    %v1930 = vpack.c.b16 %v1709, %v1708
    %v1931 = vpack.c.b16 %v1711, %v1710
    %v1932 = vpack.c.b16 %v1713, %v1712
    %v1933 = vpack.c.b16 %v1715, %v1714
    %v1934 = vpack.c.b16 %v1717, %v1716
    %v1935 = vpack.c.b16 %v1719, %v1718
    %v1936 = vpack.c.b16 %v1721, %v1720
    %v1937 = vpack.c.b16 %v1723, %v1722
    %v1938 = vpack.c.b16 %v1725, %v1724
    %v1939 = vpack.c.b16 %v1727, %v1726
    %v1940 = vpack.c.b16 %v1729, %v1728
    %v1941 = vpack.c.b16 %v1731, %v1730
    %v1942 = vpack.c.b16 %v1733, %v1732
    %v1943 = vpack.c.b16 %v1735, %v1734
    %v1944 = vpack.c.b16 %v1737, %v1736
    %v1945 = vpack.c.b16 %v1739, %v1738
    %v1946 = vpack.c.b16 %v1741, %v1740
    %v1947 = vpack.c.b16 %v1743, %v1742
    %v1948 = vpack.c.b16 %v1745, %v1744
    %v1949 = vpack.c.b16 %v1747, %v1746
    %v1950 = vpack.c.b16 %v1749, %v1748
    %v1951 = vpack.c.b16 %v1751, %v1750
    %v1952 = vpack.c.b16 %v1753, %v1752
    %v1953 = vpack.c.b16 %v1755, %v1754
    %v1954 = vpack.c.b16 %v1757, %v1756
    %v1955 = vpack.c.b16 %v1759, %v1758
    %v1956 = vpack.c.b16 %v1761, %v1760
    %v1957 = vpack.c.b16 %v1763, %v1762
    %v1958 = vpack.c.b16 %v1765, %v1764
    %v1959 = vpack.c.b16 %v1767, %v1766
    %v1960 = vpack.c.b16 %v1769, %v1768
    %v1961 = vpack.c.b16 %v1771, %v1770
    %v1962 = vpack.c.b16 %v1773, %v1772
    %v1963 = vpack.c.b16 %v1775, %v1774
    %v1964 = vpack.c.b16 %v1777, %v1776
    %v1965 = vpack.c.b16 %v1779, %v1778
    %v1966 = vpack.c.b16 %v1781, %v1780
    %v1967 = vpack.c.b16 %v1783, %v1782
    %v1968 = vpack.c.b16 %v1785, %v1784
    %v1969 = vpack.c.b16 %v1787, %v1786
    %v1970 = vpack.c.b16 %v1789, %v1788
    %v1971 = vpack.c.b16 %v1791, %v1790
    %v1972 = vpack.c.b16 %v1793, %v1792
    %v1973 = vpack.c.b16 %v1795, %v1794
    %v1974 = vpack.c.b16 %v1797, %v1796
    %v1975 = vpack.c.b16 %v1799, %v1798
    %v1976 = vpack.c.b16 %v1801, %v1800
    %v1977 = vpack.c.b16 %v1803, %v1802
    %v1978 = vpack.c.b16 %v1805, %v1804
    %v1979 = vpack.c.b16 %v1807, %v1806
    %v1980 = vpack.c.b16 %v1809, %v1808
    %v1981 = vpack.c.b16 %v1811, %v1810
    %v1982 = vpack.c.b16 %v1813, %v1812
    %v1983 = vpack.c.b16 %v1815, %v1814
    %v1984 = vpack.c.b16 %v1817, %v1816
    %v1985 = vpack.c.b16 %v1819, %v1818
    %v1986 = vpack.c.b16 %v1821, %v1820
    %v1987 = vpack.c.b16 %v1823, %v1822
    %v1988 = vpack.c.b16 %v1825, %v1824
    %v1989 = vpack.c.b16 %v1827, %v1826
    %v1990 = vpack.c.b16 %v1829, %v1828
    %v1991 = vpack.c.b16 %v1831, %v1830
    %v1992 = vpack.c.b16 %v1833, %v1832
    %v1993 = vpack.c.b16 %v1835, %v1834
    %v1994 = vpack.c.b16 %v1837, %v1836
    %v1995 = vpack.c.b16 %v1839, %v1838
    %v1996 = vpack.c.b16 %v1841, %v1840
    %v1997 = vpack.c.b16 %v1843, %v1842
    %v1998 = vpack.c.b16 %v1845, %v1844
    %v1999 = vpack.c.b16 %v1847, %v1846
    %v2000 = vpack.c.b16 %v1849, %v1848
    %v2001 = vpack.c.b16 %v1851, %v1850
    %v2002 = vpack.c.b16 %v1853, %v1852
    %v2003 = vpack.c.b16 %v1855, %v1854
    %v2004 = vpack.c.b16 %v1857, %v1856
    %v2005 = vpack.c.b16 %v1859, %v1858
    %v2006 = vpack.c.b16 %v1861, %v1860
    %v2007 = vpack.c.b16 %v1863, %v1862
    %v2008 = vpack.c.b16 %v1865, %v1864
    %v2009 = vpack.c.b16 %v1867, %v1866
    %v2010 = vpack.c.b16 %v1869, %v1868
    %v2011 = vpack.c.b16 %v1871, %v1870
    %v2012 = vpack.c.b16 %v1873, %v1872
    %v2013 = vpack.c.b16 %v1875, %v1874
    %v2014 = vpack.c.b16 %v1877, %v1876
    %v2015 = vpack.c.b16 %v1879, %v1878
    %v2016 = vpack.c.b16 %v1881, %v1880
    %v2017 = vpack.c.b16 %v1883, %v1882
    %v2018 = vpack.c.b16 %v1885, %v1884
    %v2019 = vpack.c.b16 %v1887, %v1886
    %v2020 = vpack.c.b16 %v1889, %v1888
    %v2021 = vpack.c.b16 %v1891, %v1890
    %v2022 = vpack.c.b16 %v1893, %v1892
    %v2023 = vpack.c.b16 %v1895, %v1894
    %2152 = vmatpush.bf16.msra.mxu0 %v1903
    %2153 = vmatpush.bf16.msra.mxu0 %v1902
    %2154 = vmatpush.bf16.msra.mxu0 %v1901
    %2155 = vmatpush.bf16.msra.mxu0 %v1900
    %2156 = vmatpush.bf16.msra.mxu0 %v1899
    %2157 = vmatpush.bf16.msra.mxu0 %v1898
    %2158 = vmatpush.bf16.msra.mxu0 %v1897
    %2159 = vmatpush.bf16.msra.mxu0 %v1896
    %2160 = vmatmul.bf16.gmra.mxu0 %v1364
    %v2161 = vpop.f32.mrf.mxu0
    %v2162 = vadd.f32 %v1382, %v2161
    %v2163 = vpop.f32.mrf.mxu0
    %v2164 = vadd.f32 %v1382, %v2163
    %2165 = vdwg.mxu0
    %2166 = vmatpush.bf16.msra.mxu0 %v1911
    %2167 = vmatpush.bf16.msra.mxu0 %v1910
    %2168 = vmatpush.bf16.msra.mxu0 %v1909
    %2169 = vmatpush.bf16.msra.mxu0 %v1908
    %2170 = vmatpush.bf16.msra.mxu0 %v1907
    %2171 = vmatpush.bf16.msra.mxu0 %v1906
    %2172 = vmatpush.bf16.msra.mxu0 %v1905
    %2173 = vmatpush.bf16.msra.mxu0 %v1904
    %2174 = vmatmul.bf16.gmra.mxu0 %v1365
    %v2175 = vpop.f32.mrf.mxu0
    %v2176 = vadd.f32 %v2162, %v2175
    %v2177 = vpop.f32.mrf.mxu0
    %v2178 = vadd.f32 %v2164, %v2177
    %2179 = vdwg.mxu0
    %2180 = vmatpush.bf16.msra.mxu0 %v1919
    %2181 = vmatpush.bf16.msra.mxu0 %v1918
    %2182 = vmatpush.bf16.msra.mxu0 %v1917
    %2183 = vmatpush.bf16.msra.mxu0 %v1916
    %2184 = vmatpush.bf16.msra.mxu0 %v1915
    %2185 = vmatpush.bf16.msra.mxu0 %v1914
    %2186 = vmatpush.bf16.msra.mxu0 %v1913
    %2187 = vmatpush.bf16.msra.mxu0 %v1912
    %2188 = vmatmul.bf16.gmra.mxu0 %v1366
    %v2189 = vpop.f32.mrf.mxu0
    %v2190 = vadd.f32 %v2176, %v2189
    %v2191 = vpop.f32.mrf.mxu0
    %v2192 = vadd.f32 %v2178, %v2191
    %2193 = vdwg.mxu0
    %2194 = vmatpush.bf16.msra.mxu0 %v1927
    %2195 = vmatpush.bf16.msra.mxu0 %v1926
    %2196 = vmatpush.bf16.msra.mxu0 %v1925
    %2197 = vmatpush.bf16.msra.mxu0 %v1924
    %2198 = vmatpush.bf16.msra.mxu0 %v1923
    %2199 = vmatpush.bf16.msra.mxu0 %v1922
    %2200 = vmatpush.bf16.msra.mxu0 %v1921
    %2201 = vmatpush.bf16.msra.mxu0 %v1920
    %2202 = vmatmul.bf16.gmra.mxu0 %v1367
    %v2203 = vpop.f32.mrf.mxu0
    %v2204 = vadd.f32 %v2190, %v2203
    %v2205 = vpop.f32.mrf.mxu0
    %v2206 = vadd.f32 %v2192, %v2205
    %2207 = vdwg.mxu0
    %2208 = vmatpush.bf16.msra.mxu0 %v1935
    %2209 = vmatpush.bf16.msra.mxu0 %v1934
    %2210 = vmatpush.bf16.msra.mxu0 %v1933
    %2211 = vmatpush.bf16.msra.mxu0 %v1932
    %2212 = vmatpush.bf16.msra.mxu0 %v1931
    %2213 = vmatpush.bf16.msra.mxu0 %v1930
    %2214 = vmatpush.bf16.msra.mxu0 %v1929
    %2215 = vmatpush.bf16.msra.mxu0 %v1928
    %2216 = vmatmul.bf16.gmra.mxu0 %v1368
    %v2217 = vpop.f32.mrf.mxu0
    %v2218 = vadd.f32 %v2204, %v2217
    %v2219 = vpop.f32.mrf.mxu0
    %v2220 = vadd.f32 %v2206, %v2219
    %2221 = vdwg.mxu0
    %2222 = vmatpush.bf16.msra.mxu0 %v1943
    %2223 = vmatpush.bf16.msra.mxu0 %v1942
    %2224 = vmatpush.bf16.msra.mxu0 %v1941
    %2225 = vmatpush.bf16.msra.mxu0 %v1940
    %2226 = vmatpush.bf16.msra.mxu0 %v1939
    %2227 = vmatpush.bf16.msra.mxu0 %v1938
    %2228 = vmatpush.bf16.msra.mxu0 %v1937
    %2229 = vmatpush.bf16.msra.mxu0 %v1936
    %2230 = vmatmul.bf16.gmra.mxu0 %v1369
    %v2231 = vpop.f32.mrf.mxu0
    %v2232 = vadd.f32 %v2218, %v2231
    %v2233 = vpop.f32.mrf.mxu0
    %v2234 = vadd.f32 %v2220, %v2233
    %2235 = vdwg.mxu0
    %2236 = vmatpush.bf16.msra.mxu0 %v1951
    %2237 = vmatpush.bf16.msra.mxu0 %v1950
    %2238 = vmatpush.bf16.msra.mxu0 %v1949
    %2239 = vmatpush.bf16.msra.mxu0 %v1948
    %2240 = vmatpush.bf16.msra.mxu0 %v1947
    %2241 = vmatpush.bf16.msra.mxu0 %v1946
    %2242 = vmatpush.bf16.msra.mxu0 %v1945
    %2243 = vmatpush.bf16.msra.mxu0 %v1944
    %2244 = vmatmul.bf16.gmra.mxu0 %v1370
    %v2245 = vpop.f32.mrf.mxu0
    %v2246 = vadd.f32 %v2232, %v2245
    %v2247 = vpop.f32.mrf.mxu0
    %v2248 = vadd.f32 %v2234, %v2247
    %2249 = vdwg.mxu0
    %2250 = vmatpush.bf16.msra.mxu0 %v1959
    %2251 = vmatpush.bf16.msra.mxu0 %v1958
    %2252 = vmatpush.bf16.msra.mxu0 %v1957
    %2253 = vmatpush.bf16.msra.mxu0 %v1956
    %2254 = vmatpush.bf16.msra.mxu0 %v1955
    %2255 = vmatpush.bf16.msra.mxu0 %v1954
    %2256 = vmatpush.bf16.msra.mxu0 %v1953
    %2257 = vmatpush.bf16.msra.mxu0 %v1952
    %2258 = vmatmul.bf16.gmra.mxu0 %v1371
    %v2259 = vpop.f32.mrf.mxu0
    %v2260 = vadd.f32 %v2246, %v2259
    %v2261 = vpop.f32.mrf.mxu0
    %v2262 = vadd.f32 %v2248, %v2261
    %2263 = vdwg.mxu0
    %2264 = vmatpush.bf16.msra.mxu0 %v1967
    %2265 = vmatpush.bf16.msra.mxu0 %v1966
    %2266 = vmatpush.bf16.msra.mxu0 %v1965
    %2267 = vmatpush.bf16.msra.mxu0 %v1964
    %2268 = vmatpush.bf16.msra.mxu0 %v1963
    %2269 = vmatpush.bf16.msra.mxu0 %v1962
    %2270 = vmatpush.bf16.msra.mxu0 %v1961
    %2271 = vmatpush.bf16.msra.mxu0 %v1960
    %2272 = vmatmul.bf16.gmra.mxu0 %v1372
    %v2273 = vpop.f32.mrf.mxu0
    %v2274 = vadd.f32 %v2260, %v2273
    %v2275 = vpop.f32.mrf.mxu0
    %v2276 = vadd.f32 %v2262, %v2275
    %2277 = vdwg.mxu0
    %2278 = vmatpush.bf16.msra.mxu0 %v1975
    %2279 = vmatpush.bf16.msra.mxu0 %v1974
    %2280 = vmatpush.bf16.msra.mxu0 %v1973
    %2281 = vmatpush.bf16.msra.mxu0 %v1972
    %2282 = vmatpush.bf16.msra.mxu0 %v1971
    %2283 = vmatpush.bf16.msra.mxu0 %v1970
    %2284 = vmatpush.bf16.msra.mxu0 %v1969
    %2285 = vmatpush.bf16.msra.mxu0 %v1968
    %2286 = vmatmul.bf16.gmra.mxu0 %v1373
    %v2287 = vpop.f32.mrf.mxu0
    %v2288 = vadd.f32 %v2274, %v2287
    %v2289 = vpop.f32.mrf.mxu0
    %v2290 = vadd.f32 %v2276, %v2289
    %2291 = vdwg.mxu0
    %2292 = vmatpush.bf16.msra.mxu0 %v1983
    %2293 = vmatpush.bf16.msra.mxu0 %v1982
    %2294 = vmatpush.bf16.msra.mxu0 %v1981
    %2295 = vmatpush.bf16.msra.mxu0 %v1980
    %2296 = vmatpush.bf16.msra.mxu0 %v1979
    %2297 = vmatpush.bf16.msra.mxu0 %v1978
    %2298 = vmatpush.bf16.msra.mxu0 %v1977
    %2299 = vmatpush.bf16.msra.mxu0 %v1976
    %2300 = vmatmul.bf16.gmra.mxu0 %v1374
    %v2301 = vpop.f32.mrf.mxu0
    %v2302 = vadd.f32 %v2288, %v2301
    %v2303 = vpop.f32.mrf.mxu0
    %v2304 = vadd.f32 %v2290, %v2303
    %2305 = vdwg.mxu0
    %2306 = vmatpush.bf16.msra.mxu0 %v1991
    %2307 = vmatpush.bf16.msra.mxu0 %v1990
    %2308 = vmatpush.bf16.msra.mxu0 %v1989
    %2309 = vmatpush.bf16.msra.mxu0 %v1988
    %2310 = vmatpush.bf16.msra.mxu0 %v1987
    %2311 = vmatpush.bf16.msra.mxu0 %v1986
    %2312 = vmatpush.bf16.msra.mxu0 %v1985
    %2313 = vmatpush.bf16.msra.mxu0 %v1984
    %2314 = vmatmul.bf16.gmra.mxu0 %v1375
    %v2315 = vpop.f32.mrf.mxu0
    %v2316 = vadd.f32 %v2302, %v2315
    %v2317 = vpop.f32.mrf.mxu0
    %v2318 = vadd.f32 %v2304, %v2317
    %2319 = vdwg.mxu0
    %2320 = vmatpush.bf16.msra.mxu0 %v1999
    %2321 = vmatpush.bf16.msra.mxu0 %v1998
    %2322 = vmatpush.bf16.msra.mxu0 %v1997
    %2323 = vmatpush.bf16.msra.mxu0 %v1996
    %2324 = vmatpush.bf16.msra.mxu0 %v1995
    %2325 = vmatpush.bf16.msra.mxu0 %v1994
    %2326 = vmatpush.bf16.msra.mxu0 %v1993
    %2327 = vmatpush.bf16.msra.mxu0 %v1992
    %2328 = vmatmul.bf16.gmra.mxu0 %v1376
    %v2329 = vpop.f32.mrf.mxu0
    %v2330 = vadd.f32 %v2316, %v2329
    %v2331 = vpop.f32.mrf.mxu0
    %v2332 = vadd.f32 %v2318, %v2331
    %2333 = vdwg.mxu0
    %2334 = vmatpush.bf16.msra.mxu0 %v2007
    %2335 = vmatpush.bf16.msra.mxu0 %v2006
    %2336 = vmatpush.bf16.msra.mxu0 %v2005
    %2337 = vmatpush.bf16.msra.mxu0 %v2004
    %2338 = vmatpush.bf16.msra.mxu0 %v2003
    %2339 = vmatpush.bf16.msra.mxu0 %v2002
    %2340 = vmatpush.bf16.msra.mxu0 %v2001
    %2341 = vmatpush.bf16.msra.mxu0 %v2000
    %2342 = vmatmul.bf16.gmra.mxu0 %v1377
    %v2343 = vpop.f32.mrf.mxu0
    %v2344 = vadd.f32 %v2330, %v2343
    %v2345 = vpop.f32.mrf.mxu0
    %v2346 = vadd.f32 %v2332, %v2345
    %2347 = vdwg.mxu0
    %2348 = vmatpush.bf16.msra.mxu0 %v2015
    %2349 = vmatpush.bf16.msra.mxu0 %v2014
    %2350 = vmatpush.bf16.msra.mxu0 %v2013
    %2351 = vmatpush.bf16.msra.mxu0 %v2012
    %2352 = vmatpush.bf16.msra.mxu0 %v2011
    %2353 = vmatpush.bf16.msra.mxu0 %v2010
    %2354 = vmatpush.bf16.msra.mxu0 %v2009
    %2355 = vmatpush.bf16.msra.mxu0 %v2008
    %2356 = vmatmul.bf16.gmra.mxu0 %v1378
    %v2357 = vpop.f32.mrf.mxu0
    %v2358 = vadd.f32 %v2344, %v2357
    %v2359 = vpop.f32.mrf.mxu0
    %v2360 = vadd.f32 %v2346, %v2359
    %2361 = vdwg.mxu0
    %2362 = vmatpush.bf16.msra.mxu0 %v2023
    %2363 = vmatpush.bf16.msra.mxu0 %v2022
    %2364 = vmatpush.bf16.msra.mxu0 %v2021
    %2365 = vmatpush.bf16.msra.mxu0 %v2020
    %2366 = vmatpush.bf16.msra.mxu0 %v2019
    %2367 = vmatpush.bf16.msra.mxu0 %v2018
    %2368 = vmatpush.bf16.msra.mxu0 %v2017
    %2369 = vmatpush.bf16.msra.mxu0 %v2016
    %2370 = vmatmul.bf16.gmra.mxu0 %v1379
    %v2371 = vpop.f32.mrf.mxu0
    %v2372 = vadd.f32 %v2358, %v2371
    %v2373 = vpop.f32.mrf.mxu0
    %v2374 = vadd.f32 %v2360, %v2373
    %2375 = vdwg.mxu0
    %v2376 = vadd.f32 %v618, %v2372
    %v2377 = vadd.f32 %v619, %v2374
    %v2378 = vld [vmem:[%s11] sm:$0x1]
    %v2379 = vld [vmem:[%s12] sm:$0x1]
    %v2380 = vsel %vm111, %v2376, 0.0
    %2381 = vadd.xlane.f32.xlu0 %v2380
    %v2382 = vpop.xlane.xlu0 %2381
    %v2383 = vsel %vm111, %v2377, 0.0
    %2384 = vadd.xlane.f32.xlu0 %v2383
    %v2385 = vpop.xlane.xlu0 %2384
    %v2386 = vmul.f32 %v2382, %v571
    %v2387 = vmul.f32 %v2385, %v571
    %v2388 = vsub.f32 %v2376, %v2386
    %v2389 = vsub.f32 %v2377, %v2387
    %v2390 = vmul.f32 %v2388, %v2388
    %v2391 = vmul.f32 %v2389, %v2389
    %v2392 = vsel %vm111, %v2390, 0.0
    %2393 = vadd.xlane.f32.xlu0 %v2392
    %v2394 = vpop.xlane.xlu0 %2393
    %v2395 = vsel %vm111, %v2391, 0.0
    %2396 = vadd.xlane.f32.xlu0 %v2395
    %v2397 = vpop.xlane.xlu0 %2396
    %v2398 = vmul.f32 %v2394, %v571
    %v2399 = vmul.f32 %v2397, %v571
    %v2400 = vadd.f32 %v2398, 1e-05
    %v2401 = vadd.f32 %v2399, 1e-05
    %v2402 = vrsqrt.pop %v2400
    %v2403 = vmul.f32 %v2402, %v2400
    %v2404 = vmul.f32 %v2403, %v2402
    %v2405 = vmul.f32 0.5, %v2404
    %v2406 = vsub.f32 1.5, %v2405
    %v2407 = vmul.f32 %v2402, %v2406
    %vm2408 = vweird.f32 %v2400
    %vm2409 = vweird.f32 %v2402
    %vm2410 = vmor %vm2408, %vm2409
    %v2411 = vsel %vm2410, %v2402, %v2407
    %v2412 = vrsqrt.pop %v2401
    %v2413 = vmul.f32 %v2412, %v2401
    %v2414 = vmul.f32 %v2413, %v2412
    %v2415 = vmul.f32 0.5, %v2414
    %v2416 = vsub.f32 1.5, %v2415
    %v2417 = vmul.f32 %v2412, %v2416
    %vm2418 = vweird.f32 %v2401
    %vm2419 = vweird.f32 %v2412
    %vm2420 = vmor %vm2418, %vm2419
    %v2421 = vsel %vm2420, %v2412, %v2417
    %v2422 = vmul.f32 %v2388, %v2411
    %v2423 = vmul.f32 %v2389, %v2421
    %v2425 = vperm.slane %v2378, 0
    %v2427 = vmul.f32 %v2422, %v2425
    %v2428 = vmul.f32 %v2423, %v2425
    %v2430 = vperm.slane %v2379, 0
    %v2432 = vadd.f32 %v2427, %v2430
    %v2433 = vadd.f32 %v2428, %v2430
    %s2434 = scalar_lea.vmem %s1, 16
    %v2435 = vld [vmem:[%s2434] sm:$0xf]
    %v2436 = vld [vmem:[%s2434 + $0x4] sm:$0xf]
    %v2437 = vld [vmem:[%s2434 + $0x8] sm:$0xf]
    %v2438 = vld [vmem:[%s2434 + $0xc] sm:$0xf]
    %v2439 = vpack.c.bf16 %v2433, %v2432
    %s2440 = scalar_lea.vmem %s2, 1
    %v2441 = vld [vmem:[%s2440] sm:$0x1]
    %v2443 = vperm.slane %v2441, 0
    %v2449 = vunpack.c.l.b16 %v2435
    %v2450 = vunpack.c.l.b16 %v2436
    %v2451 = vunpack.c.l.b16 %v2437
    %v2452 = vunpack.c.l.b16 %v2438
    %v2453 = vpack.c.b16 %v2450, %v2449
    %v2454 = vpack.c.b16 %v2452, %v2451
    %v2458 = vsel %vm111, %v2439, 0
    %2460 = vmatpush.bf16.msra.mxu0 0
    %2461 = vmatpush.bf16.msra.mxu0 0
    %2462 = vmatpush.bf16.msra.mxu0 0
    %2463 = vmatpush.bf16.msra.mxu0 0
    %2464 = vmatpush.bf16.msra.mxu0 0
    %2465 = vmatpush.bf16.msra.mxu0 0
    %2466 = vmatpush.bf16.msra.mxu0 %v2454
    %2467 = vmatpush.bf16.msra.mxu0 %v2453
    %2468 = vmatmul.bf16.gmra.mxu0 %v2458
    %v2469 = vpop.f32.mrf.mxu0
    %v2470 = vadd.f32 %v2443, %v2469
    %v2471 = vpop.f32.mrf.mxu0
    %v2472 = vadd.f32 %v2443, %v2471
    %2473 = vdwg.mxu0
    %2475 = vrot.lane.b32.xlu0 %v2470, 120
    %v2476 = vpop.permute.xlu0 %2475
    %2478 = vrot.lane.b32.xlu0 %v2470, 112
    %v2479 = vpop.permute.xlu0 %2478
    %2481 = vrot.lane.b32.xlu0 %v2470, 104
    %v2482 = vpop.permute.xlu0 %2481
    %2485 = vrot.lane.b32.xlu0 %v2472, 120
    %v2486 = vpop.permute.xlu0 %2485
    %2488 = vrot.lane.b32.xlu0 %v2472, 112
    %v2489 = vpop.permute.xlu0 %2488
    %2491 = vrot.lane.b32.xlu0 %v2472, 104
    %v2492 = vpop.permute.xlu0 %2491
    %v2494 = vpack.c.bf16 %v2476, %v2470
    %v2495 = vpack.c.bf16 %v2482, %v2479
    %v2496 = vpack.c.bf16 %v2486, %v2472
    %v2497 = vpack.c.bf16 %v2492, %v2489
    %2502 = vrot.lane.b32.xlu0 %v2494, 96
    %v2503 = vpop.permute.xlu0 %2502
    %2504 = vrot.lane.b32.xlu0 %v2495, 96
    %v2505 = vpop.permute.xlu0 %2504
    %2506 = vrot.lane.b32.xlu0 %v2496, 96
    %v2507 = vpop.permute.xlu0 %2506
    %2508 = vrot.lane.b32.xlu0 %v2497, 96
    %v2509 = vpop.permute.xlu0 %2508
    %v2511 = vsel %vm165, %v2494, 0
    %v2514 = vsel %vm165, %v2495, 0
    %v2517 = vsel %vm165, %v2496, 0
    %v2520 = vsel %vm165, %v2497, 0
    %v2523 = vsel %vm165, %v2503, 0
    %v2526 = vsel %vm165, %v2505, 0
    %v2529 = vsel %vm165, %v2507, 0
    %v2532 = vsel %vm165, %v2509, 0
    %2534 = vmatpush.bf16.xpose.msra.mxu0 0
    %2535 = vmatpush.bf16.xpose.msra.mxu0 0
    %2536 = vmatpush.bf16.xpose.msra.mxu0 0
    %2537 = vmatpush.bf16.xpose.msra.mxu0 0
    %2538 = vmatpush.bf16.xpose.msra.mxu0 %v2532
    %2539 = vmatpush.bf16.xpose.msra.mxu0 %v2529
    %2540 = vmatpush.bf16.xpose.msra.mxu0 %v2526
    %2541 = vmatpush.bf16.xpose.msra.mxu0 %v2523
    %2542 = vmatmul.bf16.gmra.mxu0 %v2511
    %v2543 = vpop.f32.mrf.mxu0
    %v2544 = vadd.f32 0.0, %v2543
    %v2545 = vpop.f32.mrf.mxu0
    %v2546 = vadd.f32 0.0, %v2545
    %2547 = vmatmul.bf16.gmra.mxu0 %v2514
    %v2548 = vpop.f32.mrf.mxu0
    %v2549 = vadd.f32 0.0, %v2548
    %v2550 = vpop.f32.mrf.mxu0
    %v2551 = vadd.f32 0.0, %v2550
    %2552 = vmatmul.bf16.gmra.mxu0 %v2517
    %v2553 = vpop.f32.mrf.mxu0
    %v2554 = vadd.f32 0.0, %v2553
    %v2555 = vpop.f32.mrf.mxu0
    %v2556 = vadd.f32 0.0, %v2555
    %2557 = vmatmul.bf16.gmra.mxu0 %v2520
    %v2558 = vpop.f32.mrf.mxu0
    %v2559 = vadd.f32 0.0, %v2558
    %v2560 = vpop.f32.mrf.mxu0
    %v2561 = vadd.f32 0.0, %v2560
    %2562 = vdwg.mxu0
    %v2563 = vmul.f32 %v2544, 0.35355338
    %v2564 = vmul.f32 %v2546, 0.35355338
    %v2565 = vmul.f32 %v2549, 0.35355338
    %v2566 = vmul.f32 %v2551, 0.35355338
    %v2567 = vmul.f32 %v2554, 0.35355338
    %v2568 = vmul.f32 %v2556, 0.35355338
    %v2569 = vmul.f32 %v2559, 0.35355338
    %v2570 = vmul.f32 %v2561, 0.35355338
    %v2571 = vsel %vm80, %v2563, -1e+30
    %v2572 = vsel %vm81, %v2564, -1e+30
    %v2573 = vsel %vm82, %v2565, -1e+30
    %v2574 = vsel %vm83, %v2566, -1e+30
    %v2575 = vsel %vm84, %v2567, -1e+30
    %v2576 = vsel %vm85, %v2568, -1e+30
    %v2577 = vsel %vm86, %v2569, -1e+30
    %v2578 = vsel %vm87, %v2570, -1e+30
    %v2579 = vsel %vm235, %v2571, -inf
    %2580 = vmax.xlane.f32.xlu0 %v2579
    %v2581 = vpop.xlane.xlu0 %2580
    %v2582 = vsel %vm235, %v2572, -inf
    %2583 = vmax.xlane.f32.xlu0 %v2582
    %v2584 = vpop.xlane.xlu0 %2583
    %v2585 = vsel %vm235, %v2573, -inf
    %2586 = vmax.xlane.f32.xlu0 %v2585
    %v2587 = vpop.xlane.xlu0 %2586
    %v2588 = vsel %vm235, %v2574, -inf
    %2589 = vmax.xlane.f32.xlu0 %v2588
    %v2590 = vpop.xlane.xlu0 %2589
    %v2591 = vsel %vm235, %v2575, -inf
    %2592 = vmax.xlane.f32.xlu0 %v2591
    %v2593 = vpop.xlane.xlu0 %2592
    %v2594 = vsel %vm235, %v2576, -inf
    %2595 = vmax.xlane.f32.xlu0 %v2594
    %v2596 = vpop.xlane.xlu0 %2595
    %v2597 = vsel %vm235, %v2577, -inf
    %2598 = vmax.xlane.f32.xlu0 %v2597
    %v2599 = vpop.xlane.xlu0 %2598
    %v2600 = vsel %vm235, %v2578, -inf
    %2601 = vmax.xlane.f32.xlu0 %v2600
    %v2602 = vpop.xlane.xlu0 %2601
    %v2603 = vsub.f32 %v2571, %v2581
    %v2604 = vsub.f32 %v2572, %v2584
    %v2605 = vsub.f32 %v2573, %v2587
    %v2606 = vsub.f32 %v2574, %v2590
    %v2607 = vsub.f32 %v2575, %v2593
    %v2608 = vsub.f32 %v2576, %v2596
    %v2609 = vsub.f32 %v2577, %v2599
    %v2610 = vsub.f32 %v2578, %v2602
    %v2611 = vmul.f32 %v2603, 1.442695
    %v2612 = vpow.pop %v2611
    %v2613 = vmul.f32 %v2604, 1.442695
    %v2614 = vpow.pop %v2613
    %v2615 = vmul.f32 %v2605, 1.442695
    %v2616 = vpow.pop %v2615
    %v2617 = vmul.f32 %v2606, 1.442695
    %v2618 = vpow.pop %v2617
    %v2619 = vmul.f32 %v2607, 1.442695
    %v2620 = vpow.pop %v2619
    %v2621 = vmul.f32 %v2608, 1.442695
    %v2622 = vpow.pop %v2621
    %v2623 = vmul.f32 %v2609, 1.442695
    %v2624 = vpow.pop %v2623
    %v2625 = vmul.f32 %v2610, 1.442695
    %v2626 = vpow.pop %v2625
    %v2627 = vsel %vm235, %v2612, 0.0
    %2628 = vadd.xlane.f32.xlu0 %v2627
    %v2629 = vpop.xlane.xlu0 %2628
    %v2630 = vsel %vm235, %v2614, 0.0
    %2631 = vadd.xlane.f32.xlu0 %v2630
    %v2632 = vpop.xlane.xlu0 %2631
    %v2633 = vsel %vm235, %v2616, 0.0
    %2634 = vadd.xlane.f32.xlu0 %v2633
    %v2635 = vpop.xlane.xlu0 %2634
    %v2636 = vsel %vm235, %v2618, 0.0
    %2637 = vadd.xlane.f32.xlu0 %v2636
    %v2638 = vpop.xlane.xlu0 %2637
    %v2639 = vsel %vm235, %v2620, 0.0
    %2640 = vadd.xlane.f32.xlu0 %v2639
    %v2641 = vpop.xlane.xlu0 %2640
    %v2642 = vsel %vm235, %v2622, 0.0
    %2643 = vadd.xlane.f32.xlu0 %v2642
    %v2644 = vpop.xlane.xlu0 %2643
    %v2645 = vsel %vm235, %v2624, 0.0
    %2646 = vadd.xlane.f32.xlu0 %v2645
    %v2647 = vpop.xlane.xlu0 %2646
    %v2648 = vsel %vm235, %v2626, 0.0
    %2649 = vadd.xlane.f32.xlu0 %v2648
    %v2650 = vpop.xlane.xlu0 %2649
    %v2651 = vrcp.pop %v2629
    %v2652 = vmul.f32 %v2629, %v2651
    %v2653 = vsub.f32 1.0, %v2652
    %v2654 = vmul.f32 %v2651, %v2653
    %v2655 = vadd.f32 %v2651, %v2654
    %vm2656 = vweird.f32 %v2629
    %vm2657 = vweird.f32 %v2651
    %vm2658 = vmor %vm2656, %vm2657
    %v2659 = vsel %vm2658, %v2651, %v2655
    %v2660 = vand.u32 2147483647, %v2629
    %vm2661 = vcmp.eq.f32.partialorder %v2660, 8.507059e+37
    %v2662 = vand.u32 %v2629, 2147483648
    %v2663 = vor.u32 1.1754944e-38, %v2662
    %v2664 = vsel %vm2661, %v2663, %v2659
    %v2665 = vrcp.pop %v2632
    %v2666 = vmul.f32 %v2632, %v2665
    %v2667 = vsub.f32 1.0, %v2666
    %v2668 = vmul.f32 %v2665, %v2667
    %v2669 = vadd.f32 %v2665, %v2668
    %vm2670 = vweird.f32 %v2632
    %vm2671 = vweird.f32 %v2665
    %vm2672 = vmor %vm2670, %vm2671
    %v2673 = vsel %vm2672, %v2665, %v2669
    %v2674 = vand.u32 2147483647, %v2632
    %vm2675 = vcmp.eq.f32.partialorder %v2674, 8.507059e+37
    %v2676 = vand.u32 %v2632, 2147483648
    %v2677 = vor.u32 1.1754944e-38, %v2676
    %v2678 = vsel %vm2675, %v2677, %v2673
    %v2679 = vrcp.pop %v2635
    %v2680 = vmul.f32 %v2635, %v2679
    %v2681 = vsub.f32 1.0, %v2680
    %v2682 = vmul.f32 %v2679, %v2681
    %v2683 = vadd.f32 %v2679, %v2682
    %vm2684 = vweird.f32 %v2635
    %vm2685 = vweird.f32 %v2679
    %vm2686 = vmor %vm2684, %vm2685
    %v2687 = vsel %vm2686, %v2679, %v2683
    %v2688 = vand.u32 2147483647, %v2635
    %vm2689 = vcmp.eq.f32.partialorder %v2688, 8.507059e+37
    %v2690 = vand.u32 %v2635, 2147483648
    %v2691 = vor.u32 1.1754944e-38, %v2690
    %v2692 = vsel %vm2689, %v2691, %v2687
    %v2693 = vrcp.pop %v2638
    %v2694 = vmul.f32 %v2638, %v2693
    %v2695 = vsub.f32 1.0, %v2694
    %v2696 = vmul.f32 %v2693, %v2695
    %v2697 = vadd.f32 %v2693, %v2696
    %vm2698 = vweird.f32 %v2638
    %vm2699 = vweird.f32 %v2693
    %vm2700 = vmor %vm2698, %vm2699
    %v2701 = vsel %vm2700, %v2693, %v2697
    %v2702 = vand.u32 2147483647, %v2638
    %vm2703 = vcmp.eq.f32.partialorder %v2702, 8.507059e+37
    %v2704 = vand.u32 %v2638, 2147483648
    %v2705 = vor.u32 1.1754944e-38, %v2704
    %v2706 = vsel %vm2703, %v2705, %v2701
    %v2707 = vrcp.pop %v2641
    %v2708 = vmul.f32 %v2641, %v2707
    %v2709 = vsub.f32 1.0, %v2708
    %v2710 = vmul.f32 %v2707, %v2709
    %v2711 = vadd.f32 %v2707, %v2710
    %vm2712 = vweird.f32 %v2641
    %vm2713 = vweird.f32 %v2707
    %vm2714 = vmor %vm2712, %vm2713
    %v2715 = vsel %vm2714, %v2707, %v2711
    %v2716 = vand.u32 2147483647, %v2641
    %vm2717 = vcmp.eq.f32.partialorder %v2716, 8.507059e+37
    %v2718 = vand.u32 %v2641, 2147483648
    %v2719 = vor.u32 1.1754944e-38, %v2718
    %v2720 = vsel %vm2717, %v2719, %v2715
    %v2721 = vrcp.pop %v2644
    %v2722 = vmul.f32 %v2644, %v2721
    %v2723 = vsub.f32 1.0, %v2722
    %v2724 = vmul.f32 %v2721, %v2723
    %v2725 = vadd.f32 %v2721, %v2724
    %vm2726 = vweird.f32 %v2644
    %vm2727 = vweird.f32 %v2721
    %vm2728 = vmor %vm2726, %vm2727
    %v2729 = vsel %vm2728, %v2721, %v2725
    %v2730 = vand.u32 2147483647, %v2644
    %vm2731 = vcmp.eq.f32.partialorder %v2730, 8.507059e+37
    %v2732 = vand.u32 %v2644, 2147483648
    %v2733 = vor.u32 1.1754944e-38, %v2732
    %v2734 = vsel %vm2731, %v2733, %v2729
    %v2735 = vrcp.pop %v2647
    %v2736 = vmul.f32 %v2647, %v2735
    %v2737 = vsub.f32 1.0, %v2736
    %v2738 = vmul.f32 %v2735, %v2737
    %v2739 = vadd.f32 %v2735, %v2738
    %vm2740 = vweird.f32 %v2647
    %vm2741 = vweird.f32 %v2735
    %vm2742 = vmor %vm2740, %vm2741
    %v2743 = vsel %vm2742, %v2735, %v2739
    %v2744 = vand.u32 2147483647, %v2647
    %vm2745 = vcmp.eq.f32.partialorder %v2744, 8.507059e+37
    %v2746 = vand.u32 %v2647, 2147483648
    %v2747 = vor.u32 1.1754944e-38, %v2746
    %v2748 = vsel %vm2745, %v2747, %v2743
    %v2749 = vrcp.pop %v2650
    %v2750 = vmul.f32 %v2650, %v2749
    %v2751 = vsub.f32 1.0, %v2750
    %v2752 = vmul.f32 %v2749, %v2751
    %v2753 = vadd.f32 %v2749, %v2752
    %vm2754 = vweird.f32 %v2650
    %vm2755 = vweird.f32 %v2749
    %vm2756 = vmor %vm2754, %vm2755
    %v2757 = vsel %vm2756, %v2749, %v2753
    %v2758 = vand.u32 2147483647, %v2650
    %vm2759 = vcmp.eq.f32.partialorder %v2758, 8.507059e+37
    %v2760 = vand.u32 %v2650, 2147483648
    %v2761 = vor.u32 1.1754944e-38, %v2760
    %v2762 = vsel %vm2759, %v2761, %v2757
    %v2763 = vmul.f32 %v2612, %v2664
    %v2764 = vmul.f32 %v2614, %v2678
    %v2765 = vmul.f32 %v2616, %v2692
    %v2766 = vmul.f32 %v2618, %v2706
    %v2767 = vmul.f32 %v2620, %v2720
    %v2768 = vmul.f32 %v2622, %v2734
    %v2769 = vmul.f32 %v2624, %v2748
    %v2770 = vmul.f32 %v2626, %v2762
    %v2771 = vpack.c.bf16 %v2764, %v2763
    %v2772 = vpack.c.bf16 %v2766, %v2765
    %v2773 = vpack.c.bf16 %v2768, %v2767
    %v2774 = vpack.c.bf16 %v2770, %v2769
    %2775 = vrot.lane.b32.xlu0 %v2494, 64
    %v2776 = vpop.permute.xlu0 %2775
    %2777 = vrot.lane.b32.xlu0 %v2495, 64
    %v2778 = vpop.permute.xlu0 %2777
    %2779 = vrot.lane.b32.xlu0 %v2496, 64
    %v2780 = vpop.permute.xlu0 %2779
    %2781 = vrot.lane.b32.xlu0 %v2497, 64
    %v2782 = vpop.permute.xlu0 %2781
    %v2788 = vsel %vm235, %v2771, 0
    %v2791 = vsel %vm235, %v2772, 0
    %v2794 = vsel %vm235, %v2773, 0
    %v2797 = vsel %vm235, %v2774, 0
    %2799 = vmatpush.bf16.msra.mxu0 0
    %2800 = vmatpush.bf16.msra.mxu0 0
    %2801 = vmatpush.bf16.msra.mxu0 0
    %2802 = vmatpush.bf16.msra.mxu0 0
    %2803 = vmatpush.bf16.msra.mxu0 %v2782
    %2804 = vmatpush.bf16.msra.mxu0 %v2780
    %2805 = vmatpush.bf16.msra.mxu0 %v2778
    %2806 = vmatpush.bf16.msra.mxu0 %v2776
    %2807 = vmatmul.bf16.gmra.mxu0 %v2788
    %v2808 = vpop.f32.mrf.mxu0
    %v2809 = vadd.f32 0.0, %v2808
    %v2810 = vpop.f32.mrf.mxu0
    %v2811 = vadd.f32 0.0, %v2810
    %2812 = vmatmul.bf16.gmra.mxu0 %v2791
    %v2813 = vpop.f32.mrf.mxu0
    %v2814 = vadd.f32 0.0, %v2813
    %v2815 = vpop.f32.mrf.mxu0
    %v2816 = vadd.f32 0.0, %v2815
    %2817 = vmatmul.bf16.gmra.mxu0 %v2794
    %v2818 = vpop.f32.mrf.mxu0
    %v2819 = vadd.f32 0.0, %v2818
    %v2820 = vpop.f32.mrf.mxu0
    %v2821 = vadd.f32 0.0, %v2820
    %2822 = vmatmul.bf16.gmra.mxu0 %v2797
    %v2823 = vpop.f32.mrf.mxu0
    %v2824 = vadd.f32 0.0, %v2823
    %v2825 = vpop.f32.mrf.mxu0
    %v2826 = vadd.f32 0.0, %v2825
    %2827 = vdwg.mxu0
    %2829 = vrot.lane.b32.xlu0 %v2811, 8
    %v2830 = vpop.permute.xlu0 %2829
    %2833 = vrot.lane.b32.xlu0 %v2814, 16
    %v2834 = vpop.permute.xlu0 %2833
    %2837 = vrot.lane.b32.xlu0 %v2816, 24
    %v2838 = vpop.permute.xlu0 %2837
    %v2840 = vsel %vm165, %v2809, %v2830
    %v2841 = vsel %vm498, %v2840, %v2834
    %v2842 = vsel %vm500, %v2841, %v2838
    %2844 = vrot.lane.b32.xlu0 %v2821, 8
    %v2845 = vpop.permute.xlu0 %2844
    %2848 = vrot.lane.b32.xlu0 %v2824, 16
    %v2849 = vpop.permute.xlu0 %2848
    %2852 = vrot.lane.b32.xlu0 %v2826, 24
    %v2853 = vpop.permute.xlu0 %2852
    %v2855 = vsel %vm165, %v2819, %v2845
    %v2856 = vsel %vm498, %v2855, %v2849
    %v2857 = vsel %vm500, %v2856, %v2853
    %s2858 = scalar_lea.vmem %s3, 16
    %v2859 = vld [vmem:[%s2858] sm:$0xf]
    %v2860 = vld [vmem:[%s2858 + $0x4] sm:$0xf]
    %v2861 = vld [vmem:[%s2858 + $0x8] sm:$0xf]
    %v2862 = vld [vmem:[%s2858 + $0xc] sm:$0xf]
    %v2863 = vpack.c.bf16 %v2857, %v2842
    %s2864 = scalar_lea.vmem %s4, 1
    %v2865 = vld [vmem:[%s2864] sm:$0x1]
    %v2867 = vperm.slane %v2865, 0
    %v2873 = vunpack.c.l.b16 %v2859
    %v2874 = vunpack.c.l.b16 %v2860
    %v2875 = vunpack.c.l.b16 %v2861
    %v2876 = vunpack.c.l.b16 %v2862
    %v2877 = vpack.c.b16 %v2874, %v2873
    %v2878 = vpack.c.b16 %v2876, %v2875
    %v2882 = vsel %vm111, %v2863, 0
    %2884 = vmatpush.bf16.msra.mxu0 0
    %2885 = vmatpush.bf16.msra.mxu0 0
    %2886 = vmatpush.bf16.msra.mxu0 0
    %2887 = vmatpush.bf16.msra.mxu0 0
    %2888 = vmatpush.bf16.msra.mxu0 0
    %2889 = vmatpush.bf16.msra.mxu0 0
    %2890 = vmatpush.bf16.msra.mxu0 %v2878
    %2891 = vmatpush.bf16.msra.mxu0 %v2877
    %2892 = vmatmul.bf16.gmra.mxu0 %v2882
    %v2893 = vpop.f32.mrf.mxu0
    %v2894 = vadd.f32 %v2867, %v2893
    %v2895 = vpop.f32.mrf.mxu0
    %v2896 = vadd.f32 %v2867, %v2895
    %2897 = vdwg.mxu0
    %v2898 = vadd.f32 %v2432, %v2894
    %v2899 = vadd.f32 %v2433, %v2896
    %s2900 = scalar_lea.vmem %s9, 1
    %v2901 = vld [vmem:[%s2900] sm:$0x1]
    %s2902 = scalar_lea.vmem %s10, 1
    %v2903 = vld [vmem:[%s2902] sm:$0x1]
    %v2904 = vsel %vm111, %v2898, 0.0
    %2905 = vadd.xlane.f32.xlu0 %v2904
    %v2906 = vpop.xlane.xlu0 %2905
    %v2907 = vsel %vm111, %v2899, 0.0
    %2908 = vadd.xlane.f32.xlu0 %v2907
    %v2909 = vpop.xlane.xlu0 %2908
    %v2910 = vmul.f32 %v2906, %v571
    %v2911 = vmul.f32 %v2909, %v571
    %v2912 = vsub.f32 %v2898, %v2910
    %v2913 = vsub.f32 %v2899, %v2911
    %v2914 = vmul.f32 %v2912, %v2912
    %v2915 = vmul.f32 %v2913, %v2913
    %v2916 = vsel %vm111, %v2914, 0.0
    %2917 = vadd.xlane.f32.xlu0 %v2916
    %v2918 = vpop.xlane.xlu0 %2917
    %v2919 = vsel %vm111, %v2915, 0.0
    %2920 = vadd.xlane.f32.xlu0 %v2919
    %v2921 = vpop.xlane.xlu0 %2920
    %v2922 = vmul.f32 %v2918, %v571
    %v2923 = vmul.f32 %v2921, %v571
    %v2924 = vadd.f32 %v2922, 1e-05
    %v2925 = vadd.f32 %v2923, 1e-05
    %v2926 = vrsqrt.pop %v2924
    %v2927 = vmul.f32 %v2926, %v2924
    %v2928 = vmul.f32 %v2927, %v2926
    %v2929 = vmul.f32 0.5, %v2928
    %v2930 = vsub.f32 1.5, %v2929
    %v2931 = vmul.f32 %v2926, %v2930
    %vm2932 = vweird.f32 %v2924
    %vm2933 = vweird.f32 %v2926
    %vm2934 = vmor %vm2932, %vm2933
    %v2935 = vsel %vm2934, %v2926, %v2931
    %v2936 = vrsqrt.pop %v2925
    %v2937 = vmul.f32 %v2936, %v2925
    %v2938 = vmul.f32 %v2937, %v2936
    %v2939 = vmul.f32 0.5, %v2938
    %v2940 = vsub.f32 1.5, %v2939
    %v2941 = vmul.f32 %v2936, %v2940
    %vm2942 = vweird.f32 %v2925
    %vm2943 = vweird.f32 %v2936
    %vm2944 = vmor %vm2942, %vm2943
    %v2945 = vsel %vm2944, %v2936, %v2941
    %v2946 = vmul.f32 %v2912, %v2935
    %v2947 = vmul.f32 %v2913, %v2945
    %v2949 = vperm.slane %v2901, 0
    %v2951 = vmul.f32 %v2946, %v2949
    %v2952 = vmul.f32 %v2947, %v2949
    %v2954 = vperm.slane %v2903, 0
    %v2956 = vadd.f32 %v2951, %v2954
    %v2957 = vadd.f32 %v2952, %v2954
    %s2958 = scalar_lea.vmem %s5, 256
    %v2959 = vld [vmem:[%s2958] sm:$0xff]
    %v2960 = vld [vmem:[%s2958 + $0x8] sm:$0xff]
    %v2961 = vld [vmem:[%s2958 + $0x10] sm:$0xff]
    %v2962 = vld [vmem:[%s2958 + $0x18] sm:$0xff]
    %v2963 = vld [vmem:[%s2958 + $0x20] sm:$0xff]
    %v2964 = vld [vmem:[%s2958 + $0x28] sm:$0xff]
    %v2965 = vld [vmem:[%s2958 + $0x30] sm:$0xff]
    %v2966 = vld [vmem:[%s2958 + $0x38] sm:$0xff]
    %v2967 = vld [vmem:[%s2958 + $0x40] sm:$0xff]
    %v2968 = vld [vmem:[%s2958 + $0x48] sm:$0xff]
    %v2969 = vld [vmem:[%s2958 + $0x50] sm:$0xff]
    %v2970 = vld [vmem:[%s2958 + $0x58] sm:$0xff]
    %v2971 = vld [vmem:[%s2958 + $0x60] sm:$0xff]
    %v2972 = vld [vmem:[%s2958 + $0x68] sm:$0xff]
    %v2973 = vld [vmem:[%s2958 + $0x70] sm:$0xff]
    %v2974 = vld [vmem:[%s2958 + $0x78] sm:$0xff]
    %v2975 = vld [vmem:[%s2958 + $0x80] sm:$0xff]
    %v2976 = vld [vmem:[%s2958 + $0x88] sm:$0xff]
    %v2977 = vld [vmem:[%s2958 + $0x90] sm:$0xff]
    %v2978 = vld [vmem:[%s2958 + $0x98] sm:$0xff]
    %v2979 = vld [vmem:[%s2958 + $0xa0] sm:$0xff]
    %v2980 = vld [vmem:[%s2958 + $0xa8] sm:$0xff]
    %v2981 = vld [vmem:[%s2958 + $0xb0] sm:$0xff]
    %v2982 = vld [vmem:[%s2958 + $0xb8] sm:$0xff]
    %v2983 = vld [vmem:[%s2958 + $0xc0] sm:$0xff]
    %v2984 = vld [vmem:[%s2958 + $0xc8] sm:$0xff]
    %v2985 = vld [vmem:[%s2958 + $0xd0] sm:$0xff]
    %v2986 = vld [vmem:[%s2958 + $0xd8] sm:$0xff]
    %v2987 = vld [vmem:[%s2958 + $0xe0] sm:$0xff]
    %v2988 = vld [vmem:[%s2958 + $0xe8] sm:$0xff]
    %v2989 = vld [vmem:[%s2958 + $0xf0] sm:$0xff]
    %v2990 = vld [vmem:[%s2958 + $0xf8] sm:$0xff]
    %v2991 = vpack.c.bf16 %v2957, %v2956
    %s2992 = scalar_lea.vmem %s6, 16
    %v2993 = vld [vmem:[%s2992] sm:$0xff]
    %v2994 = vld [vmem:[%s2992 + $0x8] sm:$0xff]
    %v2997 = vperm.slane %v2993, 0
    %v2998 = vperm.slane %v2993, 1
    %v2999 = vperm.slane %v2993, 2
    %v3000 = vperm.slane %v2993, 3
    %v3001 = vperm.slane %v2993, 4
    %v3002 = vperm.slane %v2993, 5
    %v3003 = vperm.slane %v2993, 6
    %v3004 = vperm.slane %v2993, 7
    %v3005 = vperm.slane %v2994, 0
    %v3006 = vperm.slane %v2994, 1
    %v3007 = vperm.slane %v2994, 2
    %v3008 = vperm.slane %v2994, 3
    %v3009 = vperm.slane %v2994, 4
    %v3010 = vperm.slane %v2994, 5
    %v3011 = vperm.slane %v2994, 6
    %v3012 = vperm.slane %v2994, 7
    %v3061 = vunpack.c.l.b16 %v2959
    %v3062 = vunpack.c.h.b16 %v2959
    %v3063 = vunpack.c.l.b16 %v2960
    %v3064 = vunpack.c.h.b16 %v2960
    %v3065 = vunpack.c.l.b16 %v2961
    %v3066 = vunpack.c.h.b16 %v2961
    %v3067 = vunpack.c.l.b16 %v2962
    %v3068 = vunpack.c.h.b16 %v2962
    %v3069 = vunpack.c.l.b16 %v2963
    %v3070 = vunpack.c.h.b16 %v2963
    %v3071 = vunpack.c.l.b16 %v2964
    %v3072 = vunpack.c.h.b16 %v2964
    %v3073 = vunpack.c.l.b16 %v2965
    %v3074 = vunpack.c.h.b16 %v2965
    %v3075 = vunpack.c.l.b16 %v2966
    %v3076 = vunpack.c.h.b16 %v2966
    %v3077 = vunpack.c.l.b16 %v2967
    %v3078 = vunpack.c.h.b16 %v2967
    %v3079 = vunpack.c.l.b16 %v2968
    %v3080 = vunpack.c.h.b16 %v2968
    %v3081 = vunpack.c.l.b16 %v2969
    %v3082 = vunpack.c.h.b16 %v2969
    %v3083 = vunpack.c.l.b16 %v2970
    %v3084 = vunpack.c.h.b16 %v2970
    %v3085 = vunpack.c.l.b16 %v2971
    %v3086 = vunpack.c.h.b16 %v2971
    %v3087 = vunpack.c.l.b16 %v2972
    %v3088 = vunpack.c.h.b16 %v2972
    %v3089 = vunpack.c.l.b16 %v2973
    %v3090 = vunpack.c.h.b16 %v2973
    %v3091 = vunpack.c.l.b16 %v2974
    %v3092 = vunpack.c.h.b16 %v2974
    %v3093 = vunpack.c.l.b16 %v2975
    %v3094 = vunpack.c.h.b16 %v2975
    %v3095 = vunpack.c.l.b16 %v2976
    %v3096 = vunpack.c.h.b16 %v2976
    %v3097 = vunpack.c.l.b16 %v2977
    %v3098 = vunpack.c.h.b16 %v2977
    %v3099 = vunpack.c.l.b16 %v2978
    %v3100 = vunpack.c.h.b16 %v2978
    %v3101 = vunpack.c.l.b16 %v2979
    %v3102 = vunpack.c.h.b16 %v2979
    %v3103 = vunpack.c.l.b16 %v2980
    %v3104 = vunpack.c.h.b16 %v2980
    %v3105 = vunpack.c.l.b16 %v2981
    %v3106 = vunpack.c.h.b16 %v2981
    %v3107 = vunpack.c.l.b16 %v2982
    %v3108 = vunpack.c.h.b16 %v2982
    %v3109 = vunpack.c.l.b16 %v2983
    %v3110 = vunpack.c.h.b16 %v2983
    %v3111 = vunpack.c.l.b16 %v2984
    %v3112 = vunpack.c.h.b16 %v2984
    %v3113 = vunpack.c.l.b16 %v2985
    %v3114 = vunpack.c.h.b16 %v2985
    %v3115 = vunpack.c.l.b16 %v2986
    %v3116 = vunpack.c.h.b16 %v2986
    %v3117 = vunpack.c.l.b16 %v2987
    %v3118 = vunpack.c.h.b16 %v2987
    %v3119 = vunpack.c.l.b16 %v2988
    %v3120 = vunpack.c.h.b16 %v2988
    %v3121 = vunpack.c.l.b16 %v2989
    %v3122 = vunpack.c.h.b16 %v2989
    %v3123 = vunpack.c.l.b16 %v2990
    %v3124 = vunpack.c.h.b16 %v2990
    %v3125 = vpack.c.b16 %v3077, %v3061
    %v3126 = vpack.c.b16 %v3078, %v3062
    %v3127 = vpack.c.b16 %v3079, %v3063
    %v3128 = vpack.c.b16 %v3080, %v3064
    %v3129 = vpack.c.b16 %v3081, %v3065
    %v3130 = vpack.c.b16 %v3082, %v3066
    %v3131 = vpack.c.b16 %v3083, %v3067
    %v3132 = vpack.c.b16 %v3084, %v3068
    %v3133 = vpack.c.b16 %v3085, %v3069
    %v3134 = vpack.c.b16 %v3086, %v3070
    %v3135 = vpack.c.b16 %v3087, %v3071
    %v3136 = vpack.c.b16 %v3088, %v3072
    %v3137 = vpack.c.b16 %v3089, %v3073
    %v3138 = vpack.c.b16 %v3090, %v3074
    %v3139 = vpack.c.b16 %v3091, %v3075
    %v3140 = vpack.c.b16 %v3092, %v3076
    %v3141 = vpack.c.b16 %v3109, %v3093
    %v3142 = vpack.c.b16 %v3110, %v3094
    %v3143 = vpack.c.b16 %v3111, %v3095
    %v3144 = vpack.c.b16 %v3112, %v3096
    %v3145 = vpack.c.b16 %v3113, %v3097
    %v3146 = vpack.c.b16 %v3114, %v3098
    %v3147 = vpack.c.b16 %v3115, %v3099
    %v3148 = vpack.c.b16 %v3116, %v3100
    %v3149 = vpack.c.b16 %v3117, %v3101
    %v3150 = vpack.c.b16 %v3118, %v3102
    %v3151 = vpack.c.b16 %v3119, %v3103
    %v3152 = vpack.c.b16 %v3120, %v3104
    %v3153 = vpack.c.b16 %v3121, %v3105
    %v3154 = vpack.c.b16 %v3122, %v3106
    %v3155 = vpack.c.b16 %v3123, %v3107
    %v3156 = vpack.c.b16 %v3124, %v3108
    %v3190 = vsel %vm111, %v2991, 0
    %3192 = vmatpush.bf16.msra.mxu0 0
    %3193 = vmatpush.bf16.msra.mxu0 0
    %3194 = vmatpush.bf16.msra.mxu0 0
    %3195 = vmatpush.bf16.msra.mxu0 0
    %3196 = vmatpush.bf16.msra.mxu0 0
    %3197 = vmatpush.bf16.msra.mxu0 0
    %3198 = vmatpush.bf16.msra.mxu0 %v3141
    %3199 = vmatpush.bf16.msra.mxu0 %v3125
    %3200 = vmatmul.bf16.gmra.mxu0 %v3190
    %v3201 = vpop.f32.mrf.mxu0
    %v3202 = vadd.f32 %v2997, %v3201
    %v3203 = vpop.f32.mrf.mxu0
    %v3204 = vadd.f32 %v2997, %v3203
    %3205 = vdwg.mxu0
    %3206 = vmatpush.bf16.msra.mxu0 0
    %3207 = vmatpush.bf16.msra.mxu0 0
    %3208 = vmatpush.bf16.msra.mxu0 0
    %3209 = vmatpush.bf16.msra.mxu0 0
    %3210 = vmatpush.bf16.msra.mxu0 0
    %3211 = vmatpush.bf16.msra.mxu0 0
    %3212 = vmatpush.bf16.msra.mxu0 %v3142
    %3213 = vmatpush.bf16.msra.mxu0 %v3126
    %3214 = vmatmul.bf16.gmra.mxu0 %v3190
    %v3215 = vpop.f32.mrf.mxu0
    %v3216 = vadd.f32 %v2998, %v3215
    %v3217 = vpop.f32.mrf.mxu0
    %v3218 = vadd.f32 %v2998, %v3217
    %3219 = vdwg.mxu0
    %3220 = vmatpush.bf16.msra.mxu0 0
    %3221 = vmatpush.bf16.msra.mxu0 0
    %3222 = vmatpush.bf16.msra.mxu0 0
    %3223 = vmatpush.bf16.msra.mxu0 0
    %3224 = vmatpush.bf16.msra.mxu0 0
    %3225 = vmatpush.bf16.msra.mxu0 0
    %3226 = vmatpush.bf16.msra.mxu0 %v3143
    %3227 = vmatpush.bf16.msra.mxu0 %v3127
    %3228 = vmatmul.bf16.gmra.mxu0 %v3190
    %v3229 = vpop.f32.mrf.mxu0
    %v3230 = vadd.f32 %v2999, %v3229
    %v3231 = vpop.f32.mrf.mxu0
    %v3232 = vadd.f32 %v2999, %v3231
    %3233 = vdwg.mxu0
    %3234 = vmatpush.bf16.msra.mxu0 0
    %3235 = vmatpush.bf16.msra.mxu0 0
    %3236 = vmatpush.bf16.msra.mxu0 0
    %3237 = vmatpush.bf16.msra.mxu0 0
    %3238 = vmatpush.bf16.msra.mxu0 0
    %3239 = vmatpush.bf16.msra.mxu0 0
    %3240 = vmatpush.bf16.msra.mxu0 %v3144
    %3241 = vmatpush.bf16.msra.mxu0 %v3128
    %3242 = vmatmul.bf16.gmra.mxu0 %v3190
    %v3243 = vpop.f32.mrf.mxu0
    %v3244 = vadd.f32 %v3000, %v3243
    %v3245 = vpop.f32.mrf.mxu0
    %v3246 = vadd.f32 %v3000, %v3245
    %3247 = vdwg.mxu0
    %3248 = vmatpush.bf16.msra.mxu0 0
    %3249 = vmatpush.bf16.msra.mxu0 0
    %3250 = vmatpush.bf16.msra.mxu0 0
    %3251 = vmatpush.bf16.msra.mxu0 0
    %3252 = vmatpush.bf16.msra.mxu0 0
    %3253 = vmatpush.bf16.msra.mxu0 0
    %3254 = vmatpush.bf16.msra.mxu0 %v3145
    %3255 = vmatpush.bf16.msra.mxu0 %v3129
    %3256 = vmatmul.bf16.gmra.mxu0 %v3190
    %v3257 = vpop.f32.mrf.mxu0
    %v3258 = vadd.f32 %v3001, %v3257
    %v3259 = vpop.f32.mrf.mxu0
    %v3260 = vadd.f32 %v3001, %v3259
    %3261 = vdwg.mxu0
    %3262 = vmatpush.bf16.msra.mxu0 0
    %3263 = vmatpush.bf16.msra.mxu0 0
    %3264 = vmatpush.bf16.msra.mxu0 0
    %3265 = vmatpush.bf16.msra.mxu0 0
    %3266 = vmatpush.bf16.msra.mxu0 0
    %3267 = vmatpush.bf16.msra.mxu0 0
    %3268 = vmatpush.bf16.msra.mxu0 %v3146
    %3269 = vmatpush.bf16.msra.mxu0 %v3130
    %3270 = vmatmul.bf16.gmra.mxu0 %v3190
    %v3271 = vpop.f32.mrf.mxu0
    %v3272 = vadd.f32 %v3002, %v3271
    %v3273 = vpop.f32.mrf.mxu0
    %v3274 = vadd.f32 %v3002, %v3273
    %3275 = vdwg.mxu0
    %3276 = vmatpush.bf16.msra.mxu0 0
    %3277 = vmatpush.bf16.msra.mxu0 0
    %3278 = vmatpush.bf16.msra.mxu0 0
    %3279 = vmatpush.bf16.msra.mxu0 0
    %3280 = vmatpush.bf16.msra.mxu0 0
    %3281 = vmatpush.bf16.msra.mxu0 0
    %3282 = vmatpush.bf16.msra.mxu0 %v3147
    %3283 = vmatpush.bf16.msra.mxu0 %v3131
    %3284 = vmatmul.bf16.gmra.mxu0 %v3190
    %v3285 = vpop.f32.mrf.mxu0
    %v3286 = vadd.f32 %v3003, %v3285
    %v3287 = vpop.f32.mrf.mxu0
    %v3288 = vadd.f32 %v3003, %v3287
    %3289 = vdwg.mxu0
    %3290 = vmatpush.bf16.msra.mxu0 0
    %3291 = vmatpush.bf16.msra.mxu0 0
    %3292 = vmatpush.bf16.msra.mxu0 0
    %3293 = vmatpush.bf16.msra.mxu0 0
    %3294 = vmatpush.bf16.msra.mxu0 0
    %3295 = vmatpush.bf16.msra.mxu0 0
    %3296 = vmatpush.bf16.msra.mxu0 %v3148
    %3297 = vmatpush.bf16.msra.mxu0 %v3132
    %3298 = vmatmul.bf16.gmra.mxu0 %v3190
    %v3299 = vpop.f32.mrf.mxu0
    %v3300 = vadd.f32 %v3004, %v3299
    %v3301 = vpop.f32.mrf.mxu0
    %v3302 = vadd.f32 %v3004, %v3301
    %3303 = vdwg.mxu0
    %3304 = vmatpush.bf16.msra.mxu0 0
    %3305 = vmatpush.bf16.msra.mxu0 0
    %3306 = vmatpush.bf16.msra.mxu0 0
    %3307 = vmatpush.bf16.msra.mxu0 0
    %3308 = vmatpush.bf16.msra.mxu0 0
    %3309 = vmatpush.bf16.msra.mxu0 0
    %3310 = vmatpush.bf16.msra.mxu0 %v3149
    %3311 = vmatpush.bf16.msra.mxu0 %v3133
    %3312 = vmatmul.bf16.gmra.mxu0 %v3190
    %v3313 = vpop.f32.mrf.mxu0
    %v3314 = vadd.f32 %v3005, %v3313
    %v3315 = vpop.f32.mrf.mxu0
    %v3316 = vadd.f32 %v3005, %v3315
    %3317 = vdwg.mxu0
    %3318 = vmatpush.bf16.msra.mxu0 0
    %3319 = vmatpush.bf16.msra.mxu0 0
    %3320 = vmatpush.bf16.msra.mxu0 0
    %3321 = vmatpush.bf16.msra.mxu0 0
    %3322 = vmatpush.bf16.msra.mxu0 0
    %3323 = vmatpush.bf16.msra.mxu0 0
    %3324 = vmatpush.bf16.msra.mxu0 %v3150
    %3325 = vmatpush.bf16.msra.mxu0 %v3134
    %3326 = vmatmul.bf16.gmra.mxu0 %v3190
    %v3327 = vpop.f32.mrf.mxu0
    %v3328 = vadd.f32 %v3006, %v3327
    %v3329 = vpop.f32.mrf.mxu0
    %v3330 = vadd.f32 %v3006, %v3329
    %3331 = vdwg.mxu0
    %3332 = vmatpush.bf16.msra.mxu0 0
    %3333 = vmatpush.bf16.msra.mxu0 0
    %3334 = vmatpush.bf16.msra.mxu0 0
    %3335 = vmatpush.bf16.msra.mxu0 0
    %3336 = vmatpush.bf16.msra.mxu0 0
    %3337 = vmatpush.bf16.msra.mxu0 0
    %3338 = vmatpush.bf16.msra.mxu0 %v3151
    %3339 = vmatpush.bf16.msra.mxu0 %v3135
    %3340 = vmatmul.bf16.gmra.mxu0 %v3190
    %v3341 = vpop.f32.mrf.mxu0
    %v3342 = vadd.f32 %v3007, %v3341
    %v3343 = vpop.f32.mrf.mxu0
    %v3344 = vadd.f32 %v3007, %v3343
    %3345 = vdwg.mxu0
    %3346 = vmatpush.bf16.msra.mxu0 0
    %3347 = vmatpush.bf16.msra.mxu0 0
    %3348 = vmatpush.bf16.msra.mxu0 0
    %3349 = vmatpush.bf16.msra.mxu0 0
    %3350 = vmatpush.bf16.msra.mxu0 0
    %3351 = vmatpush.bf16.msra.mxu0 0
    %3352 = vmatpush.bf16.msra.mxu0 %v3152
    %3353 = vmatpush.bf16.msra.mxu0 %v3136
    %3354 = vmatmul.bf16.gmra.mxu0 %v3190
    %v3355 = vpop.f32.mrf.mxu0
    %v3356 = vadd.f32 %v3008, %v3355
    %v3357 = vpop.f32.mrf.mxu0
    %v3358 = vadd.f32 %v3008, %v3357
    %3359 = vdwg.mxu0
    %3360 = vmatpush.bf16.msra.mxu0 0
    %3361 = vmatpush.bf16.msra.mxu0 0
    %3362 = vmatpush.bf16.msra.mxu0 0
    %3363 = vmatpush.bf16.msra.mxu0 0
    %3364 = vmatpush.bf16.msra.mxu0 0
    %3365 = vmatpush.bf16.msra.mxu0 0
    %3366 = vmatpush.bf16.msra.mxu0 %v3153
    %3367 = vmatpush.bf16.msra.mxu0 %v3137
    %3368 = vmatmul.bf16.gmra.mxu0 %v3190
    %v3369 = vpop.f32.mrf.mxu0
    %v3370 = vadd.f32 %v3009, %v3369
    %v3371 = vpop.f32.mrf.mxu0
    %v3372 = vadd.f32 %v3009, %v3371
    %3373 = vdwg.mxu0
    %3374 = vmatpush.bf16.msra.mxu0 0
    %3375 = vmatpush.bf16.msra.mxu0 0
    %3376 = vmatpush.bf16.msra.mxu0 0
    %3377 = vmatpush.bf16.msra.mxu0 0
    %3378 = vmatpush.bf16.msra.mxu0 0
    %3379 = vmatpush.bf16.msra.mxu0 0
    %3380 = vmatpush.bf16.msra.mxu0 %v3154
    %3381 = vmatpush.bf16.msra.mxu0 %v3138
    %3382 = vmatmul.bf16.gmra.mxu0 %v3190
    %v3383 = vpop.f32.mrf.mxu0
    %v3384 = vadd.f32 %v3010, %v3383
    %v3385 = vpop.f32.mrf.mxu0
    %v3386 = vadd.f32 %v3010, %v3385
    %3387 = vdwg.mxu0
    %3388 = vmatpush.bf16.msra.mxu0 0
    %3389 = vmatpush.bf16.msra.mxu0 0
    %3390 = vmatpush.bf16.msra.mxu0 0
    %3391 = vmatpush.bf16.msra.mxu0 0
    %3392 = vmatpush.bf16.msra.mxu0 0
    %3393 = vmatpush.bf16.msra.mxu0 0
    %3394 = vmatpush.bf16.msra.mxu0 %v3155
    %3395 = vmatpush.bf16.msra.mxu0 %v3139
    %3396 = vmatmul.bf16.gmra.mxu0 %v3190
    %v3397 = vpop.f32.mrf.mxu0
    %v3398 = vadd.f32 %v3011, %v3397
    %v3399 = vpop.f32.mrf.mxu0
    %v3400 = vadd.f32 %v3011, %v3399
    %3401 = vdwg.mxu0
    %3402 = vmatpush.bf16.msra.mxu0 0
    %3403 = vmatpush.bf16.msra.mxu0 0
    %3404 = vmatpush.bf16.msra.mxu0 0
    %3405 = vmatpush.bf16.msra.mxu0 0
    %3406 = vmatpush.bf16.msra.mxu0 0
    %3407 = vmatpush.bf16.msra.mxu0 0
    %3408 = vmatpush.bf16.msra.mxu0 %v3156
    %3409 = vmatpush.bf16.msra.mxu0 %v3140
    %3410 = vmatmul.bf16.gmra.mxu0 %v3190
    %v3411 = vpop.f32.mrf.mxu0
    %v3412 = vadd.f32 %v3012, %v3411
    %v3413 = vpop.f32.mrf.mxu0
    %v3414 = vadd.f32 %v3012, %v3413
    %3415 = vdwg.mxu0
    %v3416 = vmax.f32 %v3202, 0.0
    %v3417 = vmax.f32 %v3216, 0.0
    %v3418 = vmax.f32 %v3230, 0.0
    %v3419 = vmax.f32 %v3244, 0.0
    %v3420 = vmax.f32 %v3258, 0.0
    %v3421 = vmax.f32 %v3272, 0.0
    %v3422 = vmax.f32 %v3286, 0.0
    %v3423 = vmax.f32 %v3300, 0.0
    %v3424 = vmax.f32 %v3314, 0.0
    %v3425 = vmax.f32 %v3328, 0.0
    %v3426 = vmax.f32 %v3342, 0.0
    %v3427 = vmax.f32 %v3356, 0.0
    %v3428 = vmax.f32 %v3370, 0.0
    %v3429 = vmax.f32 %v3384, 0.0
    %v3430 = vmax.f32 %v3398, 0.0
    %v3431 = vmax.f32 %v3412, 0.0
    %v3432 = vmax.f32 %v3204, 0.0
    %v3433 = vmax.f32 %v3218, 0.0
    %v3434 = vmax.f32 %v3232, 0.0
    %v3435 = vmax.f32 %v3246, 0.0
    %v3436 = vmax.f32 %v3260, 0.0
    %v3437 = vmax.f32 %v3274, 0.0
    %v3438 = vmax.f32 %v3288, 0.0
    %v3439 = vmax.f32 %v3302, 0.0
    %v3440 = vmax.f32 %v3316, 0.0
    %v3441 = vmax.f32 %v3330, 0.0
    %v3442 = vmax.f32 %v3344, 0.0
    %v3443 = vmax.f32 %v3358, 0.0
    %v3444 = vmax.f32 %v3372, 0.0
    %v3445 = vmax.f32 %v3386, 0.0
    %v3446 = vmax.f32 %v3400, 0.0
    %v3447 = vmax.f32 %v3414, 0.0
    %s3448 = scalar_lea.vmem %s7, 1024
    %v3449 = vld [vmem:[%s3448] sm:$0xf]
    %v3450 = vld [vmem:[%s3448 + $0x4] sm:$0xf]
    %v3451 = vld [vmem:[%s3448 + $0x8] sm:$0xf]
    %v3452 = vld [vmem:[%s3448 + $0xc] sm:$0xf]
    %v3453 = vld [vmem:[%s3448 + $0x10] sm:$0xf]
    %v3454 = vld [vmem:[%s3448 + $0x14] sm:$0xf]
    %v3455 = vld [vmem:[%s3448 + $0x18] sm:$0xf]
    %v3456 = vld [vmem:[%s3448 + $0x1c] sm:$0xf]
    %v3457 = vld [vmem:[%s3448 + $0x20] sm:$0xf]
    %v3458 = vld [vmem:[%s3448 + $0x24] sm:$0xf]
    %v3459 = vld [vmem:[%s3448 + $0x28] sm:$0xf]
    %v3460 = vld [vmem:[%s3448 + $0x2c] sm:$0xf]
    %v3461 = vld [vmem:[%s3448 + $0x30] sm:$0xf]
    %v3462 = vld [vmem:[%s3448 + $0x34] sm:$0xf]
    %v3463 = vld [vmem:[%s3448 + $0x38] sm:$0xf]
    %v3464 = vld [vmem:[%s3448 + $0x3c] sm:$0xf]
    %v3465 = vld [vmem:[%s3448 + $0x40] sm:$0xf]
    %v3466 = vld [vmem:[%s3448 + $0x44] sm:$0xf]
    %v3467 = vld [vmem:[%s3448 + $0x48] sm:$0xf]
    %v3468 = vld [vmem:[%s3448 + $0x4c] sm:$0xf]
    %v3469 = vld [vmem:[%s3448 + $0x50] sm:$0xf]
    %v3470 = vld [vmem:[%s3448 + $0x54] sm:$0xf]
    %v3471 = vld [vmem:[%s3448 + $0x58] sm:$0xf]
    %v3472 = vld [vmem:[%s3448 + $0x5c] sm:$0xf]
    %v3473 = vld [vmem:[%s3448 + $0x60] sm:$0xf]
    %v3474 = vld [vmem:[%s3448 + $0x64] sm:$0xf]
    %v3475 = vld [vmem:[%s3448 + $0x68] sm:$0xf]
    %v3476 = vld [vmem:[%s3448 + $0x6c] sm:$0xf]
    %v3477 = vld [vmem:[%s3448 + $0x70] sm:$0xf]
    %v3478 = vld [vmem:[%s3448 + $0x74] sm:$0xf]
    %v3479 = vld [vmem:[%s3448 + $0x78] sm:$0xf]
    %v3480 = vld [vmem:[%s3448 + $0x7c] sm:$0xf]
    %v3481 = vld [vmem:[%s3448 + $0x80] sm:$0xf]
    %v3482 = vld [vmem:[%s3448 + $0x84] sm:$0xf]
    %v3483 = vld [vmem:[%s3448 + $0x88] sm:$0xf]
    %v3484 = vld [vmem:[%s3448 + $0x8c] sm:$0xf]
    %v3485 = vld [vmem:[%s3448 + $0x90] sm:$0xf]
    %v3486 = vld [vmem:[%s3448 + $0x94] sm:$0xf]
    %v3487 = vld [vmem:[%s3448 + $0x98] sm:$0xf]
    %v3488 = vld [vmem:[%s3448 + $0x9c] sm:$0xf]
    %v3489 = vld [vmem:[%s3448 + $0xa0] sm:$0xf]
    %v3490 = vld [vmem:[%s3448 + $0xa4] sm:$0xf]
    %v3491 = vld [vmem:[%s3448 + $0xa8] sm:$0xf]
    %v3492 = vld [vmem:[%s3448 + $0xac] sm:$0xf]
    %v3493 = vld [vmem:[%s3448 + $0xb0] sm:$0xf]
    %v3494 = vld [vmem:[%s3448 + $0xb4] sm:$0xf]
    %v3495 = vld [vmem:[%s3448 + $0xb8] sm:$0xf]
    %v3496 = vld [vmem:[%s3448 + $0xbc] sm:$0xf]
    %v3497 = vld [vmem:[%s3448 + $0xc0] sm:$0xf]
    %v3498 = vld [vmem:[%s3448 + $0xc4] sm:$0xf]
    %v3499 = vld [vmem:[%s3448 + $0xc8] sm:$0xf]
    %v3500 = vld [vmem:[%s3448 + $0xcc] sm:$0xf]
    %v3501 = vld [vmem:[%s3448 + $0xd0] sm:$0xf]
    %v3502 = vld [vmem:[%s3448 + $0xd4] sm:$0xf]
    %v3503 = vld [vmem:[%s3448 + $0xd8] sm:$0xf]
    %v3504 = vld [vmem:[%s3448 + $0xdc] sm:$0xf]
    %v3505 = vld [vmem:[%s3448 + $0xe0] sm:$0xf]
    %v3506 = vld [vmem:[%s3448 + $0xe4] sm:$0xf]
    %v3507 = vld [vmem:[%s3448 + $0xe8] sm:$0xf]
    %v3508 = vld [vmem:[%s3448 + $0xec] sm:$0xf]
    %v3509 = vld [vmem:[%s3448 + $0xf0] sm:$0xf]
    %v3510 = vld [vmem:[%s3448 + $0xf4] sm:$0xf]
    %v3511 = vld [vmem:[%s3448 + $0xf8] sm:$0xf]
    %v3512 = vld [vmem:[%s3448 + $0xfc] sm:$0xf]
    %v3513 = vld [vmem:[%s3448 + $0x100] sm:$0xf]
    %v3514 = vld [vmem:[%s3448 + $0x104] sm:$0xf]
    %v3515 = vld [vmem:[%s3448 + $0x108] sm:$0xf]
    %v3516 = vld [vmem:[%s3448 + $0x10c] sm:$0xf]
    %v3517 = vld [vmem:[%s3448 + $0x110] sm:$0xf]
    %v3518 = vld [vmem:[%s3448 + $0x114] sm:$0xf]
    %v3519 = vld [vmem:[%s3448 + $0x118] sm:$0xf]
    %v3520 = vld [vmem:[%s3448 + $0x11c] sm:$0xf]
    %v3521 = vld [vmem:[%s3448 + $0x120] sm:$0xf]
    %v3522 = vld [vmem:[%s3448 + $0x124] sm:$0xf]
    %v3523 = vld [vmem:[%s3448 + $0x128] sm:$0xf]
    %v3524 = vld [vmem:[%s3448 + $0x12c] sm:$0xf]
    %v3525 = vld [vmem:[%s3448 + $0x130] sm:$0xf]
    %v3526 = vld [vmem:[%s3448 + $0x134] sm:$0xf]
    %v3527 = vld [vmem:[%s3448 + $0x138] sm:$0xf]
    %v3528 = vld [vmem:[%s3448 + $0x13c] sm:$0xf]
    %v3529 = vld [vmem:[%s3448 + $0x140] sm:$0xf]
    %v3530 = vld [vmem:[%s3448 + $0x144] sm:$0xf]
    %v3531 = vld [vmem:[%s3448 + $0x148] sm:$0xf]
    %v3532 = vld [vmem:[%s3448 + $0x14c] sm:$0xf]
    %v3533 = vld [vmem:[%s3448 + $0x150] sm:$0xf]
    %v3534 = vld [vmem:[%s3448 + $0x154] sm:$0xf]
    %v3535 = vld [vmem:[%s3448 + $0x158] sm:$0xf]
    %v3536 = vld [vmem:[%s3448 + $0x15c] sm:$0xf]
    %v3537 = vld [vmem:[%s3448 + $0x160] sm:$0xf]
    %v3538 = vld [vmem:[%s3448 + $0x164] sm:$0xf]
    %v3539 = vld [vmem:[%s3448 + $0x168] sm:$0xf]
    %v3540 = vld [vmem:[%s3448 + $0x16c] sm:$0xf]
    %v3541 = vld [vmem:[%s3448 + $0x170] sm:$0xf]
    %v3542 = vld [vmem:[%s3448 + $0x174] sm:$0xf]
    %v3543 = vld [vmem:[%s3448 + $0x178] sm:$0xf]
    %v3544 = vld [vmem:[%s3448 + $0x17c] sm:$0xf]
    %v3545 = vld [vmem:[%s3448 + $0x180] sm:$0xf]
    %v3546 = vld [vmem:[%s3448 + $0x184] sm:$0xf]
    %v3547 = vld [vmem:[%s3448 + $0x188] sm:$0xf]
    %v3548 = vld [vmem:[%s3448 + $0x18c] sm:$0xf]
    %v3549 = vld [vmem:[%s3448 + $0x190] sm:$0xf]
    %v3550 = vld [vmem:[%s3448 + $0x194] sm:$0xf]
    %v3551 = vld [vmem:[%s3448 + $0x198] sm:$0xf]
    %v3552 = vld [vmem:[%s3448 + $0x19c] sm:$0xf]
    %v3553 = vld [vmem:[%s3448 + $0x1a0] sm:$0xf]
    %v3554 = vld [vmem:[%s3448 + $0x1a4] sm:$0xf]
    %v3555 = vld [vmem:[%s3448 + $0x1a8] sm:$0xf]
    %v3556 = vld [vmem:[%s3448 + $0x1ac] sm:$0xf]
    %v3557 = vld [vmem:[%s3448 + $0x1b0] sm:$0xf]
    %v3558 = vld [vmem:[%s3448 + $0x1b4] sm:$0xf]
    %v3559 = vld [vmem:[%s3448 + $0x1b8] sm:$0xf]
    %v3560 = vld [vmem:[%s3448 + $0x1bc] sm:$0xf]
    %v3561 = vld [vmem:[%s3448 + $0x1c0] sm:$0xf]
    %v3562 = vld [vmem:[%s3448 + $0x1c4] sm:$0xf]
    %v3563 = vld [vmem:[%s3448 + $0x1c8] sm:$0xf]
    %v3564 = vld [vmem:[%s3448 + $0x1cc] sm:$0xf]
    %v3565 = vld [vmem:[%s3448 + $0x1d0] sm:$0xf]
    %v3566 = vld [vmem:[%s3448 + $0x1d4] sm:$0xf]
    %v3567 = vld [vmem:[%s3448 + $0x1d8] sm:$0xf]
    %v3568 = vld [vmem:[%s3448 + $0x1dc] sm:$0xf]
    %v3569 = vld [vmem:[%s3448 + $0x1e0] sm:$0xf]
    %v3570 = vld [vmem:[%s3448 + $0x1e4] sm:$0xf]
    %v3571 = vld [vmem:[%s3448 + $0x1e8] sm:$0xf]
    %v3572 = vld [vmem:[%s3448 + $0x1ec] sm:$0xf]
    %v3573 = vld [vmem:[%s3448 + $0x1f0] sm:$0xf]
    %v3574 = vld [vmem:[%s3448 + $0x1f4] sm:$0xf]
    %v3575 = vld [vmem:[%s3448 + $0x1f8] sm:$0xf]
    %v3576 = vld [vmem:[%s3448 + $0x1fc] sm:$0xf]
    %v3577 = vld [vmem:[%s3448 + $0x200] sm:$0xf]
    %v3578 = vld [vmem:[%s3448 + $0x204] sm:$0xf]
    %v3579 = vld [vmem:[%s3448 + $0x208] sm:$0xf]
    %v3580 = vld [vmem:[%s3448 + $0x20c] sm:$0xf]
    %v3581 = vld [vmem:[%s3448 + $0x210] sm:$0xf]
    %v3582 = vld [vmem:[%s3448 + $0x214] sm:$0xf]
    %v3583 = vld [vmem:[%s3448 + $0x218] sm:$0xf]
    %v3584 = vld [vmem:[%s3448 + $0x21c] sm:$0xf]
    %v3585 = vld [vmem:[%s3448 + $0x220] sm:$0xf]
    %v3586 = vld [vmem:[%s3448 + $0x224] sm:$0xf]
    %v3587 = vld [vmem:[%s3448 + $0x228] sm:$0xf]
    %v3588 = vld [vmem:[%s3448 + $0x22c] sm:$0xf]
    %v3589 = vld [vmem:[%s3448 + $0x230] sm:$0xf]
    %v3590 = vld [vmem:[%s3448 + $0x234] sm:$0xf]
    %v3591 = vld [vmem:[%s3448 + $0x238] sm:$0xf]
    %v3592 = vld [vmem:[%s3448 + $0x23c] sm:$0xf]
    %v3593 = vld [vmem:[%s3448 + $0x240] sm:$0xf]
    %v3594 = vld [vmem:[%s3448 + $0x244] sm:$0xf]
    %v3595 = vld [vmem:[%s3448 + $0x248] sm:$0xf]
    %v3596 = vld [vmem:[%s3448 + $0x24c] sm:$0xf]
    %v3597 = vld [vmem:[%s3448 + $0x250] sm:$0xf]
    %v3598 = vld [vmem:[%s3448 + $0x254] sm:$0xf]
    %v3599 = vld [vmem:[%s3448 + $0x258] sm:$0xf]
    %v3600 = vld [vmem:[%s3448 + $0x25c] sm:$0xf]
    %v3601 = vld [vmem:[%s3448 + $0x260] sm:$0xf]
    %v3602 = vld [vmem:[%s3448 + $0x264] sm:$0xf]
    %v3603 = vld [vmem:[%s3448 + $0x268] sm:$0xf]
    %v3604 = vld [vmem:[%s3448 + $0x26c] sm:$0xf]
    %v3605 = vld [vmem:[%s3448 + $0x270] sm:$0xf]
    %v3606 = vld [vmem:[%s3448 + $0x274] sm:$0xf]
    %v3607 = vld [vmem:[%s3448 + $0x278] sm:$0xf]
    %v3608 = vld [vmem:[%s3448 + $0x27c] sm:$0xf]
    %v3609 = vld [vmem:[%s3448 + $0x280] sm:$0xf]
    %v3610 = vld [vmem:[%s3448 + $0x284] sm:$0xf]
    %v3611 = vld [vmem:[%s3448 + $0x288] sm:$0xf]
    %v3612 = vld [vmem:[%s3448 + $0x28c] sm:$0xf]
    %v3613 = vld [vmem:[%s3448 + $0x290] sm:$0xf]
    %v3614 = vld [vmem:[%s3448 + $0x294] sm:$0xf]
    %v3615 = vld [vmem:[%s3448 + $0x298] sm:$0xf]
    %v3616 = vld [vmem:[%s3448 + $0x29c] sm:$0xf]
    %v3617 = vld [vmem:[%s3448 + $0x2a0] sm:$0xf]
    %v3618 = vld [vmem:[%s3448 + $0x2a4] sm:$0xf]
    %v3619 = vld [vmem:[%s3448 + $0x2a8] sm:$0xf]
    %v3620 = vld [vmem:[%s3448 + $0x2ac] sm:$0xf]
    %v3621 = vld [vmem:[%s3448 + $0x2b0] sm:$0xf]
    %v3622 = vld [vmem:[%s3448 + $0x2b4] sm:$0xf]
    %v3623 = vld [vmem:[%s3448 + $0x2b8] sm:$0xf]
    %v3624 = vld [vmem:[%s3448 + $0x2bc] sm:$0xf]
    %v3625 = vld [vmem:[%s3448 + $0x2c0] sm:$0xf]
    %v3626 = vld [vmem:[%s3448 + $0x2c4] sm:$0xf]
    %v3627 = vld [vmem:[%s3448 + $0x2c8] sm:$0xf]
    %v3628 = vld [vmem:[%s3448 + $0x2cc] sm:$0xf]
    %v3629 = vld [vmem:[%s3448 + $0x2d0] sm:$0xf]
    %v3630 = vld [vmem:[%s3448 + $0x2d4] sm:$0xf]
    %v3631 = vld [vmem:[%s3448 + $0x2d8] sm:$0xf]
    %v3632 = vld [vmem:[%s3448 + $0x2dc] sm:$0xf]
    %v3633 = vld [vmem:[%s3448 + $0x2e0] sm:$0xf]
    %v3634 = vld [vmem:[%s3448 + $0x2e4] sm:$0xf]
    %v3635 = vld [vmem:[%s3448 + $0x2e8] sm:$0xf]
    %v3636 = vld [vmem:[%s3448 + $0x2ec] sm:$0xf]
    %v3637 = vld [vmem:[%s3448 + $0x2f0] sm:$0xf]
    %v3638 = vld [vmem:[%s3448 + $0x2f4] sm:$0xf]
    %v3639 = vld [vmem:[%s3448 + $0x2f8] sm:$0xf]
    %v3640 = vld [vmem:[%s3448 + $0x2fc] sm:$0xf]
    %v3641 = vld [vmem:[%s3448 + $0x300] sm:$0xf]
    %v3642 = vld [vmem:[%s3448 + $0x304] sm:$0xf]
    %v3643 = vld [vmem:[%s3448 + $0x308] sm:$0xf]
    %v3644 = vld [vmem:[%s3448 + $0x30c] sm:$0xf]
    %v3645 = vld [vmem:[%s3448 + $0x310] sm:$0xf]
    %v3646 = vld [vmem:[%s3448 + $0x314] sm:$0xf]
    %v3647 = vld [vmem:[%s3448 + $0x318] sm:$0xf]
    %v3648 = vld [vmem:[%s3448 + $0x31c] sm:$0xf]
    %v3649 = vld [vmem:[%s3448 + $0x320] sm:$0xf]
    %v3650 = vld [vmem:[%s3448 + $0x324] sm:$0xf]
    %v3651 = vld [vmem:[%s3448 + $0x328] sm:$0xf]
    %v3652 = vld [vmem:[%s3448 + $0x32c] sm:$0xf]
    %v3653 = vld [vmem:[%s3448 + $0x330] sm:$0xf]
    %v3654 = vld [vmem:[%s3448 + $0x334] sm:$0xf]
    %v3655 = vld [vmem:[%s3448 + $0x338] sm:$0xf]
    %v3656 = vld [vmem:[%s3448 + $0x33c] sm:$0xf]
    %v3657 = vld [vmem:[%s3448 + $0x340] sm:$0xf]
    %v3658 = vld [vmem:[%s3448 + $0x344] sm:$0xf]
    %v3659 = vld [vmem:[%s3448 + $0x348] sm:$0xf]
    %v3660 = vld [vmem:[%s3448 + $0x34c] sm:$0xf]
    %v3661 = vld [vmem:[%s3448 + $0x350] sm:$0xf]
    %v3662 = vld [vmem:[%s3448 + $0x354] sm:$0xf]
    %v3663 = vld [vmem:[%s3448 + $0x358] sm:$0xf]
    %v3664 = vld [vmem:[%s3448 + $0x35c] sm:$0xf]
    %v3665 = vld [vmem:[%s3448 + $0x360] sm:$0xf]
    %v3666 = vld [vmem:[%s3448 + $0x364] sm:$0xf]
    %v3667 = vld [vmem:[%s3448 + $0x368] sm:$0xf]
    %v3668 = vld [vmem:[%s3448 + $0x36c] sm:$0xf]
    %v3669 = vld [vmem:[%s3448 + $0x370] sm:$0xf]
    %v3670 = vld [vmem:[%s3448 + $0x374] sm:$0xf]
    %v3671 = vld [vmem:[%s3448 + $0x378] sm:$0xf]
    %v3672 = vld [vmem:[%s3448 + $0x37c] sm:$0xf]
    %v3673 = vld [vmem:[%s3448 + $0x380] sm:$0xf]
    %v3674 = vld [vmem:[%s3448 + $0x384] sm:$0xf]
    %v3675 = vld [vmem:[%s3448 + $0x388] sm:$0xf]
    %v3676 = vld [vmem:[%s3448 + $0x38c] sm:$0xf]
    %v3677 = vld [vmem:[%s3448 + $0x390] sm:$0xf]
    %v3678 = vld [vmem:[%s3448 + $0x394] sm:$0xf]
    %v3679 = vld [vmem:[%s3448 + $0x398] sm:$0xf]
    %v3680 = vld [vmem:[%s3448 + $0x39c] sm:$0xf]
    %v3681 = vld [vmem:[%s3448 + $0x3a0] sm:$0xf]
    %v3682 = vld [vmem:[%s3448 + $0x3a4] sm:$0xf]
    %v3683 = vld [vmem:[%s3448 + $0x3a8] sm:$0xf]
    %v3684 = vld [vmem:[%s3448 + $0x3ac] sm:$0xf]
    %v3685 = vld [vmem:[%s3448 + $0x3b0] sm:$0xf]
    %v3686 = vld [vmem:[%s3448 + $0x3b4] sm:$0xf]
    %v3687 = vld [vmem:[%s3448 + $0x3b8] sm:$0xf]
    %v3688 = vld [vmem:[%s3448 + $0x3bc] sm:$0xf]
    %v3689 = vld [vmem:[%s3448 + $0x3c0] sm:$0xf]
    %v3690 = vld [vmem:[%s3448 + $0x3c4] sm:$0xf]
    %v3691 = vld [vmem:[%s3448 + $0x3c8] sm:$0xf]
    %v3692 = vld [vmem:[%s3448 + $0x3cc] sm:$0xf]
    %v3693 = vld [vmem:[%s3448 + $0x3d0] sm:$0xf]
    %v3694 = vld [vmem:[%s3448 + $0x3d4] sm:$0xf]
    %v3695 = vld [vmem:[%s3448 + $0x3d8] sm:$0xf]
    %v3696 = vld [vmem:[%s3448 + $0x3dc] sm:$0xf]
    %v3697 = vld [vmem:[%s3448 + $0x3e0] sm:$0xf]
    %v3698 = vld [vmem:[%s3448 + $0x3e4] sm:$0xf]
    %v3699 = vld [vmem:[%s3448 + $0x3e8] sm:$0xf]
    %v3700 = vld [vmem:[%s3448 + $0x3ec] sm:$0xf]
    %v3701 = vld [vmem:[%s3448 + $0x3f0] sm:$0xf]
    %v3702 = vld [vmem:[%s3448 + $0x3f4] sm:$0xf]
    %v3703 = vld [vmem:[%s3448 + $0x3f8] sm:$0xf]
    %v3704 = vld [vmem:[%s3448 + $0x3fc] sm:$0xf]
    %v3705 = vpack.c.bf16 %v3432, %v3416
    %v3706 = vpack.c.bf16 %v3433, %v3417
    %v3707 = vpack.c.bf16 %v3434, %v3418
    %v3708 = vpack.c.bf16 %v3435, %v3419
    %v3709 = vpack.c.bf16 %v3436, %v3420
    %v3710 = vpack.c.bf16 %v3437, %v3421
    %v3711 = vpack.c.bf16 %v3438, %v3422
    %v3712 = vpack.c.bf16 %v3439, %v3423
    %v3713 = vpack.c.bf16 %v3440, %v3424
    %v3714 = vpack.c.bf16 %v3441, %v3425
    %v3715 = vpack.c.bf16 %v3442, %v3426
    %v3716 = vpack.c.bf16 %v3443, %v3427
    %v3717 = vpack.c.bf16 %v3444, %v3428
    %v3718 = vpack.c.bf16 %v3445, %v3429
    %v3719 = vpack.c.bf16 %v3446, %v3430
    %v3720 = vpack.c.bf16 %v3447, %v3431
    %s3721 = scalar_lea.vmem %s8, 1
    %v3722 = vld [vmem:[%s3721] sm:$0x1]
    %v3724 = vperm.slane %v3722, 0
    %v3982 = vunpack.c.l.b16 %v3449
    %v3983 = vunpack.c.l.b16 %v3450
    %v3984 = vunpack.c.l.b16 %v3451
    %v3985 = vunpack.c.l.b16 %v3452
    %v3986 = vunpack.c.l.b16 %v3453
    %v3987 = vunpack.c.l.b16 %v3454
    %v3988 = vunpack.c.l.b16 %v3455
    %v3989 = vunpack.c.l.b16 %v3456
    %v3990 = vunpack.c.l.b16 %v3457
    %v3991 = vunpack.c.l.b16 %v3458
    %v3992 = vunpack.c.l.b16 %v3459
    %v3993 = vunpack.c.l.b16 %v3460
    %v3994 = vunpack.c.l.b16 %v3461
    %v3995 = vunpack.c.l.b16 %v3462
    %v3996 = vunpack.c.l.b16 %v3463
    %v3997 = vunpack.c.l.b16 %v3464
    %v3998 = vunpack.c.l.b16 %v3465
    %v3999 = vunpack.c.l.b16 %v3466
    %v4000 = vunpack.c.l.b16 %v3467
    %v4001 = vunpack.c.l.b16 %v3468
    %v4002 = vunpack.c.l.b16 %v3469
    %v4003 = vunpack.c.l.b16 %v3470
    %v4004 = vunpack.c.l.b16 %v3471
    %v4005 = vunpack.c.l.b16 %v3472
    %v4006 = vunpack.c.l.b16 %v3473
    %v4007 = vunpack.c.l.b16 %v3474
    %v4008 = vunpack.c.l.b16 %v3475
    %v4009 = vunpack.c.l.b16 %v3476
    %v4010 = vunpack.c.l.b16 %v3477
    %v4011 = vunpack.c.l.b16 %v3478
    %v4012 = vunpack.c.l.b16 %v3479
    %v4013 = vunpack.c.l.b16 %v3480
    %v4014 = vunpack.c.l.b16 %v3481
    %v4015 = vunpack.c.l.b16 %v3482
    %v4016 = vunpack.c.l.b16 %v3483
    %v4017 = vunpack.c.l.b16 %v3484
    %v4018 = vunpack.c.l.b16 %v3485
    %v4019 = vunpack.c.l.b16 %v3486
    %v4020 = vunpack.c.l.b16 %v3487
    %v4021 = vunpack.c.l.b16 %v3488
    %v4022 = vunpack.c.l.b16 %v3489
    %v4023 = vunpack.c.l.b16 %v3490
    %v4024 = vunpack.c.l.b16 %v3491
    %v4025 = vunpack.c.l.b16 %v3492
    %v4026 = vunpack.c.l.b16 %v3493
    %v4027 = vunpack.c.l.b16 %v3494
    %v4028 = vunpack.c.l.b16 %v3495
    %v4029 = vunpack.c.l.b16 %v3496
    %v4030 = vunpack.c.l.b16 %v3497
    %v4031 = vunpack.c.l.b16 %v3498
    %v4032 = vunpack.c.l.b16 %v3499
    %v4033 = vunpack.c.l.b16 %v3500
    %v4034 = vunpack.c.l.b16 %v3501
    %v4035 = vunpack.c.l.b16 %v3502
    %v4036 = vunpack.c.l.b16 %v3503
    %v4037 = vunpack.c.l.b16 %v3504
    %v4038 = vunpack.c.l.b16 %v3505
    %v4039 = vunpack.c.l.b16 %v3506
    %v4040 = vunpack.c.l.b16 %v3507
    %v4041 = vunpack.c.l.b16 %v3508
    %v4042 = vunpack.c.l.b16 %v3509
    %v4043 = vunpack.c.l.b16 %v3510
    %v4044 = vunpack.c.l.b16 %v3511
    %v4045 = vunpack.c.l.b16 %v3512
    %v4046 = vunpack.c.l.b16 %v3513
    %v4047 = vunpack.c.l.b16 %v3514
    %v4048 = vunpack.c.l.b16 %v3515
    %v4049 = vunpack.c.l.b16 %v3516
    %v4050 = vunpack.c.l.b16 %v3517
    %v4051 = vunpack.c.l.b16 %v3518
    %v4052 = vunpack.c.l.b16 %v3519
    %v4053 = vunpack.c.l.b16 %v3520
    %v4054 = vunpack.c.l.b16 %v3521
    %v4055 = vunpack.c.l.b16 %v3522
    %v4056 = vunpack.c.l.b16 %v3523
    %v4057 = vunpack.c.l.b16 %v3524
    %v4058 = vunpack.c.l.b16 %v3525
    %v4059 = vunpack.c.l.b16 %v3526
    %v4060 = vunpack.c.l.b16 %v3527
    %v4061 = vunpack.c.l.b16 %v3528
    %v4062 = vunpack.c.l.b16 %v3529
    %v4063 = vunpack.c.l.b16 %v3530
    %v4064 = vunpack.c.l.b16 %v3531
    %v4065 = vunpack.c.l.b16 %v3532
    %v4066 = vunpack.c.l.b16 %v3533
    %v4067 = vunpack.c.l.b16 %v3534
    %v4068 = vunpack.c.l.b16 %v3535
    %v4069 = vunpack.c.l.b16 %v3536
    %v4070 = vunpack.c.l.b16 %v3537
    %v4071 = vunpack.c.l.b16 %v3538
    %v4072 = vunpack.c.l.b16 %v3539
    %v4073 = vunpack.c.l.b16 %v3540
    %v4074 = vunpack.c.l.b16 %v3541
    %v4075 = vunpack.c.l.b16 %v3542
    %v4076 = vunpack.c.l.b16 %v3543
    %v4077 = vunpack.c.l.b16 %v3544
    %v4078 = vunpack.c.l.b16 %v3545
    %v4079 = vunpack.c.l.b16 %v3546
    %v4080 = vunpack.c.l.b16 %v3547
    %v4081 = vunpack.c.l.b16 %v3548
    %v4082 = vunpack.c.l.b16 %v3549
    %v4083 = vunpack.c.l.b16 %v3550
    %v4084 = vunpack.c.l.b16 %v3551
    %v4085 = vunpack.c.l.b16 %v3552
    %v4086 = vunpack.c.l.b16 %v3553
    %v4087 = vunpack.c.l.b16 %v3554
    %v4088 = vunpack.c.l.b16 %v3555
    %v4089 = vunpack.c.l.b16 %v3556
    %v4090 = vunpack.c.l.b16 %v3557
    %v4091 = vunpack.c.l.b16 %v3558
    %v4092 = vunpack.c.l.b16 %v3559
    %v4093 = vunpack.c.l.b16 %v3560
    %v4094 = vunpack.c.l.b16 %v3561
    %v4095 = vunpack.c.l.b16 %v3562
    %v4096 = vunpack.c.l.b16 %v3563
    %v4097 = vunpack.c.l.b16 %v3564
    %v4098 = vunpack.c.l.b16 %v3565
    %v4099 = vunpack.c.l.b16 %v3566
    %v4100 = vunpack.c.l.b16 %v3567
    %v4101 = vunpack.c.l.b16 %v3568
    %v4102 = vunpack.c.l.b16 %v3569
    %v4103 = vunpack.c.l.b16 %v3570
    %v4104 = vunpack.c.l.b16 %v3571
    %v4105 = vunpack.c.l.b16 %v3572
    %v4106 = vunpack.c.l.b16 %v3573
    %v4107 = vunpack.c.l.b16 %v3574
    %v4108 = vunpack.c.l.b16 %v3575
    %v4109 = vunpack.c.l.b16 %v3576
    %v4110 = vunpack.c.l.b16 %v3577
    %v4111 = vunpack.c.l.b16 %v3578
    %v4112 = vunpack.c.l.b16 %v3579
    %v4113 = vunpack.c.l.b16 %v3580
    %v4114 = vunpack.c.l.b16 %v3581
    %v4115 = vunpack.c.l.b16 %v3582
    %v4116 = vunpack.c.l.b16 %v3583
    %v4117 = vunpack.c.l.b16 %v3584
    %v4118 = vunpack.c.l.b16 %v3585
    %v4119 = vunpack.c.l.b16 %v3586
    %v4120 = vunpack.c.l.b16 %v3587
    %v4121 = vunpack.c.l.b16 %v3588
    %v4122 = vunpack.c.l.b16 %v3589
    %v4123 = vunpack.c.l.b16 %v3590
    %v4124 = vunpack.c.l.b16 %v3591
    %v4125 = vunpack.c.l.b16 %v3592
    %v4126 = vunpack.c.l.b16 %v3593
    %v4127 = vunpack.c.l.b16 %v3594
    %v4128 = vunpack.c.l.b16 %v3595
    %v4129 = vunpack.c.l.b16 %v3596
    %v4130 = vunpack.c.l.b16 %v3597
    %v4131 = vunpack.c.l.b16 %v3598
    %v4132 = vunpack.c.l.b16 %v3599
    %v4133 = vunpack.c.l.b16 %v3600
    %v4134 = vunpack.c.l.b16 %v3601
    %v4135 = vunpack.c.l.b16 %v3602
    %v4136 = vunpack.c.l.b16 %v3603
    %v4137 = vunpack.c.l.b16 %v3604
    %v4138 = vunpack.c.l.b16 %v3605
    %v4139 = vunpack.c.l.b16 %v3606
    %v4140 = vunpack.c.l.b16 %v3607
    %v4141 = vunpack.c.l.b16 %v3608
    %v4142 = vunpack.c.l.b16 %v3609
    %v4143 = vunpack.c.l.b16 %v3610
    %v4144 = vunpack.c.l.b16 %v3611
    %v4145 = vunpack.c.l.b16 %v3612
    %v4146 = vunpack.c.l.b16 %v3613
    %v4147 = vunpack.c.l.b16 %v3614
    %v4148 = vunpack.c.l.b16 %v3615
    %v4149 = vunpack.c.l.b16 %v3616
    %v4150 = vunpack.c.l.b16 %v3617
    %v4151 = vunpack.c.l.b16 %v3618
    %v4152 = vunpack.c.l.b16 %v3619
    %v4153 = vunpack.c.l.b16 %v3620
    %v4154 = vunpack.c.l.b16 %v3621
    %v4155 = vunpack.c.l.b16 %v3622
    %v4156 = vunpack.c.l.b16 %v3623
    %v4157 = vunpack.c.l.b16 %v3624
    %v4158 = vunpack.c.l.b16 %v3625
    %v4159 = vunpack.c.l.b16 %v3626
    %v4160 = vunpack.c.l.b16 %v3627
    %v4161 = vunpack.c.l.b16 %v3628
    %v4162 = vunpack.c.l.b16 %v3629
    %v4163 = vunpack.c.l.b16 %v3630
    %v4164 = vunpack.c.l.b16 %v3631
    %v4165 = vunpack.c.l.b16 %v3632
    %v4166 = vunpack.c.l.b16 %v3633
    %v4167 = vunpack.c.l.b16 %v3634
    %v4168 = vunpack.c.l.b16 %v3635
    %v4169 = vunpack.c.l.b16 %v3636
    %v4170 = vunpack.c.l.b16 %v3637
    %v4171 = vunpack.c.l.b16 %v3638
    %v4172 = vunpack.c.l.b16 %v3639
    %v4173 = vunpack.c.l.b16 %v3640
    %v4174 = vunpack.c.l.b16 %v3641
    %v4175 = vunpack.c.l.b16 %v3642
    %v4176 = vunpack.c.l.b16 %v3643
    %v4177 = vunpack.c.l.b16 %v3644
    %v4178 = vunpack.c.l.b16 %v3645
    %v4179 = vunpack.c.l.b16 %v3646
    %v4180 = vunpack.c.l.b16 %v3647
    %v4181 = vunpack.c.l.b16 %v3648
    %v4182 = vunpack.c.l.b16 %v3649
    %v4183 = vunpack.c.l.b16 %v3650
    %v4184 = vunpack.c.l.b16 %v3651
    %v4185 = vunpack.c.l.b16 %v3652
    %v4186 = vunpack.c.l.b16 %v3653
    %v4187 = vunpack.c.l.b16 %v3654
    %v4188 = vunpack.c.l.b16 %v3655
    %v4189 = vunpack.c.l.b16 %v3656
    %v4190 = vunpack.c.l.b16 %v3657
    %v4191 = vunpack.c.l.b16 %v3658
    %v4192 = vunpack.c.l.b16 %v3659
    %v4193 = vunpack.c.l.b16 %v3660
    %v4194 = vunpack.c.l.b16 %v3661
    %v4195 = vunpack.c.l.b16 %v3662
    %v4196 = vunpack.c.l.b16 %v3663
    %v4197 = vunpack.c.l.b16 %v3664
    %v4198 = vunpack.c.l.b16 %v3665
    %v4199 = vunpack.c.l.b16 %v3666
    %v4200 = vunpack.c.l.b16 %v3667
    %v4201 = vunpack.c.l.b16 %v3668
    %v4202 = vunpack.c.l.b16 %v3669
    %v4203 = vunpack.c.l.b16 %v3670
    %v4204 = vunpack.c.l.b16 %v3671
    %v4205 = vunpack.c.l.b16 %v3672
    %v4206 = vunpack.c.l.b16 %v3673
    %v4207 = vunpack.c.l.b16 %v3674
    %v4208 = vunpack.c.l.b16 %v3675
    %v4209 = vunpack.c.l.b16 %v3676
    %v4210 = vunpack.c.l.b16 %v3677
    %v4211 = vunpack.c.l.b16 %v3678
    %v4212 = vunpack.c.l.b16 %v3679
    %v4213 = vunpack.c.l.b16 %v3680
    %v4214 = vunpack.c.l.b16 %v3681
    %v4215 = vunpack.c.l.b16 %v3682
    %v4216 = vunpack.c.l.b16 %v3683
    %v4217 = vunpack.c.l.b16 %v3684
    %v4218 = vunpack.c.l.b16 %v3685
    %v4219 = vunpack.c.l.b16 %v3686
    %v4220 = vunpack.c.l.b16 %v3687
    %v4221 = vunpack.c.l.b16 %v3688
    %v4222 = vunpack.c.l.b16 %v3689
    %v4223 = vunpack.c.l.b16 %v3690
    %v4224 = vunpack.c.l.b16 %v3691
    %v4225 = vunpack.c.l.b16 %v3692
    %v4226 = vunpack.c.l.b16 %v3693
    %v4227 = vunpack.c.l.b16 %v3694
    %v4228 = vunpack.c.l.b16 %v3695
    %v4229 = vunpack.c.l.b16 %v3696
    %v4230 = vunpack.c.l.b16 %v3697
    %v4231 = vunpack.c.l.b16 %v3698
    %v4232 = vunpack.c.l.b16 %v3699
    %v4233 = vunpack.c.l.b16 %v3700
    %v4234 = vunpack.c.l.b16 %v3701
    %v4235 = vunpack.c.l.b16 %v3702
    %v4236 = vunpack.c.l.b16 %v3703
    %v4237 = vunpack.c.l.b16 %v3704
    %v4238 = vpack.c.b16 %v3983, %v3982
    %v4239 = vpack.c.b16 %v3985, %v3984
    %v4240 = vpack.c.b16 %v3987, %v3986
    %v4241 = vpack.c.b16 %v3989, %v3988
    %v4242 = vpack.c.b16 %v3991, %v3990
    %v4243 = vpack.c.b16 %v3993, %v3992
    %v4244 = vpack.c.b16 %v3995, %v3994
    %v4245 = vpack.c.b16 %v3997, %v3996
    %v4246 = vpack.c.b16 %v3999, %v3998
    %v4247 = vpack.c.b16 %v4001, %v4000
    %v4248 = vpack.c.b16 %v4003, %v4002
    %v4249 = vpack.c.b16 %v4005, %v4004
    %v4250 = vpack.c.b16 %v4007, %v4006
    %v4251 = vpack.c.b16 %v4009, %v4008
    %v4252 = vpack.c.b16 %v4011, %v4010
    %v4253 = vpack.c.b16 %v4013, %v4012
    %v4254 = vpack.c.b16 %v4015, %v4014
    %v4255 = vpack.c.b16 %v4017, %v4016
    %v4256 = vpack.c.b16 %v4019, %v4018
    %v4257 = vpack.c.b16 %v4021, %v4020
    %v4258 = vpack.c.b16 %v4023, %v4022
    %v4259 = vpack.c.b16 %v4025, %v4024
    %v4260 = vpack.c.b16 %v4027, %v4026
    %v4261 = vpack.c.b16 %v4029, %v4028
    %v4262 = vpack.c.b16 %v4031, %v4030
    %v4263 = vpack.c.b16 %v4033, %v4032
    %v4264 = vpack.c.b16 %v4035, %v4034
    %v4265 = vpack.c.b16 %v4037, %v4036
    %v4266 = vpack.c.b16 %v4039, %v4038
    %v4267 = vpack.c.b16 %v4041, %v4040
    %v4268 = vpack.c.b16 %v4043, %v4042
    %v4269 = vpack.c.b16 %v4045, %v4044
    %v4270 = vpack.c.b16 %v4047, %v4046
    %v4271 = vpack.c.b16 %v4049, %v4048
    %v4272 = vpack.c.b16 %v4051, %v4050
    %v4273 = vpack.c.b16 %v4053, %v4052
    %v4274 = vpack.c.b16 %v4055, %v4054
    %v4275 = vpack.c.b16 %v4057, %v4056
    %v4276 = vpack.c.b16 %v4059, %v4058
    %v4277 = vpack.c.b16 %v4061, %v4060
    %v4278 = vpack.c.b16 %v4063, %v4062
    %v4279 = vpack.c.b16 %v4065, %v4064
    %v4280 = vpack.c.b16 %v4067, %v4066
    %v4281 = vpack.c.b16 %v4069, %v4068
    %v4282 = vpack.c.b16 %v4071, %v4070
    %v4283 = vpack.c.b16 %v4073, %v4072
    %v4284 = vpack.c.b16 %v4075, %v4074
    %v4285 = vpack.c.b16 %v4077, %v4076
    %v4286 = vpack.c.b16 %v4079, %v4078
    %v4287 = vpack.c.b16 %v4081, %v4080
    %v4288 = vpack.c.b16 %v4083, %v4082
    %v4289 = vpack.c.b16 %v4085, %v4084
    %v4290 = vpack.c.b16 %v4087, %v4086
    %v4291 = vpack.c.b16 %v4089, %v4088
    %v4292 = vpack.c.b16 %v4091, %v4090
    %v4293 = vpack.c.b16 %v4093, %v4092
    %v4294 = vpack.c.b16 %v4095, %v4094
    %v4295 = vpack.c.b16 %v4097, %v4096
    %v4296 = vpack.c.b16 %v4099, %v4098
    %v4297 = vpack.c.b16 %v4101, %v4100
    %v4298 = vpack.c.b16 %v4103, %v4102
    %v4299 = vpack.c.b16 %v4105, %v4104
    %v4300 = vpack.c.b16 %v4107, %v4106
    %v4301 = vpack.c.b16 %v4109, %v4108
    %v4302 = vpack.c.b16 %v4111, %v4110
    %v4303 = vpack.c.b16 %v4113, %v4112
    %v4304 = vpack.c.b16 %v4115, %v4114
    %v4305 = vpack.c.b16 %v4117, %v4116
    %v4306 = vpack.c.b16 %v4119, %v4118
    %v4307 = vpack.c.b16 %v4121, %v4120
    %v4308 = vpack.c.b16 %v4123, %v4122
    %v4309 = vpack.c.b16 %v4125, %v4124
    %v4310 = vpack.c.b16 %v4127, %v4126
    %v4311 = vpack.c.b16 %v4129, %v4128
    %v4312 = vpack.c.b16 %v4131, %v4130
    %v4313 = vpack.c.b16 %v4133, %v4132
    %v4314 = vpack.c.b16 %v4135, %v4134
    %v4315 = vpack.c.b16 %v4137, %v4136
    %v4316 = vpack.c.b16 %v4139, %v4138
    %v4317 = vpack.c.b16 %v4141, %v4140
    %v4318 = vpack.c.b16 %v4143, %v4142
    %v4319 = vpack.c.b16 %v4145, %v4144
    %v4320 = vpack.c.b16 %v4147, %v4146
    %v4321 = vpack.c.b16 %v4149, %v4148
    %v4322 = vpack.c.b16 %v4151, %v4150
    %v4323 = vpack.c.b16 %v4153, %v4152
    %v4324 = vpack.c.b16 %v4155, %v4154
    %v4325 = vpack.c.b16 %v4157, %v4156
    %v4326 = vpack.c.b16 %v4159, %v4158
    %v4327 = vpack.c.b16 %v4161, %v4160
    %v4328 = vpack.c.b16 %v4163, %v4162
    %v4329 = vpack.c.b16 %v4165, %v4164
    %v4330 = vpack.c.b16 %v4167, %v4166
    %v4331 = vpack.c.b16 %v4169, %v4168
    %v4332 = vpack.c.b16 %v4171, %v4170
    %v4333 = vpack.c.b16 %v4173, %v4172
    %v4334 = vpack.c.b16 %v4175, %v4174
    %v4335 = vpack.c.b16 %v4177, %v4176
    %v4336 = vpack.c.b16 %v4179, %v4178
    %v4337 = vpack.c.b16 %v4181, %v4180
    %v4338 = vpack.c.b16 %v4183, %v4182
    %v4339 = vpack.c.b16 %v4185, %v4184
    %v4340 = vpack.c.b16 %v4187, %v4186
    %v4341 = vpack.c.b16 %v4189, %v4188
    %v4342 = vpack.c.b16 %v4191, %v4190
    %v4343 = vpack.c.b16 %v4193, %v4192
    %v4344 = vpack.c.b16 %v4195, %v4194
    %v4345 = vpack.c.b16 %v4197, %v4196
    %v4346 = vpack.c.b16 %v4199, %v4198
    %v4347 = vpack.c.b16 %v4201, %v4200
    %v4348 = vpack.c.b16 %v4203, %v4202
    %v4349 = vpack.c.b16 %v4205, %v4204
    %v4350 = vpack.c.b16 %v4207, %v4206
    %v4351 = vpack.c.b16 %v4209, %v4208
    %v4352 = vpack.c.b16 %v4211, %v4210
    %v4353 = vpack.c.b16 %v4213, %v4212
    %v4354 = vpack.c.b16 %v4215, %v4214
    %v4355 = vpack.c.b16 %v4217, %v4216
    %v4356 = vpack.c.b16 %v4219, %v4218
    %v4357 = vpack.c.b16 %v4221, %v4220
    %v4358 = vpack.c.b16 %v4223, %v4222
    %v4359 = vpack.c.b16 %v4225, %v4224
    %v4360 = vpack.c.b16 %v4227, %v4226
    %v4361 = vpack.c.b16 %v4229, %v4228
    %v4362 = vpack.c.b16 %v4231, %v4230
    %v4363 = vpack.c.b16 %v4233, %v4232
    %v4364 = vpack.c.b16 %v4235, %v4234
    %v4365 = vpack.c.b16 %v4237, %v4236
    %4494 = vmatpush.bf16.msra.mxu0 %v4245
    %4495 = vmatpush.bf16.msra.mxu0 %v4244
    %4496 = vmatpush.bf16.msra.mxu0 %v4243
    %4497 = vmatpush.bf16.msra.mxu0 %v4242
    %4498 = vmatpush.bf16.msra.mxu0 %v4241
    %4499 = vmatpush.bf16.msra.mxu0 %v4240
    %4500 = vmatpush.bf16.msra.mxu0 %v4239
    %4501 = vmatpush.bf16.msra.mxu0 %v4238
    %4502 = vmatmul.bf16.gmra.mxu0 %v3705
    %v4503 = vpop.f32.mrf.mxu0
    %v4504 = vadd.f32 %v3724, %v4503
    %v4505 = vpop.f32.mrf.mxu0
    %v4506 = vadd.f32 %v3724, %v4505
    %4507 = vdwg.mxu0
    %4508 = vmatpush.bf16.msra.mxu0 %v4253
    %4509 = vmatpush.bf16.msra.mxu0 %v4252
    %4510 = vmatpush.bf16.msra.mxu0 %v4251
    %4511 = vmatpush.bf16.msra.mxu0 %v4250
    %4512 = vmatpush.bf16.msra.mxu0 %v4249
    %4513 = vmatpush.bf16.msra.mxu0 %v4248
    %4514 = vmatpush.bf16.msra.mxu0 %v4247
    %4515 = vmatpush.bf16.msra.mxu0 %v4246
    %4516 = vmatmul.bf16.gmra.mxu0 %v3706
    %v4517 = vpop.f32.mrf.mxu0
    %v4518 = vadd.f32 %v4504, %v4517
    %v4519 = vpop.f32.mrf.mxu0
    %v4520 = vadd.f32 %v4506, %v4519
    %4521 = vdwg.mxu0
    %4522 = vmatpush.bf16.msra.mxu0 %v4261
    %4523 = vmatpush.bf16.msra.mxu0 %v4260
    %4524 = vmatpush.bf16.msra.mxu0 %v4259
    %4525 = vmatpush.bf16.msra.mxu0 %v4258
    %4526 = vmatpush.bf16.msra.mxu0 %v4257
    %4527 = vmatpush.bf16.msra.mxu0 %v4256
    %4528 = vmatpush.bf16.msra.mxu0 %v4255
    %4529 = vmatpush.bf16.msra.mxu0 %v4254
    %4530 = vmatmul.bf16.gmra.mxu0 %v3707
    %v4531 = vpop.f32.mrf.mxu0
    %v4532 = vadd.f32 %v4518, %v4531
    %v4533 = vpop.f32.mrf.mxu0
    %v4534 = vadd.f32 %v4520, %v4533
    %4535 = vdwg.mxu0
    %4536 = vmatpush.bf16.msra.mxu0 %v4269
    %4537 = vmatpush.bf16.msra.mxu0 %v4268
    %4538 = vmatpush.bf16.msra.mxu0 %v4267
    %4539 = vmatpush.bf16.msra.mxu0 %v4266
    %4540 = vmatpush.bf16.msra.mxu0 %v4265
    %4541 = vmatpush.bf16.msra.mxu0 %v4264
    %4542 = vmatpush.bf16.msra.mxu0 %v4263
    %4543 = vmatpush.bf16.msra.mxu0 %v4262
    %4544 = vmatmul.bf16.gmra.mxu0 %v3708
    %v4545 = vpop.f32.mrf.mxu0
    %v4546 = vadd.f32 %v4532, %v4545
    %v4547 = vpop.f32.mrf.mxu0
    %v4548 = vadd.f32 %v4534, %v4547
    %4549 = vdwg.mxu0
    %4550 = vmatpush.bf16.msra.mxu0 %v4277
    %4551 = vmatpush.bf16.msra.mxu0 %v4276
    %4552 = vmatpush.bf16.msra.mxu0 %v4275
    %4553 = vmatpush.bf16.msra.mxu0 %v4274
    %4554 = vmatpush.bf16.msra.mxu0 %v4273
    %4555 = vmatpush.bf16.msra.mxu0 %v4272
    %4556 = vmatpush.bf16.msra.mxu0 %v4271
    %4557 = vmatpush.bf16.msra.mxu0 %v4270
    %4558 = vmatmul.bf16.gmra.mxu0 %v3709
    %v4559 = vpop.f32.mrf.mxu0
    %v4560 = vadd.f32 %v4546, %v4559
    %v4561 = vpop.f32.mrf.mxu0
    %v4562 = vadd.f32 %v4548, %v4561
    %4563 = vdwg.mxu0
    %4564 = vmatpush.bf16.msra.mxu0 %v4285
    %4565 = vmatpush.bf16.msra.mxu0 %v4284
    %4566 = vmatpush.bf16.msra.mxu0 %v4283
    %4567 = vmatpush.bf16.msra.mxu0 %v4282
    %4568 = vmatpush.bf16.msra.mxu0 %v4281
    %4569 = vmatpush.bf16.msra.mxu0 %v4280
    %4570 = vmatpush.bf16.msra.mxu0 %v4279
    %4571 = vmatpush.bf16.msra.mxu0 %v4278
    %4572 = vmatmul.bf16.gmra.mxu0 %v3710
    %v4573 = vpop.f32.mrf.mxu0
    %v4574 = vadd.f32 %v4560, %v4573
    %v4575 = vpop.f32.mrf.mxu0
    %v4576 = vadd.f32 %v4562, %v4575
    %4577 = vdwg.mxu0
    %4578 = vmatpush.bf16.msra.mxu0 %v4293
    %4579 = vmatpush.bf16.msra.mxu0 %v4292
    %4580 = vmatpush.bf16.msra.mxu0 %v4291
    %4581 = vmatpush.bf16.msra.mxu0 %v4290
    %4582 = vmatpush.bf16.msra.mxu0 %v4289
    %4583 = vmatpush.bf16.msra.mxu0 %v4288
    %4584 = vmatpush.bf16.msra.mxu0 %v4287
    %4585 = vmatpush.bf16.msra.mxu0 %v4286
    %4586 = vmatmul.bf16.gmra.mxu0 %v3711
    %v4587 = vpop.f32.mrf.mxu0
    %v4588 = vadd.f32 %v4574, %v4587
    %v4589 = vpop.f32.mrf.mxu0
    %v4590 = vadd.f32 %v4576, %v4589
    %4591 = vdwg.mxu0
    %4592 = vmatpush.bf16.msra.mxu0 %v4301
    %4593 = vmatpush.bf16.msra.mxu0 %v4300
    %4594 = vmatpush.bf16.msra.mxu0 %v4299
    %4595 = vmatpush.bf16.msra.mxu0 %v4298
    %4596 = vmatpush.bf16.msra.mxu0 %v4297
    %4597 = vmatpush.bf16.msra.mxu0 %v4296
    %4598 = vmatpush.bf16.msra.mxu0 %v4295
    %4599 = vmatpush.bf16.msra.mxu0 %v4294
    %4600 = vmatmul.bf16.gmra.mxu0 %v3712
    %v4601 = vpop.f32.mrf.mxu0
    %v4602 = vadd.f32 %v4588, %v4601
    %v4603 = vpop.f32.mrf.mxu0
    %v4604 = vadd.f32 %v4590, %v4603
    %4605 = vdwg.mxu0
    %4606 = vmatpush.bf16.msra.mxu0 %v4309
    %4607 = vmatpush.bf16.msra.mxu0 %v4308
    %4608 = vmatpush.bf16.msra.mxu0 %v4307
    %4609 = vmatpush.bf16.msra.mxu0 %v4306
    %4610 = vmatpush.bf16.msra.mxu0 %v4305
    %4611 = vmatpush.bf16.msra.mxu0 %v4304
    %4612 = vmatpush.bf16.msra.mxu0 %v4303
    %4613 = vmatpush.bf16.msra.mxu0 %v4302
    %4614 = vmatmul.bf16.gmra.mxu0 %v3713
    %v4615 = vpop.f32.mrf.mxu0
    %v4616 = vadd.f32 %v4602, %v4615
    %v4617 = vpop.f32.mrf.mxu0
    %v4618 = vadd.f32 %v4604, %v4617
    %4619 = vdwg.mxu0
    %4620 = vmatpush.bf16.msra.mxu0 %v4317
    %4621 = vmatpush.bf16.msra.mxu0 %v4316
    %4622 = vmatpush.bf16.msra.mxu0 %v4315
    %4623 = vmatpush.bf16.msra.mxu0 %v4314
    %4624 = vmatpush.bf16.msra.mxu0 %v4313
    %4625 = vmatpush.bf16.msra.mxu0 %v4312
    %4626 = vmatpush.bf16.msra.mxu0 %v4311
    %4627 = vmatpush.bf16.msra.mxu0 %v4310
    %4628 = vmatmul.bf16.gmra.mxu0 %v3714
    %v4629 = vpop.f32.mrf.mxu0
    %v4630 = vadd.f32 %v4616, %v4629
    %v4631 = vpop.f32.mrf.mxu0
    %v4632 = vadd.f32 %v4618, %v4631
    %4633 = vdwg.mxu0
    %4634 = vmatpush.bf16.msra.mxu0 %v4325
    %4635 = vmatpush.bf16.msra.mxu0 %v4324
    %4636 = vmatpush.bf16.msra.mxu0 %v4323
    %4637 = vmatpush.bf16.msra.mxu0 %v4322
    %4638 = vmatpush.bf16.msra.mxu0 %v4321
    %4639 = vmatpush.bf16.msra.mxu0 %v4320
    %4640 = vmatpush.bf16.msra.mxu0 %v4319
    %4641 = vmatpush.bf16.msra.mxu0 %v4318
    %4642 = vmatmul.bf16.gmra.mxu0 %v3715
    %v4643 = vpop.f32.mrf.mxu0
    %v4644 = vadd.f32 %v4630, %v4643
    %v4645 = vpop.f32.mrf.mxu0
    %v4646 = vadd.f32 %v4632, %v4645
    %4647 = vdwg.mxu0
    %4648 = vmatpush.bf16.msra.mxu0 %v4333
    %4649 = vmatpush.bf16.msra.mxu0 %v4332
    %4650 = vmatpush.bf16.msra.mxu0 %v4331
    %4651 = vmatpush.bf16.msra.mxu0 %v4330
    %4652 = vmatpush.bf16.msra.mxu0 %v4329
    %4653 = vmatpush.bf16.msra.mxu0 %v4328
    %4654 = vmatpush.bf16.msra.mxu0 %v4327
    %4655 = vmatpush.bf16.msra.mxu0 %v4326
    %4656 = vmatmul.bf16.gmra.mxu0 %v3716
    %v4657 = vpop.f32.mrf.mxu0
    %v4658 = vadd.f32 %v4644, %v4657
    %v4659 = vpop.f32.mrf.mxu0
    %v4660 = vadd.f32 %v4646, %v4659
    %4661 = vdwg.mxu0
    %4662 = vmatpush.bf16.msra.mxu0 %v4341
    %4663 = vmatpush.bf16.msra.mxu0 %v4340
    %4664 = vmatpush.bf16.msra.mxu0 %v4339
    %4665 = vmatpush.bf16.msra.mxu0 %v4338
    %4666 = vmatpush.bf16.msra.mxu0 %v4337
    %4667 = vmatpush.bf16.msra.mxu0 %v4336
    %4668 = vmatpush.bf16.msra.mxu0 %v4335
    %4669 = vmatpush.bf16.msra.mxu0 %v4334
    %4670 = vmatmul.bf16.gmra.mxu0 %v3717
    %v4671 = vpop.f32.mrf.mxu0
    %v4672 = vadd.f32 %v4658, %v4671
    %v4673 = vpop.f32.mrf.mxu0
    %v4674 = vadd.f32 %v4660, %v4673
    %4675 = vdwg.mxu0
    %4676 = vmatpush.bf16.msra.mxu0 %v4349
    %4677 = vmatpush.bf16.msra.mxu0 %v4348
    %4678 = vmatpush.bf16.msra.mxu0 %v4347
    %4679 = vmatpush.bf16.msra.mxu0 %v4346
    %4680 = vmatpush.bf16.msra.mxu0 %v4345
    %4681 = vmatpush.bf16.msra.mxu0 %v4344
    %4682 = vmatpush.bf16.msra.mxu0 %v4343
    %4683 = vmatpush.bf16.msra.mxu0 %v4342
    %4684 = vmatmul.bf16.gmra.mxu0 %v3718
    %v4685 = vpop.f32.mrf.mxu0
    %v4686 = vadd.f32 %v4672, %v4685
    %v4687 = vpop.f32.mrf.mxu0
    %v4688 = vadd.f32 %v4674, %v4687
    %4689 = vdwg.mxu0
    %4690 = vmatpush.bf16.msra.mxu0 %v4357
    %4691 = vmatpush.bf16.msra.mxu0 %v4356
    %4692 = vmatpush.bf16.msra.mxu0 %v4355
    %4693 = vmatpush.bf16.msra.mxu0 %v4354
    %4694 = vmatpush.bf16.msra.mxu0 %v4353
    %4695 = vmatpush.bf16.msra.mxu0 %v4352
    %4696 = vmatpush.bf16.msra.mxu0 %v4351
    %4697 = vmatpush.bf16.msra.mxu0 %v4350
    %4698 = vmatmul.bf16.gmra.mxu0 %v3719
    %v4699 = vpop.f32.mrf.mxu0
    %v4700 = vadd.f32 %v4686, %v4699
    %v4701 = vpop.f32.mrf.mxu0
    %v4702 = vadd.f32 %v4688, %v4701
    %4703 = vdwg.mxu0
    %4704 = vmatpush.bf16.msra.mxu0 %v4365
    %4705 = vmatpush.bf16.msra.mxu0 %v4364
    %4706 = vmatpush.bf16.msra.mxu0 %v4363
    %4707 = vmatpush.bf16.msra.mxu0 %v4362
    %4708 = vmatpush.bf16.msra.mxu0 %v4361
    %4709 = vmatpush.bf16.msra.mxu0 %v4360
    %4710 = vmatpush.bf16.msra.mxu0 %v4359
    %4711 = vmatpush.bf16.msra.mxu0 %v4358
    %4712 = vmatmul.bf16.gmra.mxu0 %v3720
    %v4713 = vpop.f32.mrf.mxu0
    %v4714 = vadd.f32 %v4700, %v4713
    %v4715 = vpop.f32.mrf.mxu0
    %v4716 = vadd.f32 %v4702, %v4715
    %4717 = vdwg.mxu0
    %v4718 = vadd.f32 %v2956, %v4714
    %v4719 = vadd.f32 %v2957, %v4716
    %s4720 = scalar_lea.vmem %s11, 1
    %v4721 = vld [vmem:[%s4720] sm:$0x1]
    %s4722 = scalar_lea.vmem %s12, 1
    %v4723 = vld [vmem:[%s4722] sm:$0x1]
    %v4724 = vsel %vm111, %v4718, 0.0
    %4725 = vadd.xlane.f32.xlu0 %v4724
    %v4726 = vpop.xlane.xlu0 %4725
    %v4727 = vsel %vm111, %v4719, 0.0
    %4728 = vadd.xlane.f32.xlu0 %v4727
    %v4729 = vpop.xlane.xlu0 %4728
    %v4730 = vmul.f32 %v4726, %v571
    %v4731 = vmul.f32 %v4729, %v571
    %v4732 = vsub.f32 %v4718, %v4730
    %v4733 = vsub.f32 %v4719, %v4731
    %v4734 = vmul.f32 %v4732, %v4732
    %v4735 = vmul.f32 %v4733, %v4733
    %v4736 = vsel %vm111, %v4734, 0.0
    %4737 = vadd.xlane.f32.xlu0 %v4736
    %v4738 = vpop.xlane.xlu0 %4737
    %v4739 = vsel %vm111, %v4735, 0.0
    %4740 = vadd.xlane.f32.xlu0 %v4739
    %v4741 = vpop.xlane.xlu0 %4740
    %v4742 = vmul.f32 %v4738, %v571
    %v4743 = vmul.f32 %v4741, %v571
    %v4744 = vadd.f32 %v4742, 1e-05
    %v4745 = vadd.f32 %v4743, 1e-05
    %v4746 = vrsqrt.pop %v4744
    %v4747 = vmul.f32 %v4746, %v4744
    %v4748 = vmul.f32 %v4747, %v4746
    %v4749 = vmul.f32 0.5, %v4748
    %v4750 = vsub.f32 1.5, %v4749
    %v4751 = vmul.f32 %v4746, %v4750
    %vm4752 = vweird.f32 %v4744
    %vm4753 = vweird.f32 %v4746
    %vm4754 = vmor %vm4752, %vm4753
    %v4755 = vsel %vm4754, %v4746, %v4751
    %v4756 = vrsqrt.pop %v4745
    %v4757 = vmul.f32 %v4756, %v4745
    %v4758 = vmul.f32 %v4757, %v4756
    %v4759 = vmul.f32 0.5, %v4758
    %v4760 = vsub.f32 1.5, %v4759
    %v4761 = vmul.f32 %v4756, %v4760
    %vm4762 = vweird.f32 %v4745
    %vm4763 = vweird.f32 %v4756
    %vm4764 = vmor %vm4762, %vm4763
    %v4765 = vsel %vm4764, %v4756, %v4761
    %v4766 = vmul.f32 %v4732, %v4755
    %v4767 = vmul.f32 %v4733, %v4765
    %v4769 = vperm.slane %v4721, 0
    %v4771 = vmul.f32 %v4766, %v4769
    %v4772 = vmul.f32 %v4767, %v4769
    %v4774 = vperm.slane %v4723, 0
    %v4776 = vadd.f32 %v4771, %v4774
    %v4777 = vadd.f32 %v4772, %v4774
    %v4778 = vld [vmem:[%s13] sm:$0xf]
    %v4779 = vld [vmem:[%s13 + $0x4] sm:$0xf]
    %v4780 = vld [vmem:[%s13 + $0x8] sm:$0xf]
    %v4781 = vld [vmem:[%s13 + $0xc] sm:$0xf]
    %v4782 = vpack.c.bf16 %v4777, %v4776
    %v4783 = vld [vmem:[%s14] sm:$0x1]
    %v4785 = vperm.slane %v4783, 0
    %v4791 = vunpack.c.l.b16 %v4778
    %v4792 = vunpack.c.l.b16 %v4779
    %v4793 = vunpack.c.l.b16 %v4780
    %v4794 = vunpack.c.l.b16 %v4781
    %v4795 = vpack.c.b16 %v4792, %v4791
    %v4796 = vpack.c.b16 %v4794, %v4793
    %v4800 = vsel %vm111, %v4782, 0
    %4802 = vmatpush.bf16.msra.mxu0 0
    %4803 = vmatpush.bf16.msra.mxu0 0
    %4804 = vmatpush.bf16.msra.mxu0 0
    %4805 = vmatpush.bf16.msra.mxu0 0
    %4806 = vmatpush.bf16.msra.mxu0 0
    %4807 = vmatpush.bf16.msra.mxu0 0
    %4808 = vmatpush.bf16.msra.mxu0 %v4796
    %4809 = vmatpush.bf16.msra.mxu0 %v4795
    %4810 = vmatmul.bf16.gmra.mxu0 %v4800
    %v4811 = vpop.f32.mrf.mxu0
    %v4812 = vadd.f32 %v4785, %v4811
    %v4813 = vpop.f32.mrf.mxu0
    %v4814 = vadd.f32 %v4785, %v4813
    %4815 = vdwg.mxu0
    %v4816 = vmax.f32 %v4812, 0.0
    %v4817 = vmax.f32 %v4814, 0.0
    %v4818 = vld [vmem:[%s15] sm:$0x1]
    %v4820 = vperm.slane %v4818, 0
    %v4822 = vmul.f32 %v4816, %v4820
    %v4823 = vmul.f32 %v4817, %v4820
    %v4824 = vsel %vm498, %v4822, 0.0
    %4825 = vadd.xlane.f32.xlu0 %v4824
    %v4826 = vpop.xlane.xlu0 %4825
    %v4827 = vsel %vm498, %v4823, 0.0
    %4828 = vadd.xlane.f32.xlu0 %v4827
    %v4829 = vpop.xlane.xlu0 %4828
    %v4830 = vld [vmem:[#allocation2] sm:$0x1]
    %v4832 = vperm.slane %v4830, 0
    %v4834 = vadd.f32 %v4826, %v4832
    %v4835 = vadd.f32 %v4829, %v4832
    %v4836 = vmax.f32 %v4834, %v4835
    %v4837 = vsub.f32 %v4834, %v4836
    %v4838 = vmul.f32 %v4837, 1.442695
    %v4839 = vpow.pop %v4838
    %v4840 = vsub.f32 %v4835, %v4836
    %v4841 = vmul.f32 %v4840, 1.442695
    %v4842 = vpow.pop %v4841
    %v4843 = vadd.f32 %v4839, %v4842
    %v4844 = vrcp.pop %v4843
    %v4845 = vmul.f32 %v4843, %v4844
    %v4846 = vsub.f32 1.0, %v4845
    %v4847 = vmul.f32 %v4844, %v4846
    %v4848 = vadd.f32 %v4844, %v4847
    %vm4849 = vweird.f32 %v4843
    %vm4850 = vweird.f32 %v4844
    %vm4851 = vmor %vm4849, %vm4850
    %v4852 = vsel %vm4851, %v4844, %v4848
    %v4853 = vand.u32 2147483647, %v4843
    %vm4854 = vcmp.eq.f32.partialorder %v4853, 8.507059e+37
    %v4855 = vand.u32 %v4843, 2147483648
    %v4856 = vor.u32 1.1754944e-38, %v4855
    %v4857 = vsel %vm4854, %v4856, %v4852
    %v4858 = vmul.f32 %v4839, %v4857
    %4860 = vset.pattern.permute.xlu0 0
    %4861 = vperm.xlu0 %4860, %v4858
    %v4862 = vpop.permute.xlu0 %4861
    %v4864 = vmul.f32 %v88, %v4862
    %v4865 = vadd.f32 %v4864, 0.0
    %v4866 = vmul.f32 %v4842, %v4857
    %4868 = vset.pattern.permute.xlu0 0
    %4869 = vperm.xlu0 %4868, %v4866
    %v4870 = vpop.permute.xlu0 %4869
    %v4872 = vmul.f32 %v89, %v4870
    %v4873 = vadd.f32 %v4865, %v4872
    %v4874 = vmul.f32 %v4873, 0.5
    %4875 = vst.msk [vmem:[#allocation3] sm:$0xff] %vm111, %v4874
    // Predicated region
    $region70: #{_forward.1} parent=1 // pred_check
      _
    $region71: #{_forward.1} parent=1 // pred_check_branch
      %4877 = sbr.rel (0) target = $region73
    $region72: #{_forward.1} parent=1 // pred_region
      %4879 = vsyncadd [#allocation4], 0
      %s4881 = sshll.u32 [#allocation3], 4
      %s4882 = int_to_ptr.vmem [resolvable:$true] %s4881
      %s4883 = sshll.u32 %s17, 4
      %s4884 = int_to_ptr.hbm [resolvable:$true] %s4883
      %4886 = dma.vmem_to_hbm [thread:$0]  %s4882, 128, %s4884, [#allocation4]
    $region73: #{_forward.1} parent=1 // pred_fallthru
      _
    // Predicated region
    $region74: #{_forward.1} parent=1 // pred_check
      _
    $region75: #{_forward.1} parent=1 // pred_check_branch
      %4888 = sbr.rel (0) target = $region77
    $region76: #{_forward.1} parent=1 // pred_region
      %4890 = dma.done [#allocation4], 128
    $region77: #{_forward.1} parent=1 // pred_fallthru
      _
    %4891 = vsyncpa [#allocation4], 1

</llo_original>
